<compile_context>
chip_gen: v7x
topology: tpu7x:2x2x1
jax: 0.10.0
libtpu: 0.0.40
codegen_flags: <defaults>
</compile_context>

<pallas_src>
import math

import jax
import jax.numpy as jnp
from jax.experimental import pallas as pl
from jax.experimental.pallas import tpu as pltpu


# ----------------------------- configuration -------------------------------
VOCAB_SIZE = 100
TYPE_VOCAB = 2
MAX_POS = 16
HIDDEN = 32
NUM_LAYERS = 2
NUM_HEADS = 4
HEAD_DIM = HIDDEN // NUM_HEADS
INTERMEDIATE = 64
N_CLASSES = 2
BATCH = 2
SEQ = 8
LN_EPS = 1e-12


# ------------------------------ fused kernel --------------------------------
def _bert_encoder_kernel(emb_ref, mask_ref, emb_ln_g_ref, emb_ln_b_ref,
                         wqkv_ref, bqkv_ref, wo_ref, bo_ref,
                         ln1_g_ref, ln1_b_ref, w1_ref, b1_ref,
                         w2_ref, b2_ref, ln2_g_ref, ln2_b_ref,
                         pool_w_ref, pool_b_ref, cls_w_ref, cls_b_ref,
                         o_ref):
    """One grid step == one batch element through the whole BertForClass."""

    def ln(x, g, b):
        mu = jnp.mean(x, axis=-1, keepdims=True)
        var = jnp.mean((x - mu) * (x - mu), axis=-1, keepdims=True)
        return (x - mu) * jax.lax.rsqrt(var + LN_EPS) * g + b

    scale = 1.0 / math.sqrt(HEAD_DIM)

    x = emb_ref[0].astype(jnp.float32)                       # (S, H)
    x = ln(x, emb_ln_g_ref[...], emb_ln_b_ref[...])
    add_mask = mask_ref[0]                                   # (1, S) additive

    # ---- transformer layers (static unroll: weights stay VMEM-resident) ----
    for l in range(NUM_LAYERS):
        # fused QKV projection: one MXU pass, x loaded once
        qkv = jnp.dot(x, wqkv_ref[l],
                      preferred_element_type=jnp.float32) + bqkv_ref[l]  # (S, 3H)
        wo = wo_ref[l]                                       # (H, H)
        attn = jnp.zeros((SEQ, HIDDEN), jnp.float32)
        for h in range(NUM_HEADS):                           # static unroll over heads
            q = qkv[:, h * HEAD_DIM:(h + 1) * HEAD_DIM]
            k = qkv[:, HIDDEN + h * HEAD_DIM: HIDDEN + (h + 1) * HEAD_DIM]
            v = qkv[:, 2 * HIDDEN + h * HEAD_DIM: 2 * HIDDEN + (h + 1) * HEAD_DIM]
            s = jnp.dot(q, k.T, preferred_element_type=jnp.float32) * scale
            s = s + add_mask
            s = s - jnp.max(s, axis=-1, keepdims=True)
            p = jnp.exp(s)
            p = p / jnp.sum(p, axis=-1, keepdims=True)
            ctx = jnp.dot(p, v, preferred_element_type=jnp.float32)      # (S, hd)
            # (concat_h ctx_h) @ Wo  ==  sum_h ctx_h @ Wo[h*hd:(h+1)*hd, :]
            attn = attn + jnp.dot(ctx, wo[h * HEAD_DIM:(h + 1) * HEAD_DIM, :],
                                  preferred_element_type=jnp.float32)
        attn = attn + bo_ref[l]
        x = ln(attn + x, ln1_g_ref[l], ln1_b_ref[l])

        # FFN
        h1 = jnp.dot(x, w1_ref[l], preferred_element_type=jnp.float32) + b1_ref[l]
        # TODO(synk): HF BERT uses exact erf-GELU; tanh approximation used here.
        h1 = jax.nn.gelu(h1, approximate=True)
        h2 = jnp.dot(h1, w2_ref[l], preferred_element_type=jnp.float32) + b2_ref[l]
        x = ln(h2 + x, ln2_g_ref[l], ln2_b_ref[l])

    # ---- pooler: tanh(dense(CLS token)) ----
    cls_tok = x[0:1, :]                                      # (1, H)
    pooled = jnp.tanh(jnp.dot(cls_tok, pool_w_ref[...],
                              preferred_element_type=jnp.float32) + pool_b_ref[...])

    # ---- classifier: concat(mean(seq), pooled) @ Wc + bc ----
    # concat decomposed exactly into two partial matmuls.
    seq_avg = jnp.mean(x, axis=0, keepdims=True)             # (1, H)
    cls_w = cls_w_ref[...]                                   # (2H, C)
    logit = (jnp.dot(seq_avg, cls_w[:HIDDEN, :], preferred_element_type=jnp.float32)
             + jnp.dot(pooled, cls_w[HIDDEN:, :], preferred_element_type=jnp.float32)
             + cls_b_ref[...])
    o_ref[0] = logit.astype(o_ref.dtype)


# --------------------------- parameter construction -------------------------
def init_params(key):
    def nrm(k, shape, scale=0.02):
        return scale * jax.random.normal(k, shape, dtype=jnp.float32)

    keys = iter(jax.random.split(key, 16 + NUM_LAYERS * 16))
    p = {
        "word_emb": nrm(next(keys), (VOCAB_SIZE, HIDDEN)),
        "pos_emb": nrm(next(keys), (MAX_POS, HIDDEN)),
        "type_emb": nrm(next(keys), (TYPE_VOCAB, HIDDEN)),
        "emb_ln_g": jnp.ones((HIDDEN,), jnp.float32),
        "emb_ln_b": jnp.zeros((HIDDEN,), jnp.float32),
        "pooler_w": nrm(next(keys), (HIDDEN, HIDDEN)),
        "pooler_b": jnp.zeros((HIDDEN,), jnp.float32),
        "cls_w": nrm(next(keys), (2 * HIDDEN, N_CLASSES)),
        "cls_b": jnp.zeros((N_CLASSES,), jnp.float32),
        "layers": [],
    }
    for _ in range(NUM_LAYERS):
        layer = {
            "wq": nrm(next(keys), (HIDDEN, HIDDEN)), "bq": jnp.zeros((HIDDEN,), jnp.float32),
            "wk": nrm(next(keys), (HIDDEN, HIDDEN)), "bk": jnp.zeros((HIDDEN,), jnp.float32),
            "wv": nrm(next(keys), (HIDDEN, HIDDEN)), "bv": jnp.zeros((HIDDEN,), jnp.float32),
            "wo": nrm(next(keys), (HIDDEN, HIDDEN)), "bo": jnp.zeros((HIDDEN,), jnp.float32),
            "ln1_g": jnp.ones((HIDDEN,), jnp.float32), "ln1_b": jnp.zeros((HIDDEN,), jnp.float32),
            "w1": nrm(next(keys), (HIDDEN, INTERMEDIATE)), "b1": jnp.zeros((INTERMEDIATE,), jnp.float32),
            "w2": nrm(next(keys), (INTERMEDIATE, HIDDEN)), "b2": jnp.zeros((HIDDEN,), jnp.float32),
            "ln2_g": jnp.ones((HIDDEN,), jnp.float32), "ln2_b": jnp.zeros((HIDDEN,), jnp.float32),
        }
        p["layers"].append(layer)
    return p


# ------------------------------ forward pass --------------------------------
def bert_for_class_forward(params, input_ids, input_masks, segment_ids):
    B, S = input_ids.shape
    H, L, I, C = HIDDEN, NUM_LAYERS, INTERMEDIATE, N_CLASSES

    # --- embeddings (data-dependent gathers stay in plain JAX glue) ---
    pos_ids = jnp.arange(S, dtype=jnp.int32)
    emb = (jnp.take(params["word_emb"], input_ids, axis=0)
           + jnp.take(params["pos_emb"], pos_ids, axis=0)[None, :, :]
           + jnp.take(params["type_emb"], segment_ids, axis=0))        # (B, S, H)

    # --- additive attention mask, passed ONCE as (B, 1, S) ---
    add_mask = ((1.0 - input_masks.astype(jnp.float32)) * -10000.0).reshape(B, 1, S)

    # --- stack per-layer weights; Q/K/V fused along the output axis ---
    ls = params["layers"]
    wqkv = jnp.stack([jnp.concatenate([lp["wq"], lp["wk"], lp["wv"]], axis=1) for lp in ls])
    bqkv = jnp.stack([jnp.concatenate([lp["bq"], lp["bk"], lp["bv"]])[None, :] for lp in ls])
    wo = jnp.stack([lp["wo"] for lp in ls])
    bo = jnp.stack([lp["bo"][None, :] for lp in ls])
    ln1g = jnp.stack([lp["ln1_g"][None, :] for lp in ls])
    ln1b = jnp.stack([lp["ln1_b"][None, :] for lp in ls])
    w1 = jnp.stack([lp["w1"] for lp in ls])
    b1 = jnp.stack([lp["b1"][None, :] for lp in ls])
    w2 = jnp.stack([lp["w2"] for lp in ls])
    b2 = jnp.stack([lp["b2"][None, :] for lp in ls])
    ln2g = jnp.stack([lp["ln2_g"][None, :] for lp in ls])
    ln2b = jnp.stack([lp["ln2_b"][None, :] for lp in ls])

    def full(shape):
        # Full-extent block whose index does not depend on the grid step:
        # Pallas keeps it resident in VMEM (single DMA), shared across steps.
        return pl.BlockSpec(shape, lambda b: (0,) * len(shape))

    logits = pl.pallas_call(
        _bert_encoder_kernel,
        out_shape=jax.ShapeDtypeStruct((B, 1, C), jnp.float32),
        grid=(B,),
        in_specs=[
            pl.BlockSpec((1, S, H), lambda b: (b, 0, 0)),   # embeddings (per batch)
            pl.BlockSpec((1, 1, S), lambda b: (b, 0, 0)),   # additive mask (per batch)
            full((1, H)), full((1, H)),                     # emb LayerNorm
            full((L, H, 3 * H)), full((L, 1, 3 * H)),       # fused QKV
            full((L, H, H)), full((L, 1, H)),               # attn output proj
            full((L, 1, H)), full((L, 1, H)),               # LN1
            full((L, H, I)), full((L, 1, I)),               # FFN in
            full((L, I, H)), full((L, 1, H)),               # FFN out
            full((L, 1, H)), full((L, 1, H)),               # LN2
            full((H, H)), full((1, H)),                     # pooler
            full((2 * H, C)), full((1, C)),                 # classifier
        ],
        out_specs=pl.BlockSpec((1, 1, C), lambda b: (b, 0, 0)),
        compiler_params=pltpu.CompilerParams(
            dimension_semantics=("parallel",)),             # both TCs on v7x
    )(emb, add_mask,
      params["emb_ln_g"].reshape(1, H), params["emb_ln_b"].reshape(1, H),
      wqkv, bqkv, wo, bo, ln1g, ln1b, w1, b1, w2, b2, ln2g, ln2b,
      params["pooler_w"], params["pooler_b"].reshape(1, H),
      params["cls_w"], params["cls_b"].reshape(1, C))

    return logits.reshape(B, C)


bert_for_class_forward_jit = jax.jit(bert_for_class_forward)


# ------------------------------------ main -----------------------------------
if __name__ == "__main__":
    root = jax.random.PRNGKey(0)
    k_param, k_ids, k_seg = jax.random.split(root, 3)

    params = init_params(k_param)
    input_ids = jax.random.randint(k_ids, (BATCH, SEQ), 0, VOCAB_SIZE, dtype=jnp.int32)
    input_masks = jnp.ones((BATCH, SEQ), dtype=jnp.int32)
    segment_ids = jax.random.randint(k_seg, (BATCH, SEQ), 0, TYPE_VOCAB, dtype=jnp.int32)

    logit = bert_for_class_forward_jit(params, input_ids, input_masks, segment_ids)
    logit = jax.block_until_ready(logit)
    assert logit.shape == (BATCH, N_CLASSES)
    print("KERNEL_OK")
</pallas_src>

<mosaic_0001>
module attributes {stable_mosaic.version = 11 : i64} {
  func.func @_bert_encoder_kernel(%arg0: i32, %arg1: memref<1x8x32xf32, #tpu.memory_space<vmem>>, %arg2: memref<1x1x8xf32, #tpu.memory_space<vmem>>, %arg3: memref<1x32xf32, #tpu.memory_space<vmem>>, %arg4: memref<1x32xf32, #tpu.memory_space<vmem>>, %arg5: memref<2x32x96xf32, #tpu.memory_space<vmem>>, %arg6: memref<2x1x96xf32, #tpu.memory_space<vmem>>, %arg7: memref<2x32x32xf32, #tpu.memory_space<vmem>>, %arg8: memref<2x1x32xf32, #tpu.memory_space<vmem>>, %arg9: memref<2x1x32xf32, #tpu.memory_space<vmem>>, %arg10: memref<2x1x32xf32, #tpu.memory_space<vmem>>, %arg11: memref<2x32x64xf32, #tpu.memory_space<vmem>>, %arg12: memref<2x1x64xf32, #tpu.memory_space<vmem>>, %arg13: memref<2x64x32xf32, #tpu.memory_space<vmem>>, %arg14: memref<2x1x32xf32, #tpu.memory_space<vmem>>, %arg15: memref<2x1x32xf32, #tpu.memory_space<vmem>>, %arg16: memref<2x1x32xf32, #tpu.memory_space<vmem>>, %arg17: memref<32x32xf32, #tpu.memory_space<vmem>>, %arg18: memref<1x32xf32, #tpu.memory_space<vmem>>, %arg19: memref<64x2xf32, #tpu.memory_space<vmem>>, %arg20: memref<1x2xf32, #tpu.memory_space<vmem>>, %arg21: memref<1x1x2xf32, #tpu.memory_space<vmem>>) attributes {dimension_semantics = [#tpu.dimension_semantics<parallel>], iteration_bounds = array<i64: 2>, scalar_prefetch = 0 : i64, scratch_operands = 0 : i64, tpu.core_type = #tpu.core_type<tc>, window_params = [{transform_indices = @transform_0, window_bounds = array<i64: 1, 8, 32>}, {transform_indices = @transform_1, window_bounds = array<i64: 1, 1, 8>}, {pipeline_mode = #tpu.pipeline_mode<synchronous>, transform_indices = @transform_2, window_bounds = array<i64: 1, 32>}, {pipeline_mode = #tpu.pipeline_mode<synchronous>, transform_indices = @transform_3, window_bounds = array<i64: 1, 32>}, {pipeline_mode = #tpu.pipeline_mode<synchronous>, transform_indices = @transform_4, window_bounds = array<i64: 2, 32, 96>}, {pipeline_mode = #tpu.pipeline_mode<synchronous>, transform_indices = @transform_5, window_bounds = array<i64: 2, 1, 96>}, {pipeline_mode = #tpu.pipeline_mode<synchronous>, transform_indices = @transform_6, window_bounds = array<i64: 2, 32, 32>}, {pipeline_mode = #tpu.pipeline_mode<synchronous>, transform_indices = @transform_7, window_bounds = array<i64: 2, 1, 32>}, {pipeline_mode = #tpu.pipeline_mode<synchronous>, transform_indices = @transform_8, window_bounds = array<i64: 2, 1, 32>}, {pipeline_mode = #tpu.pipeline_mode<synchronous>, transform_indices = @transform_9, window_bounds = array<i64: 2, 1, 32>}, {pipeline_mode = #tpu.pipeline_mode<synchronous>, transform_indices = @transform_10, window_bounds = array<i64: 2, 32, 64>}, {pipeline_mode = #tpu.pipeline_mode<synchronous>, transform_indices = @transform_11, window_bounds = array<i64: 2, 1, 64>}, {pipeline_mode = #tpu.pipeline_mode<synchronous>, transform_indices = @transform_12, window_bounds = array<i64: 2, 64, 32>}, {pipeline_mode = #tpu.pipeline_mode<synchronous>, transform_indices = @transform_13, window_bounds = array<i64: 2, 1, 32>}, {pipeline_mode = #tpu.pipeline_mode<synchronous>, transform_indices = @transform_14, window_bounds = array<i64: 2, 1, 32>}, {pipeline_mode = #tpu.pipeline_mode<synchronous>, transform_indices = @transform_15, window_bounds = array<i64: 2, 1, 32>}, {pipeline_mode = #tpu.pipeline_mode<synchronous>, transform_indices = @transform_16, window_bounds = array<i64: 32, 32>}, {pipeline_mode = #tpu.pipeline_mode<synchronous>, transform_indices = @transform_17, window_bounds = array<i64: 1, 32>}, {pipeline_mode = #tpu.pipeline_mode<synchronous>, transform_indices = @transform_18, window_bounds = array<i64: 64, 2>}, {pipeline_mode = #tpu.pipeline_mode<synchronous>, transform_indices = @transform_19, window_bounds = array<i64: 1, 2>}, {transform_indices = @transform_20, window_bounds = array<i64: 1, 1, 2>}]} {
    %c0 = arith.constant 0 : index
    %c0_0 = arith.constant 0 : index
    %c0_1 = arith.constant 0 : index
    %0 = vector.load %arg1[%c0, %c0_0, %c0_1] : memref<1x8x32xf32, #tpu.memory_space<vmem>>, vector<1x8x32xf32>
    %1 = vector.shape_cast %0 : vector<1x8x32xf32> to vector<8x32xf32>
    %c0_2 = arith.constant 0 : index
    %c0_3 = arith.constant 0 : index
    %2 = vector.load %arg3[%c0_2, %c0_3] : memref<1x32xf32, #tpu.memory_space<vmem>>, vector<1x32xf32>
    %c0_4 = arith.constant 0 : index
    %c0_5 = arith.constant 0 : index
    %3 = vector.load %arg4[%c0_4, %c0_5] : memref<1x32xf32, #tpu.memory_space<vmem>>, vector<1x32xf32>
    %cst = arith.constant dense<0.000000e+00> : vector<8xf32>
    %4 = vector.multi_reduction <add>, %1, %cst [1] : vector<8x32xf32> to vector<8xf32>
    %5 = vector.shape_cast %4 : vector<8xf32> to vector<8x1xf32>
    %cst_6 = arith.constant 3.200000e+01 : f32
    %6 = vector.broadcast %cst_6 : f32 to vector<8x1xf32>
    %7 = arith.divf %5, %6 : vector<8x1xf32>
    %8 = vector.broadcast %7 : vector<8x1xf32> to vector<8x32xf32>
    %9 = arith.subf %1, %8 : vector<8x32xf32>
    %10 = vector.broadcast %7 : vector<8x1xf32> to vector<8x32xf32>
    %11 = arith.subf %1, %10 : vector<8x32xf32>
    %12 = arith.mulf %9, %11 : vector<8x32xf32>
    %cst_7 = arith.constant dense<0.000000e+00> : vector<8xf32>
    %13 = vector.multi_reduction <add>, %12, %cst_7 [1] : vector<8x32xf32> to vector<8xf32>
    %14 = vector.shape_cast %13 : vector<8xf32> to vector<8x1xf32>
    %cst_8 = arith.constant 3.200000e+01 : f32
    %15 = vector.broadcast %cst_8 : f32 to vector<8x1xf32>
    %16 = arith.divf %14, %15 : vector<8x1xf32>
    %17 = vector.broadcast %7 : vector<8x1xf32> to vector<8x32xf32>
    %18 = arith.subf %1, %17 : vector<8x32xf32>
    %cst_9 = arith.constant 9.99999996E-13 : f32
    %19 = vector.broadcast %cst_9 : f32 to vector<8x1xf32>
    %20 = arith.addf %16, %19 : vector<8x1xf32>
    %21 = math.rsqrt %20 : vector<8x1xf32>
    %22 = vector.broadcast %21 : vector<8x1xf32> to vector<8x32xf32>
    %23 = arith.mulf %18, %22 : vector<8x32xf32>
    %24 = vector.broadcast %2 : vector<1x32xf32> to vector<8x32xf32>
    %25 = arith.mulf %23, %24 : vector<8x32xf32>
    %26 = vector.broadcast %3 : vector<1x32xf32> to vector<8x32xf32>
    %27 = arith.addf %25, %26 : vector<8x32xf32>
    %c0_10 = arith.constant 0 : index
    %c0_11 = arith.constant 0 : index
    %c0_12 = arith.constant 0 : index
    %28 = vector.load %arg2[%c0_10, %c0_11, %c0_12] : memref<1x1x8xf32, #tpu.memory_space<vmem>>, vector<1x1x8xf32>
    %29 = vector.shape_cast %28 : vector<1x1x8xf32> to vector<1x8xf32>
    %c0_13 = arith.constant 0 : index
    %c0_14 = arith.constant 0 : index
    %c0_15 = arith.constant 0 : index
    %30 = vector.load %arg5[%c0_13, %c0_14, %c0_15] : memref<2x32x96xf32, #tpu.memory_space<vmem>>, vector<1x32x96xf32>
    %31 = vector.shape_cast %30 : vector<1x32x96xf32> to vector<32x96xf32>
    %cst_16 = arith.constant dense<0.000000e+00> : vector<8x96xf32>
    %32 = tpu.matmul %27, %31, %cst_16 {dimension_numbers = #tpu.dot_dimension_numbers<[1], [0], [0], [1], [0, 0, 1, 1], [], []>} : vector<8x32xf32>, vector<32x96xf32>, vector<8x96xf32> -> vector<8x96xf32>
    %c0_17 = arith.constant 0 : index
    %c0_18 = arith.constant 0 : index
    %c0_19 = arith.constant 0 : index
    %33 = vector.load %arg6[%c0_17, %c0_18, %c0_19] : memref<2x1x96xf32, #tpu.memory_space<vmem>>, vector<1x1x96xf32>
    %34 = vector.shape_cast %33 : vector<1x1x96xf32> to vector<1x96xf32>
    %35 = vector.broadcast %34 : vector<1x96xf32> to vector<8x96xf32>
    %36 = arith.addf %32, %35 : vector<8x96xf32>
    %c0_20 = arith.constant 0 : index
    %c0_21 = arith.constant 0 : index
    %c0_22 = arith.constant 0 : index
    %37 = vector.load %arg7[%c0_20, %c0_21, %c0_22] : memref<2x32x32xf32, #tpu.memory_space<vmem>>, vector<1x32x32xf32>
    %38 = vector.shape_cast %37 : vector<1x32x32xf32> to vector<32x32xf32>
    %cst_23 = arith.constant 0.000000e+00 : f32
    %39 = vector.broadcast %cst_23 : f32 to vector<8x32xf32>
    %40 = vector.extract_strided_slice %36 {offsets = [0, 0], sizes = [8, 8], strides = [1, 1]} : vector<8x96xf32> to vector<8x8xf32>
    %41 = vector.extract_strided_slice %36 {offsets = [0, 32], sizes = [8, 8], strides = [1, 1]} : vector<8x96xf32> to vector<8x8xf32>
    %42 = vector.extract_strided_slice %36 {offsets = [0, 64], sizes = [8, 8], strides = [1, 1]} : vector<8x96xf32> to vector<8x8xf32>
    %43 = tpu.transpose %41, [1, 0] : vector<8x8xf32> -> vector<8x8xf32>
    %cst_24 = arith.constant dense<0.000000e+00> : vector<8x8xf32>
    %44 = tpu.matmul %40, %43, %cst_24 {dimension_numbers = #tpu.dot_dimension_numbers<[1], [0], [0], [1], [0, 0, 1, 1], [], []>} : vector<8x8xf32>, vector<8x8xf32>, vector<8x8xf32> -> vector<8x8xf32>
    %cst_25 = arith.constant 0.353553385 : f32
    %45 = vector.broadcast %cst_25 : f32 to vector<8x8xf32>
    %46 = arith.mulf %44, %45 : vector<8x8xf32>
    %47 = vector.broadcast %29 : vector<1x8xf32> to vector<8x8xf32>
    %48 = arith.addf %46, %47 : vector<8x8xf32>
    %cst_26 = arith.constant dense<0xFF800000> : vector<8xf32>
    %49 = vector.multi_reduction <maximumf>, %48, %cst_26 [1] : vector<8x8xf32> to vector<8xf32>
    %50 = vector.shape_cast %49 : vector<8xf32> to vector<8x1xf32>
    %51 = vector.broadcast %50 : vector<8x1xf32> to vector<8x8xf32>
    %52 = arith.subf %48, %51 : vector<8x8xf32>
    %53 = math.exp %52 : vector<8x8xf32>
    %cst_27 = arith.constant dense<0.000000e+00> : vector<8xf32>
    %54 = vector.multi_reduction <add>, %53, %cst_27 [1] : vector<8x8xf32> to vector<8xf32>
    %55 = vector.shape_cast %54 : vector<8xf32> to vector<8x1xf32>
    %56 = vector.broadcast %55 : vector<8x1xf32> to vector<8x8xf32>
    %57 = arith.divf %53, %56 : vector<8x8xf32>
    %cst_28 = arith.constant dense<0.000000e+00> : vector<8x8xf32>
    %58 = tpu.matmul %57, %42, %cst_28 {dimension_numbers = #tpu.dot_dimension_numbers<[1], [0], [0], [1], [0, 0, 1, 1], [], []>} : vector<8x8xf32>, vector<8x8xf32>, vector<8x8xf32> -> vector<8x8xf32>
    %59 = vector.extract_strided_slice %38 {offsets = [0, 0], sizes = [8, 32], strides = [1, 1]} : vector<32x32xf32> to vector<8x32xf32>
    %cst_29 = arith.constant dense<0.000000e+00> : vector<8x32xf32>
    %60 = tpu.matmul %58, %59, %cst_29 {dimension_numbers = #tpu.dot_dimension_numbers<[1], [0], [0], [1], [0, 0, 1, 1], [], []>} : vector<8x8xf32>, vector<8x32xf32>, vector<8x32xf32> -> vector<8x32xf32>
    %61 = arith.addf %39, %60 : vector<8x32xf32>
    %62 = vector.extract_strided_slice %36 {offsets = [0, 8], sizes = [8, 8], strides = [1, 1]} : vector<8x96xf32> to vector<8x8xf32>
    %63 = vector.extract_strided_slice %36 {offsets = [0, 40], sizes = [8, 8], strides = [1, 1]} : vector<8x96xf32> to vector<8x8xf32>
    %64 = vector.extract_strided_slice %36 {offsets = [0, 72], sizes = [8, 8], strides = [1, 1]} : vector<8x96xf32> to vector<8x8xf32>
    %65 = tpu.transpose %63, [1, 0] : vector<8x8xf32> -> vector<8x8xf32>
    %cst_30 = arith.constant dense<0.000000e+00> : vector<8x8xf32>
    %66 = tpu.matmul %62, %65, %cst_30 {dimension_numbers = #tpu.dot_dimension_numbers<[1], [0], [0], [1], [0, 0, 1, 1], [], []>} : vector<8x8xf32>, vector<8x8xf32>, vector<8x8xf32> -> vector<8x8xf32>
    %cst_31 = arith.constant 0.353553385 : f32
    %67 = vector.broadcast %cst_31 : f32 to vector<8x8xf32>
    %68 = arith.mulf %66, %67 : vector<8x8xf32>
    %69 = vector.broadcast %29 : vector<1x8xf32> to vector<8x8xf32>
    %70 = arith.addf %68, %69 : vector<8x8xf32>
    %cst_32 = arith.constant dense<0xFF800000> : vector<8xf32>
    %71 = vector.multi_reduction <maximumf>, %70, %cst_32 [1] : vector<8x8xf32> to vector<8xf32>
    %72 = vector.shape_cast %71 : vector<8xf32> to vector<8x1xf32>
    %73 = vector.broadcast %72 : vector<8x1xf32> to vector<8x8xf32>
    %74 = arith.subf %70, %73 : vector<8x8xf32>
    %75 = math.exp %74 : vector<8x8xf32>
    %cst_33 = arith.constant dense<0.000000e+00> : vector<8xf32>
    %76 = vector.multi_reduction <add>, %75, %cst_33 [1] : vector<8x8xf32> to vector<8xf32>
    %77 = vector.shape_cast %76 : vector<8xf32> to vector<8x1xf32>
    %78 = vector.broadcast %77 : vector<8x1xf32> to vector<8x8xf32>
    %79 = arith.divf %75, %78 : vector<8x8xf32>
    %cst_34 = arith.constant dense<0.000000e+00> : vector<8x8xf32>
    %80 = tpu.matmul %79, %64, %cst_34 {dimension_numbers = #tpu.dot_dimension_numbers<[1], [0], [0], [1], [0, 0, 1, 1], [], []>} : vector<8x8xf32>, vector<8x8xf32>, vector<8x8xf32> -> vector<8x8xf32>
    %81 = vector.extract_strided_slice %38 {offsets = [8, 0], sizes = [8, 32], strides = [1, 1]} : vector<32x32xf32> to vector<8x32xf32>
    %cst_35 = arith.constant dense<0.000000e+00> : vector<8x32xf32>
    %82 = tpu.matmul %80, %81, %cst_35 {dimension_numbers = #tpu.dot_dimension_numbers<[1], [0], [0], [1], [0, 0, 1, 1], [], []>} : vector<8x8xf32>, vector<8x32xf32>, vector<8x32xf32> -> vector<8x32xf32>
    %83 = arith.addf %61, %82 : vector<8x32xf32>
    %84 = vector.extract_strided_slice %36 {offsets = [0, 16], sizes = [8, 8], strides = [1, 1]} : vector<8x96xf32> to vector<8x8xf32>
    %85 = vector.extract_strided_slice %36 {offsets = [0, 48], sizes = [8, 8], strides = [1, 1]} : vector<8x96xf32> to vector<8x8xf32>
    %86 = vector.extract_strided_slice %36 {offsets = [0, 80], sizes = [8, 8], strides = [1, 1]} : vector<8x96xf32> to vector<8x8xf32>
    %87 = tpu.transpose %85, [1, 0] : vector<8x8xf32> -> vector<8x8xf32>
    %cst_36 = arith.constant dense<0.000000e+00> : vector<8x8xf32>
    %88 = tpu.matmul %84, %87, %cst_36 {dimension_numbers = #tpu.dot_dimension_numbers<[1], [0], [0], [1], [0, 0, 1, 1], [], []>} : vector<8x8xf32>, vector<8x8xf32>, vector<8x8xf32> -> vector<8x8xf32>
    %cst_37 = arith.constant 0.353553385 : f32
    %89 = vector.broadcast %cst_37 : f32 to vector<8x8xf32>
    %90 = arith.mulf %88, %89 : vector<8x8xf32>
    %91 = vector.broadcast %29 : vector<1x8xf32> to vector<8x8xf32>
    %92 = arith.addf %90, %91 : vector<8x8xf32>
    %cst_38 = arith.constant dense<0xFF800000> : vector<8xf32>
    %93 = vector.multi_reduction <maximumf>, %92, %cst_38 [1] : vector<8x8xf32> to vector<8xf32>
    %94 = vector.shape_cast %93 : vector<8xf32> to vector<8x1xf32>
    %95 = vector.broadcast %94 : vector<8x1xf32> to vector<8x8xf32>
    %96 = arith.subf %92, %95 : vector<8x8xf32>
    %97 = math.exp %96 : vector<8x8xf32>
    %cst_39 = arith.constant dense<0.000000e+00> : vector<8xf32>
    %98 = vector.multi_reduction <add>, %97, %cst_39 [1] : vector<8x8xf32> to vector<8xf32>
    %99 = vector.shape_cast %98 : vector<8xf32> to vector<8x1xf32>
    %100 = vector.broadcast %99 : vector<8x1xf32> to vector<8x8xf32>
    %101 = arith.divf %97, %100 : vector<8x8xf32>
    %cst_40 = arith.constant dense<0.000000e+00> : vector<8x8xf32>
    %102 = tpu.matmul %101, %86, %cst_40 {dimension_numbers = #tpu.dot_dimension_numbers<[1], [0], [0], [1], [0, 0, 1, 1], [], []>} : vector<8x8xf32>, vector<8x8xf32>, vector<8x8xf32> -> vector<8x8xf32>
    %103 = vector.extract_strided_slice %38 {offsets = [16, 0], sizes = [8, 32], strides = [1, 1]} : vector<32x32xf32> to vector<8x32xf32>
    %cst_41 = arith.constant dense<0.000000e+00> : vector<8x32xf32>
    %104 = tpu.matmul %102, %103, %cst_41 {dimension_numbers = #tpu.dot_dimension_numbers<[1], [0], [0], [1], [0, 0, 1, 1], [], []>} : vector<8x8xf32>, vector<8x32xf32>, vector<8x32xf32> -> vector<8x32xf32>
    %105 = arith.addf %83, %104 : vector<8x32xf32>
    %106 = vector.extract_strided_slice %36 {offsets = [0, 24], sizes = [8, 8], strides = [1, 1]} : vector<8x96xf32> to vector<8x8xf32>
    %107 = vector.extract_strided_slice %36 {offsets = [0, 56], sizes = [8, 8], strides = [1, 1]} : vector<8x96xf32> to vector<8x8xf32>
    %108 = vector.extract_strided_slice %36 {offsets = [0, 88], sizes = [8, 8], strides = [1, 1]} : vector<8x96xf32> to vector<8x8xf32>
    %109 = tpu.transpose %107, [1, 0] : vector<8x8xf32> -> vector<8x8xf32>
    %cst_42 = arith.constant dense<0.000000e+00> : vector<8x8xf32>
    %110 = tpu.matmul %106, %109, %cst_42 {dimension_numbers = #tpu.dot_dimension_numbers<[1], [0], [0], [1], [0, 0, 1, 1], [], []>} : vector<8x8xf32>, vector<8x8xf32>, vector<8x8xf32> -> vector<8x8xf32>
    %cst_43 = arith.constant 0.353553385 : f32
    %111 = vector.broadcast %cst_43 : f32 to vector<8x8xf32>
    %112 = arith.mulf %110, %111 : vector<8x8xf32>
    %113 = vector.broadcast %29 : vector<1x8xf32> to vector<8x8xf32>
    %114 = arith.addf %112, %113 : vector<8x8xf32>
    %cst_44 = arith.constant dense<0xFF800000> : vector<8xf32>
    %115 = vector.multi_reduction <maximumf>, %114, %cst_44 [1] : vector<8x8xf32> to vector<8xf32>
    %116 = vector.shape_cast %115 : vector<8xf32> to vector<8x1xf32>
    %117 = vector.broadcast %116 : vector<8x1xf32> to vector<8x8xf32>
    %118 = arith.subf %114, %117 : vector<8x8xf32>
    %119 = math.exp %118 : vector<8x8xf32>
    %cst_45 = arith.constant dense<0.000000e+00> : vector<8xf32>
    %120 = vector.multi_reduction <add>, %119, %cst_45 [1] : vector<8x8xf32> to vector<8xf32>
    %121 = vector.shape_cast %120 : vector<8xf32> to vector<8x1xf32>
    %122 = vector.broadcast %121 : vector<8x1xf32> to vector<8x8xf32>
    %123 = arith.divf %119, %122 : vector<8x8xf32>
    %cst_46 = arith.constant dense<0.000000e+00> : vector<8x8xf32>
    %124 = tpu.matmul %123, %108, %cst_46 {dimension_numbers = #tpu.dot_dimension_numbers<[1], [0], [0], [1], [0, 0, 1, 1], [], []>} : vector<8x8xf32>, vector<8x8xf32>, vector<8x8xf32> -> vector<8x8xf32>
    %125 = vector.extract_strided_slice %38 {offsets = [24, 0], sizes = [8, 32], strides = [1, 1]} : vector<32x32xf32> to vector<8x32xf32>
    %cst_47 = arith.constant dense<0.000000e+00> : vector<8x32xf32>
    %126 = tpu.matmul %124, %125, %cst_47 {dimension_numbers = #tpu.dot_dimension_numbers<[1], [0], [0], [1], [0, 0, 1, 1], [], []>} : vector<8x8xf32>, vector<8x32xf32>, vector<8x32xf32> -> vector<8x32xf32>
    %127 = arith.addf %105, %126 : vector<8x32xf32>
    %c0_48 = arith.constant 0 : index
    %c0_49 = arith.constant 0 : index
    %c0_50 = arith.constant 0 : index
    %128 = vector.load %arg8[%c0_48, %c0_49, %c0_50] : memref<2x1x32xf32, #tpu.memory_space<vmem>>, vector<1x1x32xf32>
    %129 = vector.shape_cast %128 : vector<1x1x32xf32> to vector<1x32xf32>
    %130 = vector.broadcast %129 : vector<1x32xf32> to vector<8x32xf32>
    %131 = arith.addf %127, %130 : vector<8x32xf32>
    %132 = arith.addf %131, %27 : vector<8x32xf32>
    %c0_51 = arith.constant 0 : index
    %c0_52 = arith.constant 0 : index
    %c0_53 = arith.constant 0 : index
    %133 = vector.load %arg9[%c0_51, %c0_52, %c0_53] : memref<2x1x32xf32, #tpu.memory_space<vmem>>, vector<1x1x32xf32>
    %134 = vector.shape_cast %133 : vector<1x1x32xf32> to vector<1x32xf32>
    %c0_54 = arith.constant 0 : index
    %c0_55 = arith.constant 0 : index
    %c0_56 = arith.constant 0 : index
    %135 = vector.load %arg10[%c0_54, %c0_55, %c0_56] : memref<2x1x32xf32, #tpu.memory_space<vmem>>, vector<1x1x32xf32>
    %136 = vector.shape_cast %135 : vector<1x1x32xf32> to vector<1x32xf32>
    %cst_57 = arith.constant dense<0.000000e+00> : vector<8xf32>
    %137 = vector.multi_reduction <add>, %132, %cst_57 [1] : vector<8x32xf32> to vector<8xf32>
    %138 = vector.shape_cast %137 : vector<8xf32> to vector<8x1xf32>
    %cst_58 = arith.constant 3.200000e+01 : f32
    %139 = vector.broadcast %cst_58 : f32 to vector<8x1xf32>
    %140 = arith.divf %138, %139 : vector<8x1xf32>
    %141 = vector.broadcast %140 : vector<8x1xf32> to vector<8x32xf32>
    %142 = arith.subf %132, %141 : vector<8x32xf32>
    %143 = vector.broadcast %140 : vector<8x1xf32> to vector<8x32xf32>
    %144 = arith.subf %132, %143 : vector<8x32xf32>
    %145 = arith.mulf %142, %144 : vector<8x32xf32>
    %cst_59 = arith.constant dense<0.000000e+00> : vector<8xf32>
    %146 = vector.multi_reduction <add>, %145, %cst_59 [1] : vector<8x32xf32> to vector<8xf32>
    %147 = vector.shape_cast %146 : vector<8xf32> to vector<8x1xf32>
    %cst_60 = arith.constant 3.200000e+01 : f32
    %148 = vector.broadcast %cst_60 : f32 to vector<8x1xf32>
    %149 = arith.divf %147, %148 : vector<8x1xf32>
    %150 = vector.broadcast %140 : vector<8x1xf32> to vector<8x32xf32>
    %151 = arith.subf %132, %150 : vector<8x32xf32>
    %cst_61 = arith.constant 9.99999996E-13 : f32
    %152 = vector.broadcast %cst_61 : f32 to vector<8x1xf32>
    %153 = arith.addf %149, %152 : vector<8x1xf32>
    %154 = math.rsqrt %153 : vector<8x1xf32>
    %155 = vector.broadcast %154 : vector<8x1xf32> to vector<8x32xf32>
    %156 = arith.mulf %151, %155 : vector<8x32xf32>
    %157 = vector.broadcast %134 : vector<1x32xf32> to vector<8x32xf32>
    %158 = arith.mulf %156, %157 : vector<8x32xf32>
    %159 = vector.broadcast %136 : vector<1x32xf32> to vector<8x32xf32>
    %160 = arith.addf %158, %159 : vector<8x32xf32>
    %c0_62 = arith.constant 0 : index
    %c0_63 = arith.constant 0 : index
    %c0_64 = arith.constant 0 : index
    %161 = vector.load %arg11[%c0_62, %c0_63, %c0_64] : memref<2x32x64xf32, #tpu.memory_space<vmem>>, vector<1x32x64xf32>
    %162 = vector.shape_cast %161 : vector<1x32x64xf32> to vector<32x64xf32>
    %cst_65 = arith.constant dense<0.000000e+00> : vector<8x64xf32>
    %163 = tpu.matmul %160, %162, %cst_65 {dimension_numbers = #tpu.dot_dimension_numbers<[1], [0], [0], [1], [0, 0, 1, 1], [], []>} : vector<8x32xf32>, vector<32x64xf32>, vector<8x64xf32> -> vector<8x64xf32>
    %c0_66 = arith.constant 0 : index
    %c0_67 = arith.constant 0 : index
    %c0_68 = arith.constant 0 : index
    %164 = vector.load %arg12[%c0_66, %c0_67, %c0_68] : memref<2x1x64xf32, #tpu.memory_space<vmem>>, vector<1x1x64xf32>
    %165 = vector.shape_cast %164 : vector<1x1x64xf32> to vector<1x64xf32>
    %166 = vector.broadcast %165 : vector<1x64xf32> to vector<8x64xf32>
    %167 = arith.addf %163, %166 : vector<8x64xf32>
    %168 = arith.mulf %167, %167 : vector<8x64xf32>
    %169 = arith.mulf %167, %168 : vector<8x64xf32>
    %cst_69 = arith.constant 4.471500e-02 : f32
    %170 = vector.broadcast %cst_69 : f32 to vector<8x64xf32>
    %171 = arith.mulf %170, %169 : vector<8x64xf32>
    %172 = arith.addf %167, %171 : vector<8x64xf32>
    %cst_70 = arith.constant 0.797884583 : f32
    %173 = vector.broadcast %cst_70 : f32 to vector<8x64xf32>
    %174 = arith.mulf %173, %172 : vector<8x64xf32>
    %175 = math.tanh %174 : vector<8x64xf32>
    %cst_71 = arith.constant 1.000000e+00 : f32
    %176 = vector.broadcast %cst_71 : f32 to vector<8x64xf32>
    %177 = arith.addf %176, %175 : vector<8x64xf32>
    %cst_72 = arith.constant 5.000000e-01 : f32
    %178 = vector.broadcast %cst_72 : f32 to vector<8x64xf32>
    %179 = arith.mulf %178, %177 : vector<8x64xf32>
    %180 = arith.mulf %167, %179 : vector<8x64xf32>
    %c0_73 = arith.constant 0 : index
    %c0_74 = arith.constant 0 : index
    %c0_75 = arith.constant 0 : index
    %181 = vector.load %arg13[%c0_73, %c0_74, %c0_75] : memref<2x64x32xf32, #tpu.memory_space<vmem>>, vector<1x64x32xf32>
    %182 = vector.shape_cast %181 : vector<1x64x32xf32> to vector<64x32xf32>
    %cst_76 = arith.constant dense<0.000000e+00> : vector<8x32xf32>
    %183 = tpu.matmul %180, %182, %cst_76 {dimension_numbers = #tpu.dot_dimension_numbers<[1], [0], [0], [1], [0, 0, 1, 1], [], []>} : vector<8x64xf32>, vector<64x32xf32>, vector<8x32xf32> -> vector<8x32xf32>
    %c0_77 = arith.constant 0 : index
    %c0_78 = arith.constant 0 : index
    %c0_79 = arith.constant 0 : index
    %184 = vector.load %arg14[%c0_77, %c0_78, %c0_79] : memref<2x1x32xf32, #tpu.memory_space<vmem>>, vector<1x1x32xf32>
    %185 = vector.shape_cast %184 : vector<1x1x32xf32> to vector<1x32xf32>
    %186 = vector.broadcast %185 : vector<1x32xf32> to vector<8x32xf32>
    %187 = arith.addf %183, %186 : vector<8x32xf32>
    %188 = arith.addf %187, %160 : vector<8x32xf32>
    %c0_80 = arith.constant 0 : index
    %c0_81 = arith.constant 0 : index
    %c0_82 = arith.constant 0 : index
    %189 = vector.load %arg15[%c0_80, %c0_81, %c0_82] : memref<2x1x32xf32, #tpu.memory_space<vmem>>, vector<1x1x32xf32>
    %190 = vector.shape_cast %189 : vector<1x1x32xf32> to vector<1x32xf32>
    %c0_83 = arith.constant 0 : index
    %c0_84 = arith.constant 0 : index
    %c0_85 = arith.constant 0 : index
    %191 = vector.load %arg16[%c0_83, %c0_84, %c0_85] : memref<2x1x32xf32, #tpu.memory_space<vmem>>, vector<1x1x32xf32>
    %192 = vector.shape_cast %191 : vector<1x1x32xf32> to vector<1x32xf32>
    %cst_86 = arith.constant dense<0.000000e+00> : vector<8xf32>
    %193 = vector.multi_reduction <add>, %188, %cst_86 [1] : vector<8x32xf32> to vector<8xf32>
    %194 = vector.shape_cast %193 : vector<8xf32> to vector<8x1xf32>
    %cst_87 = arith.constant 3.200000e+01 : f32
    %195 = vector.broadcast %cst_87 : f32 to vector<8x1xf32>
    %196 = arith.divf %194, %195 : vector<8x1xf32>
    %197 = vector.broadcast %196 : vector<8x1xf32> to vector<8x32xf32>
    %198 = arith.subf %188, %197 : vector<8x32xf32>
    %199 = vector.broadcast %196 : vector<8x1xf32> to vector<8x32xf32>
    %200 = arith.subf %188, %199 : vector<8x32xf32>
    %201 = arith.mulf %198, %200 : vector<8x32xf32>
    %cst_88 = arith.constant dense<0.000000e+00> : vector<8xf32>
    %202 = vector.multi_reduction <add>, %201, %cst_88 [1] : vector<8x32xf32> to vector<8xf32>
    %203 = vector.shape_cast %202 : vector<8xf32> to vector<8x1xf32>
    %cst_89 = arith.constant 3.200000e+01 : f32
    %204 = vector.broadcast %cst_89 : f32 to vector<8x1xf32>
    %205 = arith.divf %203, %204 : vector<8x1xf32>
    %206 = vector.broadcast %196 : vector<8x1xf32> to vector<8x32xf32>
    %207 = arith.subf %188, %206 : vector<8x32xf32>
    %cst_90 = arith.constant 9.99999996E-13 : f32
    %208 = vector.broadcast %cst_90 : f32 to vector<8x1xf32>
    %209 = arith.addf %205, %208 : vector<8x1xf32>
    %210 = math.rsqrt %209 : vector<8x1xf32>
    %211 = vector.broadcast %210 : vector<8x1xf32> to vector<8x32xf32>
    %212 = arith.mulf %207, %211 : vector<8x32xf32>
    %213 = vector.broadcast %190 : vector<1x32xf32> to vector<8x32xf32>
    %214 = arith.mulf %212, %213 : vector<8x32xf32>
    %215 = vector.broadcast %192 : vector<1x32xf32> to vector<8x32xf32>
    %216 = arith.addf %214, %215 : vector<8x32xf32>
    %c1 = arith.constant 1 : index
    %c0_91 = arith.constant 0 : index
    %c0_92 = arith.constant 0 : index
    %217 = vector.load %arg5[%c1, %c0_91, %c0_92] : memref<2x32x96xf32, #tpu.memory_space<vmem>>, vector<1x32x96xf32>
    %218 = vector.shape_cast %217 : vector<1x32x96xf32> to vector<32x96xf32>
    %cst_93 = arith.constant dense<0.000000e+00> : vector<8x96xf32>
    %219 = tpu.matmul %216, %218, %cst_93 {dimension_numbers = #tpu.dot_dimension_numbers<[1], [0], [0], [1], [0, 0, 1, 1], [], []>} : vector<8x32xf32>, vector<32x96xf32>, vector<8x96xf32> -> vector<8x96xf32>
    %c1_94 = arith.constant 1 : index
    %c0_95 = arith.constant 0 : index
    %c0_96 = arith.constant 0 : index
    %220 = vector.load %arg6[%c1_94, %c0_95, %c0_96] : memref<2x1x96xf32, #tpu.memory_space<vmem>>, vector<1x1x96xf32>
    %221 = vector.shape_cast %220 : vector<1x1x96xf32> to vector<1x96xf32>
    %222 = vector.broadcast %221 : vector<1x96xf32> to vector<8x96xf32>
    %223 = arith.addf %219, %222 : vector<8x96xf32>
    %c1_97 = arith.constant 1 : index
    %c0_98 = arith.constant 0 : index
    %c0_99 = arith.constant 0 : index
    %224 = vector.load %arg7[%c1_97, %c0_98, %c0_99] : memref<2x32x32xf32, #tpu.memory_space<vmem>>, vector<1x32x32xf32>
    %225 = vector.shape_cast %224 : vector<1x32x32xf32> to vector<32x32xf32>
    %cst_100 = arith.constant 0.000000e+00 : f32
    %226 = vector.broadcast %cst_100 : f32 to vector<8x32xf32>
    %227 = vector.extract_strided_slice %223 {offsets = [0, 0], sizes = [8, 8], strides = [1, 1]} : vector<8x96xf32> to vector<8x8xf32>
    %228 = vector.extract_strided_slice %223 {offsets = [0, 32], sizes = [8, 8], strides = [1, 1]} : vector<8x96xf32> to vector<8x8xf32>
    %229 = vector.extract_strided_slice %223 {offsets = [0, 64], sizes = [8, 8], strides = [1, 1]} : vector<8x96xf32> to vector<8x8xf32>
    %230 = tpu.transpose %228, [1, 0] : vector<8x8xf32> -> vector<8x8xf32>
    %cst_101 = arith.constant dense<0.000000e+00> : vector<8x8xf32>
    %231 = tpu.matmul %227, %230, %cst_101 {dimension_numbers = #tpu.dot_dimension_numbers<[1], [0], [0], [1], [0, 0, 1, 1], [], []>} : vector<8x8xf32>, vector<8x8xf32>, vector<8x8xf32> -> vector<8x8xf32>
    %cst_102 = arith.constant 0.353553385 : f32
    %232 = vector.broadcast %cst_102 : f32 to vector<8x8xf32>
    %233 = arith.mulf %231, %232 : vector<8x8xf32>
    %234 = vector.broadcast %29 : vector<1x8xf32> to vector<8x8xf32>
    %235 = arith.addf %233, %234 : vector<8x8xf32>
    %cst_103 = arith.constant dense<0xFF800000> : vector<8xf32>
    %236 = vector.multi_reduction <maximumf>, %235, %cst_103 [1] : vector<8x8xf32> to vector<8xf32>
    %237 = vector.shape_cast %236 : vector<8xf32> to vector<8x1xf32>
    %238 = vector.broadcast %237 : vector<8x1xf32> to vector<8x8xf32>
    %239 = arith.subf %235, %238 : vector<8x8xf32>
    %240 = math.exp %239 : vector<8x8xf32>
    %cst_104 = arith.constant dense<0.000000e+00> : vector<8xf32>
    %241 = vector.multi_reduction <add>, %240, %cst_104 [1] : vector<8x8xf32> to vector<8xf32>
    %242 = vector.shape_cast %241 : vector<8xf32> to vector<8x1xf32>
    %243 = vector.broadcast %242 : vector<8x1xf32> to vector<8x8xf32>
    %244 = arith.divf %240, %243 : vector<8x8xf32>
    %cst_105 = arith.constant dense<0.000000e+00> : vector<8x8xf32>
    %245 = tpu.matmul %244, %229, %cst_105 {dimension_numbers = #tpu.dot_dimension_numbers<[1], [0], [0], [1], [0, 0, 1, 1], [], []>} : vector<8x8xf32>, vector<8x8xf32>, vector<8x8xf32> -> vector<8x8xf32>
    %246 = vector.extract_strided_slice %225 {offsets = [0, 0], sizes = [8, 32], strides = [1, 1]} : vector<32x32xf32> to vector<8x32xf32>
    %cst_106 = arith.constant dense<0.000000e+00> : vector<8x32xf32>
    %247 = tpu.matmul %245, %246, %cst_106 {dimension_numbers = #tpu.dot_dimension_numbers<[1], [0], [0], [1], [0, 0, 1, 1], [], []>} : vector<8x8xf32>, vector<8x32xf32>, vector<8x32xf32> -> vector<8x32xf32>
    %248 = arith.addf %226, %247 : vector<8x32xf32>
    %249 = vector.extract_strided_slice %223 {offsets = [0, 8], sizes = [8, 8], strides = [1, 1]} : vector<8x96xf32> to vector<8x8xf32>
    %250 = vector.extract_strided_slice %223 {offsets = [0, 40], sizes = [8, 8], strides = [1, 1]} : vector<8x96xf32> to vector<8x8xf32>
    %251 = vector.extract_strided_slice %223 {offsets = [0, 72], sizes = [8, 8], strides = [1, 1]} : vector<8x96xf32> to vector<8x8xf32>
    %252 = tpu.transpose %250, [1, 0] : vector<8x8xf32> -> vector<8x8xf32>
    %cst_107 = arith.constant dense<0.000000e+00> : vector<8x8xf32>
    %253 = tpu.matmul %249, %252, %cst_107 {dimension_numbers = #tpu.dot_dimension_numbers<[1], [0], [0], [1], [0, 0, 1, 1], [], []>} : vector<8x8xf32>, vector<8x8xf32>, vector<8x8xf32> -> vector<8x8xf32>
    %cst_108 = arith.constant 0.353553385 : f32
    %254 = vector.broadcast %cst_108 : f32 to vector<8x8xf32>
    %255 = arith.mulf %253, %254 : vector<8x8xf32>
    %256 = vector.broadcast %29 : vector<1x8xf32> to vector<8x8xf32>
    %257 = arith.addf %255, %256 : vector<8x8xf32>
    %cst_109 = arith.constant dense<0xFF800000> : vector<8xf32>
    %258 = vector.multi_reduction <maximumf>, %257, %cst_109 [1] : vector<8x8xf32> to vector<8xf32>
    %259 = vector.shape_cast %258 : vector<8xf32> to vector<8x1xf32>
    %260 = vector.broadcast %259 : vector<8x1xf32> to vector<8x8xf32>
    %261 = arith.subf %257, %260 : vector<8x8xf32>
    %262 = math.exp %261 : vector<8x8xf32>
    %cst_110 = arith.constant dense<0.000000e+00> : vector<8xf32>
    %263 = vector.multi_reduction <add>, %262, %cst_110 [1] : vector<8x8xf32> to vector<8xf32>
    %264 = vector.shape_cast %263 : vector<8xf32> to vector<8x1xf32>
    %265 = vector.broadcast %264 : vector<8x1xf32> to vector<8x8xf32>
    %266 = arith.divf %262, %265 : vector<8x8xf32>
    %cst_111 = arith.constant dense<0.000000e+00> : vector<8x8xf32>
    %267 = tpu.matmul %266, %251, %cst_111 {dimension_numbers = #tpu.dot_dimension_numbers<[1], [0], [0], [1], [0, 0, 1, 1], [], []>} : vector<8x8xf32>, vector<8x8xf32>, vector<8x8xf32> -> vector<8x8xf32>
    %268 = vector.extract_strided_slice %225 {offsets = [8, 0], sizes = [8, 32], strides = [1, 1]} : vector<32x32xf32> to vector<8x32xf32>
    %cst_112 = arith.constant dense<0.000000e+00> : vector<8x32xf32>
    %269 = tpu.matmul %267, %268, %cst_112 {dimension_numbers = #tpu.dot_dimension_numbers<[1], [0], [0], [1], [0, 0, 1, 1], [], []>} : vector<8x8xf32>, vector<8x32xf32>, vector<8x32xf32> -> vector<8x32xf32>
    %270 = arith.addf %248, %269 : vector<8x32xf32>
    %271 = vector.extract_strided_slice %223 {offsets = [0, 16], sizes = [8, 8], strides = [1, 1]} : vector<8x96xf32> to vector<8x8xf32>
    %272 = vector.extract_strided_slice %223 {offsets = [0, 48], sizes = [8, 8], strides = [1, 1]} : vector<8x96xf32> to vector<8x8xf32>
    %273 = vector.extract_strided_slice %223 {offsets = [0, 80], sizes = [8, 8], strides = [1, 1]} : vector<8x96xf32> to vector<8x8xf32>
    %274 = tpu.transpose %272, [1, 0] : vector<8x8xf32> -> vector<8x8xf32>
    %cst_113 = arith.constant dense<0.000000e+00> : vector<8x8xf32>
    %275 = tpu.matmul %271, %274, %cst_113 {dimension_numbers = #tpu.dot_dimension_numbers<[1], [0], [0], [1], [0, 0, 1, 1], [], []>} : vector<8x8xf32>, vector<8x8xf32>, vector<8x8xf32> -> vector<8x8xf32>
    %cst_114 = arith.constant 0.353553385 : f32
    %276 = vector.broadcast %cst_114 : f32 to vector<8x8xf32>
    %277 = arith.mulf %275, %276 : vector<8x8xf32>
    %278 = vector.broadcast %29 : vector<1x8xf32> to vector<8x8xf32>
    %279 = arith.addf %277, %278 : vector<8x8xf32>
    %cst_115 = arith.constant dense<0xFF800000> : vector<8xf32>
    %280 = vector.multi_reduction <maximumf>, %279, %cst_115 [1] : vector<8x8xf32> to vector<8xf32>
    %281 = vector.shape_cast %280 : vector<8xf32> to vector<8x1xf32>
    %282 = vector.broadcast %281 : vector<8x1xf32> to vector<8x8xf32>
    %283 = arith.subf %279, %282 : vector<8x8xf32>
    %284 = math.exp %283 : vector<8x8xf32>
    %cst_116 = arith.constant dense<0.000000e+00> : vector<8xf32>
    %285 = vector.multi_reduction <add>, %284, %cst_116 [1] : vector<8x8xf32> to vector<8xf32>
    %286 = vector.shape_cast %285 : vector<8xf32> to vector<8x1xf32>
    %287 = vector.broadcast %286 : vector<8x1xf32> to vector<8x8xf32>
    %288 = arith.divf %284, %287 : vector<8x8xf32>
    %cst_117 = arith.constant dense<0.000000e+00> : vector<8x8xf32>
    %289 = tpu.matmul %288, %273, %cst_117 {dimension_numbers = #tpu.dot_dimension_numbers<[1], [0], [0], [1], [0, 0, 1, 1], [], []>} : vector<8x8xf32>, vector<8x8xf32>, vector<8x8xf32> -> vector<8x8xf32>
    %290 = vector.extract_strided_slice %225 {offsets = [16, 0], sizes = [8, 32], strides = [1, 1]} : vector<32x32xf32> to vector<8x32xf32>
    %cst_118 = arith.constant dense<0.000000e+00> : vector<8x32xf32>
    %291 = tpu.matmul %289, %290, %cst_118 {dimension_numbers = #tpu.dot_dimension_numbers<[1], [0], [0], [1], [0, 0, 1, 1], [], []>} : vector<8x8xf32>, vector<8x32xf32>, vector<8x32xf32> -> vector<8x32xf32>
    %292 = arith.addf %270, %291 : vector<8x32xf32>
    %293 = vector.extract_strided_slice %223 {offsets = [0, 24], sizes = [8, 8], strides = [1, 1]} : vector<8x96xf32> to vector<8x8xf32>
    %294 = vector.extract_strided_slice %223 {offsets = [0, 56], sizes = [8, 8], strides = [1, 1]} : vector<8x96xf32> to vector<8x8xf32>
    %295 = vector.extract_strided_slice %223 {offsets = [0, 88], sizes = [8, 8], strides = [1, 1]} : vector<8x96xf32> to vector<8x8xf32>
    %296 = tpu.transpose %294, [1, 0] : vector<8x8xf32> -> vector<8x8xf32>
    %cst_119 = arith.constant dense<0.000000e+00> : vector<8x8xf32>
    %297 = tpu.matmul %293, %296, %cst_119 {dimension_numbers = #tpu.dot_dimension_numbers<[1], [0], [0], [1], [0, 0, 1, 1], [], []>} : vector<8x8xf32>, vector<8x8xf32>, vector<8x8xf32> -> vector<8x8xf32>
    %cst_120 = arith.constant 0.353553385 : f32
    %298 = vector.broadcast %cst_120 : f32 to vector<8x8xf32>
    %299 = arith.mulf %297, %298 : vector<8x8xf32>
    %300 = vector.broadcast %29 : vector<1x8xf32> to vector<8x8xf32>
    %301 = arith.addf %299, %300 : vector<8x8xf32>
    %cst_121 = arith.constant dense<0xFF800000> : vector<8xf32>
    %302 = vector.multi_reduction <maximumf>, %301, %cst_121 [1] : vector<8x8xf32> to vector<8xf32>
    %303 = vector.shape_cast %302 : vector<8xf32> to vector<8x1xf32>
    %304 = vector.broadcast %303 : vector<8x1xf32> to vector<8x8xf32>
    %305 = arith.subf %301, %304 : vector<8x8xf32>
    %306 = math.exp %305 : vector<8x8xf32>
    %cst_122 = arith.constant dense<0.000000e+00> : vector<8xf32>
    %307 = vector.multi_reduction <add>, %306, %cst_122 [1] : vector<8x8xf32> to vector<8xf32>
    %308 = vector.shape_cast %307 : vector<8xf32> to vector<8x1xf32>
    %309 = vector.broadcast %308 : vector<8x1xf32> to vector<8x8xf32>
    %310 = arith.divf %306, %309 : vector<8x8xf32>
    %cst_123 = arith.constant dense<0.000000e+00> : vector<8x8xf32>
    %311 = tpu.matmul %310, %295, %cst_123 {dimension_numbers = #tpu.dot_dimension_numbers<[1], [0], [0], [1], [0, 0, 1, 1], [], []>} : vector<8x8xf32>, vector<8x8xf32>, vector<8x8xf32> -> vector<8x8xf32>
    %312 = vector.extract_strided_slice %225 {offsets = [24, 0], sizes = [8, 32], strides = [1, 1]} : vector<32x32xf32> to vector<8x32xf32>
    %cst_124 = arith.constant dense<0.000000e+00> : vector<8x32xf32>
    %313 = tpu.matmul %311, %312, %cst_124 {dimension_numbers = #tpu.dot_dimension_numbers<[1], [0], [0], [1], [0, 0, 1, 1], [], []>} : vector<8x8xf32>, vector<8x32xf32>, vector<8x32xf32> -> vector<8x32xf32>
    %314 = arith.addf %292, %313 : vector<8x32xf32>
    %c1_125 = arith.constant 1 : index
    %c0_126 = arith.constant 0 : index
    %c0_127 = arith.constant 0 : index
    %315 = vector.load %arg8[%c1_125, %c0_126, %c0_127] : memref<2x1x32xf32, #tpu.memory_space<vmem>>, vector<1x1x32xf32>
    %316 = vector.shape_cast %315 : vector<1x1x32xf32> to vector<1x32xf32>
    %317 = vector.broadcast %316 : vector<1x32xf32> to vector<8x32xf32>
    %318 = arith.addf %314, %317 : vector<8x32xf32>
    %319 = arith.addf %318, %216 : vector<8x32xf32>
    %c1_128 = arith.constant 1 : index
    %c0_129 = arith.constant 0 : index
    %c0_130 = arith.constant 0 : index
    %320 = vector.load %arg9[%c1_128, %c0_129, %c0_130] : memref<2x1x32xf32, #tpu.memory_space<vmem>>, vector<1x1x32xf32>
    %321 = vector.shape_cast %320 : vector<1x1x32xf32> to vector<1x32xf32>
    %c1_131 = arith.constant 1 : index
    %c0_132 = arith.constant 0 : index
    %c0_133 = arith.constant 0 : index
    %322 = vector.load %arg10[%c1_131, %c0_132, %c0_133] : memref<2x1x32xf32, #tpu.memory_space<vmem>>, vector<1x1x32xf32>
    %323 = vector.shape_cast %322 : vector<1x1x32xf32> to vector<1x32xf32>
    %cst_134 = arith.constant dense<0.000000e+00> : vector<8xf32>
    %324 = vector.multi_reduction <add>, %319, %cst_134 [1] : vector<8x32xf32> to vector<8xf32>
    %325 = vector.shape_cast %324 : vector<8xf32> to vector<8x1xf32>
    %cst_135 = arith.constant 3.200000e+01 : f32
    %326 = vector.broadcast %cst_135 : f32 to vector<8x1xf32>
    %327 = arith.divf %325, %326 : vector<8x1xf32>
    %328 = vector.broadcast %327 : vector<8x1xf32> to vector<8x32xf32>
    %329 = arith.subf %319, %328 : vector<8x32xf32>
    %330 = vector.broadcast %327 : vector<8x1xf32> to vector<8x32xf32>
    %331 = arith.subf %319, %330 : vector<8x32xf32>
    %332 = arith.mulf %329, %331 : vector<8x32xf32>
    %cst_136 = arith.constant dense<0.000000e+00> : vector<8xf32>
    %333 = vector.multi_reduction <add>, %332, %cst_136 [1] : vector<8x32xf32> to vector<8xf32>
    %334 = vector.shape_cast %333 : vector<8xf32> to vector<8x1xf32>
    %cst_137 = arith.constant 3.200000e+01 : f32
    %335 = vector.broadcast %cst_137 : f32 to vector<8x1xf32>
    %336 = arith.divf %334, %335 : vector<8x1xf32>
    %337 = vector.broadcast %327 : vector<8x1xf32> to vector<8x32xf32>
    %338 = arith.subf %319, %337 : vector<8x32xf32>
    %cst_138 = arith.constant 9.99999996E-13 : f32
    %339 = vector.broadcast %cst_138 : f32 to vector<8x1xf32>
    %340 = arith.addf %336, %339 : vector<8x1xf32>
    %341 = math.rsqrt %340 : vector<8x1xf32>
    %342 = vector.broadcast %341 : vector<8x1xf32> to vector<8x32xf32>
    %343 = arith.mulf %338, %342 : vector<8x32xf32>
    %344 = vector.broadcast %321 : vector<1x32xf32> to vector<8x32xf32>
    %345 = arith.mulf %343, %344 : vector<8x32xf32>
    %346 = vector.broadcast %323 : vector<1x32xf32> to vector<8x32xf32>
    %347 = arith.addf %345, %346 : vector<8x32xf32>
    %c1_139 = arith.constant 1 : index
    %c0_140 = arith.constant 0 : index
    %c0_141 = arith.constant 0 : index
    %348 = vector.load %arg11[%c1_139, %c0_140, %c0_141] : memref<2x32x64xf32, #tpu.memory_space<vmem>>, vector<1x32x64xf32>
    %349 = vector.shape_cast %348 : vector<1x32x64xf32> to vector<32x64xf32>
    %cst_142 = arith.constant dense<0.000000e+00> : vector<8x64xf32>
    %350 = tpu.matmul %347, %349, %cst_142 {dimension_numbers = #tpu.dot_dimension_numbers<[1], [0], [0], [1], [0, 0, 1, 1], [], []>} : vector<8x32xf32>, vector<32x64xf32>, vector<8x64xf32> -> vector<8x64xf32>
    %c1_143 = arith.constant 1 : index
    %c0_144 = arith.constant 0 : index
    %c0_145 = arith.constant 0 : index
    %351 = vector.load %arg12[%c1_143, %c0_144, %c0_145] : memref<2x1x64xf32, #tpu.memory_space<vmem>>, vector<1x1x64xf32>
    %352 = vector.shape_cast %351 : vector<1x1x64xf32> to vector<1x64xf32>
    %353 = vector.broadcast %352 : vector<1x64xf32> to vector<8x64xf32>
    %354 = arith.addf %350, %353 : vector<8x64xf32>
    %355 = arith.mulf %354, %354 : vector<8x64xf32>
    %356 = arith.mulf %354, %355 : vector<8x64xf32>
    %cst_146 = arith.constant 4.471500e-02 : f32
    %357 = vector.broadcast %cst_146 : f32 to vector<8x64xf32>
    %358 = arith.mulf %357, %356 : vector<8x64xf32>
    %359 = arith.addf %354, %358 : vector<8x64xf32>
    %cst_147 = arith.constant 0.797884583 : f32
    %360 = vector.broadcast %cst_147 : f32 to vector<8x64xf32>
    %361 = arith.mulf %360, %359 : vector<8x64xf32>
    %362 = math.tanh %361 : vector<8x64xf32>
    %cst_148 = arith.constant 1.000000e+00 : f32
    %363 = vector.broadcast %cst_148 : f32 to vector<8x64xf32>
    %364 = arith.addf %363, %362 : vector<8x64xf32>
    %cst_149 = arith.constant 5.000000e-01 : f32
    %365 = vector.broadcast %cst_149 : f32 to vector<8x64xf32>
    %366 = arith.mulf %365, %364 : vector<8x64xf32>
    %367 = arith.mulf %354, %366 : vector<8x64xf32>
    %c1_150 = arith.constant 1 : index
    %c0_151 = arith.constant 0 : index
    %c0_152 = arith.constant 0 : index
    %368 = vector.load %arg13[%c1_150, %c0_151, %c0_152] : memref<2x64x32xf32, #tpu.memory_space<vmem>>, vector<1x64x32xf32>
    %369 = vector.shape_cast %368 : vector<1x64x32xf32> to vector<64x32xf32>
    %cst_153 = arith.constant dense<0.000000e+00> : vector<8x32xf32>
    %370 = tpu.matmul %367, %369, %cst_153 {dimension_numbers = #tpu.dot_dimension_numbers<[1], [0], [0], [1], [0, 0, 1, 1], [], []>} : vector<8x64xf32>, vector<64x32xf32>, vector<8x32xf32> -> vector<8x32xf32>
    %c1_154 = arith.constant 1 : index
    %c0_155 = arith.constant 0 : index
    %c0_156 = arith.constant 0 : index
    %371 = vector.load %arg14[%c1_154, %c0_155, %c0_156] : memref<2x1x32xf32, #tpu.memory_space<vmem>>, vector<1x1x32xf32>
    %372 = vector.shape_cast %371 : vector<1x1x32xf32> to vector<1x32xf32>
    %373 = vector.broadcast %372 : vector<1x32xf32> to vector<8x32xf32>
    %374 = arith.addf %370, %373 : vector<8x32xf32>
    %375 = arith.addf %374, %347 : vector<8x32xf32>
    %c1_157 = arith.constant 1 : index
    %c0_158 = arith.constant 0 : index
    %c0_159 = arith.constant 0 : index
    %376 = vector.load %arg15[%c1_157, %c0_158, %c0_159] : memref<2x1x32xf32, #tpu.memory_space<vmem>>, vector<1x1x32xf32>
    %377 = vector.shape_cast %376 : vector<1x1x32xf32> to vector<1x32xf32>
    %c1_160 = arith.constant 1 : index
    %c0_161 = arith.constant 0 : index
    %c0_162 = arith.constant 0 : index
    %378 = vector.load %arg16[%c1_160, %c0_161, %c0_162] : memref<2x1x32xf32, #tpu.memory_space<vmem>>, vector<1x1x32xf32>
    %379 = vector.shape_cast %378 : vector<1x1x32xf32> to vector<1x32xf32>
    %cst_163 = arith.constant dense<0.000000e+00> : vector<8xf32>
    %380 = vector.multi_reduction <add>, %375, %cst_163 [1] : vector<8x32xf32> to vector<8xf32>
    %381 = vector.shape_cast %380 : vector<8xf32> to vector<8x1xf32>
    %cst_164 = arith.constant 3.200000e+01 : f32
    %382 = vector.broadcast %cst_164 : f32 to vector<8x1xf32>
    %383 = arith.divf %381, %382 : vector<8x1xf32>
    %384 = vector.broadcast %383 : vector<8x1xf32> to vector<8x32xf32>
    %385 = arith.subf %375, %384 : vector<8x32xf32>
    %386 = vector.broadcast %383 : vector<8x1xf32> to vector<8x32xf32>
    %387 = arith.subf %375, %386 : vector<8x32xf32>
    %388 = arith.mulf %385, %387 : vector<8x32xf32>
    %cst_165 = arith.constant dense<0.000000e+00> : vector<8xf32>
    %389 = vector.multi_reduction <add>, %388, %cst_165 [1] : vector<8x32xf32> to vector<8xf32>
    %390 = vector.shape_cast %389 : vector<8xf32> to vector<8x1xf32>
    %cst_166 = arith.constant 3.200000e+01 : f32
    %391 = vector.broadcast %cst_166 : f32 to vector<8x1xf32>
    %392 = arith.divf %390, %391 : vector<8x1xf32>
    %393 = vector.broadcast %383 : vector<8x1xf32> to vector<8x32xf32>
    %394 = arith.subf %375, %393 : vector<8x32xf32>
    %cst_167 = arith.constant 9.99999996E-13 : f32
    %395 = vector.broadcast %cst_167 : f32 to vector<8x1xf32>
    %396 = arith.addf %392, %395 : vector<8x1xf32>
    %397 = math.rsqrt %396 : vector<8x1xf32>
    %398 = vector.broadcast %397 : vector<8x1xf32> to vector<8x32xf32>
    %399 = arith.mulf %394, %398 : vector<8x32xf32>
    %400 = vector.broadcast %377 : vector<1x32xf32> to vector<8x32xf32>
    %401 = arith.mulf %399, %400 : vector<8x32xf32>
    %402 = vector.broadcast %379 : vector<1x32xf32> to vector<8x32xf32>
    %403 = arith.addf %401, %402 : vector<8x32xf32>
    %404 = vector.extract_strided_slice %403 {offsets = [0, 0], sizes = [1, 32], strides = [1, 1]} : vector<8x32xf32> to vector<1x32xf32>
    %c0_168 = arith.constant 0 : index
    %c0_169 = arith.constant 0 : index
    %405 = vector.load %arg17[%c0_168, %c0_169] : memref<32x32xf32, #tpu.memory_space<vmem>>, vector<32x32xf32>
    %cst_170 = arith.constant dense<0.000000e+00> : vector<1x32xf32>
    %406 = tpu.matmul %404, %405, %cst_170 {dimension_numbers = #tpu.dot_dimension_numbers<[1], [0], [0], [1], [0, 0, 1, 1], [], []>} : vector<1x32xf32>, vector<32x32xf32>, vector<1x32xf32> -> vector<1x32xf32>
    %c0_171 = arith.constant 0 : index
    %c0_172 = arith.constant 0 : index
    %407 = vector.load %arg18[%c0_171, %c0_172] : memref<1x32xf32, #tpu.memory_space<vmem>>, vector<1x32xf32>
    %408 = arith.addf %406, %407 : vector<1x32xf32>
    %409 = math.tanh %408 : vector<1x32xf32>
    %cst_173 = arith.constant dense<0.000000e+00> : vector<32xf32>
    %410 = vector.multi_reduction <add>, %403, %cst_173 [0] : vector<8x32xf32> to vector<32xf32>
    %411 = vector.shape_cast %410 : vector<32xf32> to vector<1x32xf32>
    %cst_174 = arith.constant 8.000000e+00 : f32
    %412 = vector.broadcast %cst_174 : f32 to vector<1x32xf32>
    %413 = arith.divf %411, %412 : vector<1x32xf32>
    %c0_175 = arith.constant 0 : index
    %c0_176 = arith.constant 0 : index
    %414 = vector.load %arg19[%c0_175, %c0_176] : memref<64x2xf32, #tpu.memory_space<vmem>>, vector<64x2xf32>
    %415 = vector.extract_strided_slice %414 {offsets = [0, 0], sizes = [32, 2], strides = [1, 1]} : vector<64x2xf32> to vector<32x2xf32>
    %cst_177 = arith.constant dense<0.000000e+00> : vector<1x2xf32>
    %416 = tpu.matmul %413, %415, %cst_177 {dimension_numbers = #tpu.dot_dimension_numbers<[1], [0], [0], [1], [0, 0, 1, 1], [], []>} : vector<1x32xf32>, vector<32x2xf32>, vector<1x2xf32> -> vector<1x2xf32>
    %417 = vector.extract_strided_slice %414 {offsets = [32, 0], sizes = [32, 2], strides = [1, 1]} : vector<64x2xf32> to vector<32x2xf32>
    %cst_178 = arith.constant dense<0.000000e+00> : vector<1x2xf32>
    %418 = tpu.matmul %409, %417, %cst_178 {dimension_numbers = #tpu.dot_dimension_numbers<[1], [0], [0], [1], [0, 0, 1, 1], [], []>} : vector<1x32xf32>, vector<32x2xf32>, vector<1x2xf32> -> vector<1x2xf32>
    %419 = arith.addf %416, %418 : vector<1x2xf32>
    %c0_179 = arith.constant 0 : index
    %c0_180 = arith.constant 0 : index
    %420 = vector.load %arg20[%c0_179, %c0_180] : memref<1x2xf32, #tpu.memory_space<vmem>>, vector<1x2xf32>
    %421 = arith.addf %419, %420 : vector<1x2xf32>
    %c0_181 = arith.constant 0 : index
    %c0_182 = arith.constant 0 : index
    %c0_183 = arith.constant 0 : index
    %422 = vector.load %arg21[%c0_181, %c0_182, %c0_183] : memref<1x1x2xf32, #tpu.memory_space<vmem>>, vector<1x1x2xf32>
    %423 = vector.shape_cast %422 : vector<1x1x2xf32> to vector<1x2xf32>
    %424 = vector.shape_cast %421 : vector<1x2xf32> to vector<1x1x2xf32>
    tpu.vector_store %arg21[%c0_181, %c0_182, %c0_183], %424 {strides = array<i32>} : memref<1x1x2xf32, #tpu.memory_space<vmem>>, vector<1x1x2xf32>,
    return
  }
  func.func @transform_0(%arg0: i32) -> (i32, i32, i32) {
    %c0_i32 = arith.constant 0 : i32
    %c0_i32_0 = arith.constant 0 : i32
    %c0_i32_1 = arith.constant 0 : i32
    return %arg0, %c0_i32, %c0_i32_0 : i32, i32, i32
  }
  func.func @transform_1(%arg0: i32) -> (i32, i32, i32) {
    %c0_i32 = arith.constant 0 : i32
    %c0_i32_0 = arith.constant 0 : i32
    %c0_i32_1 = arith.constant 0 : i32
    return %arg0, %c0_i32, %c0_i32_0 : i32, i32, i32
  }
  func.func @transform_2(%arg0: i32) -> (i32, i32) {
    %c0_i32 = arith.constant 0 : i32
    %c0_i32_0 = arith.constant 0 : i32
    %c0_i32_1 = arith.constant 0 : i32
    return %c0_i32, %c0_i32_0 : i32, i32
  }
  func.func @transform_3(%arg0: i32) -> (i32, i32) {
    %c0_i32 = arith.constant 0 : i32
    %c0_i32_0 = arith.constant 0 : i32
    %c0_i32_1 = arith.constant 0 : i32
    return %c0_i32, %c0_i32_0 : i32, i32
  }
  func.func @transform_4(%arg0: i32) -> (i32, i32, i32) {
    %c0_i32 = arith.constant 0 : i32
    %c0_i32_0 = arith.constant 0 : i32
    %c0_i32_1 = arith.constant 0 : i32
    %c0_i32_2 = arith.constant 0 : i32
    return %c0_i32, %c0_i32_0, %c0_i32_1 : i32, i32, i32
  }
  func.func @transform_5(%arg0: i32) -> (i32, i32, i32) {
    %c0_i32 = arith.constant 0 : i32
    %c0_i32_0 = arith.constant 0 : i32
    %c0_i32_1 = arith.constant 0 : i32
    %c0_i32_2 = arith.constant 0 : i32
    return %c0_i32, %c0_i32_0, %c0_i32_1 : i32, i32, i32
  }
  func.func @transform_6(%arg0: i32) -> (i32, i32, i32) {
    %c0_i32 = arith.constant 0 : i32
    %c0_i32_0 = arith.constant 0 : i32
    %c0_i32_1 = arith.constant 0 : i32
    %c0_i32_2 = arith.constant 0 : i32
    return %c0_i32, %c0_i32_0, %c0_i32_1 : i32, i32, i32
  }
  func.func @transform_7(%arg0: i32) -> (i32, i32, i32) {
    %c0_i32 = arith.constant 0 : i32
    %c0_i32_0 = arith.constant 0 : i32
    %c0_i32_1 = arith.constant 0 : i32
    %c0_i32_2 = arith.constant 0 : i32
    return %c0_i32, %c0_i32_0, %c0_i32_1 : i32, i32, i32
  }
  func.func @transform_8(%arg0: i32) -> (i32, i32, i32) {
    %c0_i32 = arith.constant 0 : i32
    %c0_i32_0 = arith.constant 0 : i32
    %c0_i32_1 = arith.constant 0 : i32
    %c0_i32_2 = arith.constant 0 : i32
    return %c0_i32, %c0_i32_0, %c0_i32_1 : i32, i32, i32
  }
  func.func @transform_9(%arg0: i32) -> (i32, i32, i32) {
    %c0_i32 = arith.constant 0 : i32
    %c0_i32_0 = arith.constant 0 : i32
    %c0_i32_1 = arith.constant 0 : i32
    %c0_i32_2 = arith.constant 0 : i32
    return %c0_i32, %c0_i32_0, %c0_i32_1 : i32, i32, i32
  }
  func.func @transform_10(%arg0: i32) -> (i32, i32, i32) {
    %c0_i32 = arith.constant 0 : i32
    %c0_i32_0 = arith.constant 0 : i32
    %c0_i32_1 = arith.constant 0 : i32
    %c0_i32_2 = arith.constant 0 : i32
    return %c0_i32, %c0_i32_0, %c0_i32_1 : i32, i32, i32
  }
  func.func @transform_11(%arg0: i32) -> (i32, i32, i32) {
    %c0_i32 = arith.constant 0 : i32
    %c0_i32_0 = arith.constant 0 : i32
    %c0_i32_1 = arith.constant 0 : i32
    %c0_i32_2 = arith.constant 0 : i32
    return %c0_i32, %c0_i32_0, %c0_i32_1 : i32, i32, i32
  }
  func.func @transform_12(%arg0: i32) -> (i32, i32, i32) {
    %c0_i32 = arith.constant 0 : i32
    %c0_i32_0 = arith.constant 0 : i32
    %c0_i32_1 = arith.constant 0 : i32
    %c0_i32_2 = arith.constant 0 : i32
    return %c0_i32, %c0_i32_0, %c0_i32_1 : i32, i32, i32
  }
  func.func @transform_13(%arg0: i32) -> (i32, i32, i32) {
    %c0_i32 = arith.constant 0 : i32
    %c0_i32_0 = arith.constant 0 : i32
    %c0_i32_1 = arith.constant 0 : i32
    %c0_i32_2 = arith.constant 0 : i32
    return %c0_i32, %c0_i32_0, %c0_i32_1 : i32, i32, i32
  }
  func.func @transform_14(%arg0: i32) -> (i32, i32, i32) {
    %c0_i32 = arith.constant 0 : i32
    %c0_i32_0 = arith.constant 0 : i32
    %c0_i32_1 = arith.constant 0 : i32
    %c0_i32_2 = arith.constant 0 : i32
    return %c0_i32, %c0_i32_0, %c0_i32_1 : i32, i32, i32
  }
  func.func @transform_15(%arg0: i32) -> (i32, i32, i32) {
    %c0_i32 = arith.constant 0 : i32
    %c0_i32_0 = arith.constant 0 : i32
    %c0_i32_1 = arith.constant 0 : i32
    %c0_i32_2 = arith.constant 0 : i32
    return %c0_i32, %c0_i32_0, %c0_i32_1 : i32, i32, i32
  }
  func.func @transform_16(%arg0: i32) -> (i32, i32) {
    %c0_i32 = arith.constant 0 : i32
    %c0_i32_0 = arith.constant 0 : i32
    %c0_i32_1 = arith.constant 0 : i32
    return %c0_i32, %c0_i32_0 : i32, i32
  }
  func.func @transform_17(%arg0: i32) -> (i32, i32) {
    %c0_i32 = arith.constant 0 : i32
    %c0_i32_0 = arith.constant 0 : i32
    %c0_i32_1 = arith.constant 0 : i32
    return %c0_i32, %c0_i32_0 : i32, i32
  }
  func.func @transform_18(%arg0: i32) -> (i32, i32) {
    %c0_i32 = arith.constant 0 : i32
    %c0_i32_0 = arith.constant 0 : i32
    %c0_i32_1 = arith.constant 0 : i32
    return %c0_i32, %c0_i32_0 : i32, i32
  }
  func.func @transform_19(%arg0: i32) -> (i32, i32) {
    %c0_i32 = arith.constant 0 : i32
    %c0_i32_0 = arith.constant 0 : i32
    %c0_i32_1 = arith.constant 0 : i32
    return %c0_i32, %c0_i32_0 : i32, i32
  }
  func.func @transform_20(%arg0: i32) -> (i32, i32, i32) {
    %c0_i32 = arith.constant 0 : i32
    %c0_i32_0 = arith.constant 0 : i32
    %c0_i32_1 = arith.constant 0 : i32
    return %arg0, %c0_i32, %c0_i32_0 : i32, i32, i32
  }
}

</mosaic_0001>

<llo_original>
// kernel: bert_for_class_forward.1
$region0: #{bert_for_class_forward.1}
  #allocation0 [shape = 'u32[]', space=smem, size = 0x4, offset = 0x4, fixed_abs, tag = 'smem constant byte address 0x4 - core index']
  #allocation1 [shape = 'u32[144,128]{1,0:T(1,128)}', space=vmem, size = 0x12000, scoped, tag = 'internal scratch']
  %s0 = inlined_call_operand.vmem [shape: f32[2,8,32], index: 0, kind: input, shape index: {}]
  %s1 = inlined_call_operand.vmem [shape: f32[2,1,8], index: 1, kind: input, shape index: {}]
  %s2 = inlined_call_operand.vmem [shape: f32[1,32], index: 2, kind: input, shape index: {}]
  %s3 = inlined_call_operand.vmem [shape: f32[1,32], index: 3, kind: input, shape index: {}]
  %s4 = inlined_call_operand.vmem [shape: f32[2,32,96], index: 4, kind: input, shape index: {}]
  %s5 = inlined_call_operand.vmem [shape: f32[2,1,96], index: 5, kind: input, shape index: {}]
  %s6 = inlined_call_operand.vmem [shape: f32[2,32,32], index: 6, kind: input, shape index: {}]
  %s7 = inlined_call_operand.vmem [shape: f32[2,1,32], index: 7, kind: input, shape index: {}]
  %s8 = inlined_call_operand.vmem [shape: f32[2,1,32], index: 8, kind: input, shape index: {}]
  %s9 = inlined_call_operand.vmem [shape: f32[2,1,32], index: 9, kind: input, shape index: {}]
  %s10 = inlined_call_operand.vmem [shape: f32[2,32,64], index: 10, kind: input, shape index: {}]
  %s11 = inlined_call_operand.vmem [shape: f32[2,1,64], index: 11, kind: input, shape index: {}]
  %s12 = inlined_call_operand.vmem [shape: f32[2,64,32], index: 12, kind: input, shape index: {}]
  %s13 = inlined_call_operand.vmem [shape: f32[2,1,32], index: 13, kind: input, shape index: {}]
  %s14 = inlined_call_operand.vmem [shape: f32[2,1,32], index: 14, kind: input, shape index: {}]
  %s15 = inlined_call_operand.vmem [shape: f32[2,1,32], index: 15, kind: input, shape index: {}]
  %s16 = inlined_call_operand.vmem [shape: f32[32,32], index: 16, kind: input, shape index: {}]
  %s17 = inlined_call_operand.vmem [shape: f32[1,32], index: 17, kind: input, shape index: {}]
  %s18 = inlined_call_operand.vmem [shape: f32[64,2], index: 18, kind: input, shape index: {}]
  %s19 = inlined_call_operand.vmem [shape: f32[1,2], index: 19, kind: input, shape index: {}]
  %s20 = inlined_call_operand.hbm [shape: f32[2,1,2], index: 20, kind: output, shape index: {}]
  %s21 = sld [smem:[#allocation0]]
  $region113: #{bert_for_class_forward.1} parent=0
    _
  %s23 = ssub.s32 1, %s21
  %s24 = scalar_select 0, %s23, %s21
  $region1: #{bert_for_class_forward.1} parent=0
    #allocation2 [shape = 'u8[1024]{0}', space=vmem, size = 0x400, scoped, tag = 'output window, operand 0']
    #allocation3 [shape = 's32[2]{0}', space=sflag, size = 0x8, scoped, tag = 'scoped memory for bert_for_class_forward.1']
    %25 = vsyncpa [#allocation3], 0
    %s26 = scalar_lea.sflag [#allocation3], 1
    %27 = vsyncpa %s26, 0
    loop: start=0, step=1, limit=4
    $region2: #{bert_for_class_forward.1} parent=1 // loop_pre_header
      _
    $region3: #{bert_for_class_forward.1} parent=1 // loop_header
      %s29 = sphi 0, %s33
      %p30 = scmp.ge.s32.totalorder %s29, 4
      %s39 = sphi 0, %s41
      %s42 = sphi 0, %s39
      %s43 = sphi 0, %s42
      %s59 = sphi 0, %s43
      %s65 = sphi 0, %s67
      %s68 = sphi 0, %s65
      %s69 = sphi 0, %s68
      %s85 = sphi 0, %s69
      %s89 = sphi 0, %s89
      %s91 = sphi 0, %s89
      %s92 = sphi 0, %s91
      %s106 = sphi 0, %s92
      %s110 = sphi 0, %s110
      %s112 = sphi 0, %s110
      %s113 = sphi 0, %s112
      %s127 = sphi 0, %s113
      %s131 = sphi 0, %s131
      %s133 = sphi 0, %s131
      %s134 = sphi 0, %s133
      %s148 = sphi 0, %s134
      %s152 = sphi 0, %s152
      %s154 = sphi 0, %s152
      %s155 = sphi 0, %s154
      %s169 = sphi 0, %s155
      %s173 = sphi 0, %s173
      %s175 = sphi 0, %s173
      %s176 = sphi 0, %s175
      %s190 = sphi 0, %s176
      %s194 = sphi 0, %s194
      %s196 = sphi 0, %s194
      %s197 = sphi 0, %s196
      %s211 = sphi 0, %s197
      %s215 = sphi 0, %s215
      %s217 = sphi 0, %s215
      %s218 = sphi 0, %s217
      %s232 = sphi 0, %s218
      %s236 = sphi 0, %s236
      %s238 = sphi 0, %s236
      %s239 = sphi 0, %s238
      %s253 = sphi 0, %s239
      %s257 = sphi 0, %s257
      %s259 = sphi 0, %s257
      %s260 = sphi 0, %s259
      %s274 = sphi 0, %s260
      %s278 = sphi 0, %s278
      %s280 = sphi 0, %s278
      %s281 = sphi 0, %s280
      %s295 = sphi 0, %s281
      %s299 = sphi 0, %s299
      %s301 = sphi 0, %s299
      %s302 = sphi 0, %s301
      %s316 = sphi 0, %s302
      %s320 = sphi 0, %s320
      %s322 = sphi 0, %s320
      %s323 = sphi 0, %s322
      %s337 = sphi 0, %s323
      %s341 = sphi 0, %s341
      %s343 = sphi 0, %s341
      %s344 = sphi 0, %s343
      %s358 = sphi 0, %s344
      %s362 = sphi 0, %s362
      %s364 = sphi 0, %s362
      %s365 = sphi 0, %s364
      %s379 = sphi 0, %s365
      %s383 = sphi 0, %s383
      %s385 = sphi 0, %s383
      %s386 = sphi 0, %s385
      %s400 = sphi 0, %s386
      %s404 = sphi 0, %s404
      %s406 = sphi 0, %s404
      %s407 = sphi 0, %s406
      %s421 = sphi 0, %s407
      %s425 = sphi 0, %s425
      %s427 = sphi 0, %s425
      %s428 = sphi 0, %s427
      %s442 = sphi 0, %s428
      %s446 = sphi 0, %s446
      %s448 = sphi 0, %s446
      %s449 = sphi 0, %s448
      %s463 = sphi 0, %s449
      %s469 = sphi 0, %s471
      %s472 = sphi 0, %s469
      %s473 = sphi 0, %s472
      %s489 = sphi 0, %s473
    $region4: #{bert_for_class_forward.1} parent=1 // loop_header_branch
      %32 = sbr.rel (%p30) target = $region8
    $region5: #{bert_for_class_forward.1} parent=1 // loop_body
      %s34 = ssub.s32 %s29, 1
      %s35 = ssub.s32 %s29, 2
      %s36 = sadd.s32 %s29, 1
      %s37 = ssub.s32 %s29, %s36
      %p38 = scmp.eq.s32.totalorder %s37, 0
      %s40 = sadd.s32 %s39, 1
      %s41 = scalar_select %p38, %s39, %s40
      %p44 = pneg %p38
      %p45 = scmp.eq.s32.totalorder %s29, 1
      %p46 = por %p44, %p45
      %p47 = scmp.ne.s32.totalorder %s39, %s42
      %p48 = scmp.eq.s32.totalorder %s29, 0
      %p49 = por %p47, %p48
      %p50 = scmp.ne.s32.totalorder %s39, %s42
      %p51 = scmp.eq.s32.totalorder %s34, 1
      %p52 = por %p50, %p51
      %p53 = scmp.ne.s32.totalorder %s42, %s43
      %p54 = scmp.eq.s32.totalorder %s34, 0
      %p55 = por %p53, %p54
      %p56 = scmp.ne.s32.totalorder %s42, %s43
      %p57 = scmp.eq.s32.totalorder %s35, 1
      %p58 = por %p56, %p57
      %p60 = scmp.ne.s32.totalorder %s43, %s59
      %p61 = scmp.eq.s32.totalorder %s35, 0
      %p62 = por %p60, %p61
      %s63 = ssub.s32 %s29, %s36
      %p64 = scmp.eq.s32.totalorder %s63, 0
      %s66 = sadd.s32 %s65, 1
      %s67 = scalar_select %p64, %s65, %s66
      %p70 = pneg %p64
      %p71 = scmp.eq.s32.totalorder %s29, 1
      %p72 = por %p70, %p71
      %p73 = scmp.ne.s32.totalorder %s65, %s68
      %p74 = scmp.eq.s32.totalorder %s29, 0
      %p75 = por %p73, %p74
      %p76 = scmp.ne.s32.totalorder %s65, %s68
      %p77 = scmp.eq.s32.totalorder %s34, 1
      %p78 = por %p76, %p77
      %p79 = scmp.ne.s32.totalorder %s68, %s69
      %p80 = scmp.eq.s32.totalorder %s34, 0
      %p81 = por %p79, %p80
      %p82 = scmp.ne.s32.totalorder %s68, %s69
      %p83 = scmp.eq.s32.totalorder %s35, 1
      %p84 = por %p82, %p83
      %p86 = scmp.ne.s32.totalorder %s69, %s85
      %p87 = scmp.eq.s32.totalorder %s35, 0
      %p88 = por %p86, %p87
      %s90 = sadd.s32 %s89, 1
      %p93 = scmp.eq.s32.totalorder %s29, 1
      %p94 = scmp.ne.s32.totalorder %s89, %s91
      %p95 = scmp.eq.s32.totalorder %s29, 0
      %p96 = por %p94, %p95
      %p97 = scmp.ne.s32.totalorder %s89, %s91
      %p98 = scmp.eq.s32.totalorder %s34, 1
      %p99 = por %p97, %p98
      %p100 = scmp.ne.s32.totalorder %s91, %s92
      %p101 = scmp.eq.s32.totalorder %s34, 0
      %p102 = por %p100, %p101
      %p103 = scmp.ne.s32.totalorder %s91, %s92
      %p104 = scmp.eq.s32.totalorder %s35, 1
      %p105 = por %p103, %p104
      %p107 = scmp.ne.s32.totalorder %s92, %s106
      %p108 = scmp.eq.s32.totalorder %s35, 0
      %p109 = por %p107, %p108
      %s111 = sadd.s32 %s110, 1
      %p114 = scmp.eq.s32.totalorder %s29, 1
      %p115 = scmp.ne.s32.totalorder %s110, %s112
      %p116 = scmp.eq.s32.totalorder %s29, 0
      %p117 = por %p115, %p116
      %p118 = scmp.ne.s32.totalorder %s110, %s112
      %p119 = scmp.eq.s32.totalorder %s34, 1
      %p120 = por %p118, %p119
      %p121 = scmp.ne.s32.totalorder %s112, %s113
      %p122 = scmp.eq.s32.totalorder %s34, 0
      %p123 = por %p121, %p122
      %p124 = scmp.ne.s32.totalorder %s112, %s113
      %p125 = scmp.eq.s32.totalorder %s35, 1
      %p126 = por %p124, %p125
      %p128 = scmp.ne.s32.totalorder %s113, %s127
      %p129 = scmp.eq.s32.totalorder %s35, 0
      %p130 = por %p128, %p129
      %s132 = sadd.s32 %s131, 1
      %p135 = scmp.eq.s32.totalorder %s29, 1
      %p136 = scmp.ne.s32.totalorder %s131, %s133
      %p137 = scmp.eq.s32.totalorder %s29, 0
      %p138 = por %p136, %p137
      %p139 = scmp.ne.s32.totalorder %s131, %s133
      %p140 = scmp.eq.s32.totalorder %s34, 1
      %p141 = por %p139, %p140
      %p142 = scmp.ne.s32.totalorder %s133, %s134
      %p143 = scmp.eq.s32.totalorder %s34, 0
      %p144 = por %p142, %p143
      %p145 = scmp.ne.s32.totalorder %s133, %s134
      %p146 = scmp.eq.s32.totalorder %s35, 1
      %p147 = por %p145, %p146
      %p149 = scmp.ne.s32.totalorder %s134, %s148
      %p150 = scmp.eq.s32.totalorder %s35, 0
      %p151 = por %p149, %p150
      %s153 = sadd.s32 %s152, 1
      %p156 = scmp.eq.s32.totalorder %s29, 1
      %p157 = scmp.ne.s32.totalorder %s152, %s154
      %p158 = scmp.eq.s32.totalorder %s29, 0
      %p159 = por %p157, %p158
      %p160 = scmp.ne.s32.totalorder %s152, %s154
      %p161 = scmp.eq.s32.totalorder %s34, 1
      %p162 = por %p160, %p161
      %p163 = scmp.ne.s32.totalorder %s154, %s155
      %p164 = scmp.eq.s32.totalorder %s34, 0
      %p165 = por %p163, %p164
      %p166 = scmp.ne.s32.totalorder %s154, %s155
      %p167 = scmp.eq.s32.totalorder %s35, 1
      %p168 = por %p166, %p167
      %p170 = scmp.ne.s32.totalorder %s155, %s169
      %p171 = scmp.eq.s32.totalorder %s35, 0
      %p172 = por %p170, %p171
      %s174 = sadd.s32 %s173, 1
      %p177 = scmp.eq.s32.totalorder %s29, 1
      %p178 = scmp.ne.s32.totalorder %s173, %s175
      %p179 = scmp.eq.s32.totalorder %s29, 0
      %p180 = por %p178, %p179
      %p181 = scmp.ne.s32.totalorder %s173, %s175
      %p182 = scmp.eq.s32.totalorder %s34, 1
      %p183 = por %p181, %p182
      %p184 = scmp.ne.s32.totalorder %s175, %s176
      %p185 = scmp.eq.s32.totalorder %s34, 0
      %p186 = por %p184, %p185
      %p187 = scmp.ne.s32.totalorder %s175, %s176
      %p188 = scmp.eq.s32.totalorder %s35, 1
      %p189 = por %p187, %p188
      %p191 = scmp.ne.s32.totalorder %s176, %s190
      %p192 = scmp.eq.s32.totalorder %s35, 0
      %p193 = por %p191, %p192
      %s195 = sadd.s32 %s194, 1
      %p198 = scmp.eq.s32.totalorder %s29, 1
      %p199 = scmp.ne.s32.totalorder %s194, %s196
      %p200 = scmp.eq.s32.totalorder %s29, 0
      %p201 = por %p199, %p200
      %p202 = scmp.ne.s32.totalorder %s194, %s196
      %p203 = scmp.eq.s32.totalorder %s34, 1
      %p204 = por %p202, %p203
      %p205 = scmp.ne.s32.totalorder %s196, %s197
      %p206 = scmp.eq.s32.totalorder %s34, 0
      %p207 = por %p205, %p206
      %p208 = scmp.ne.s32.totalorder %s196, %s197
      %p209 = scmp.eq.s32.totalorder %s35, 1
      %p210 = por %p208, %p209
      %p212 = scmp.ne.s32.totalorder %s197, %s211
      %p213 = scmp.eq.s32.totalorder %s35, 0
      %p214 = por %p212, %p213
      %s216 = sadd.s32 %s215, 1
      %p219 = scmp.eq.s32.totalorder %s29, 1
      %p220 = scmp.ne.s32.totalorder %s215, %s217
      %p221 = scmp.eq.s32.totalorder %s29, 0
      %p222 = por %p220, %p221
      %p223 = scmp.ne.s32.totalorder %s215, %s217
      %p224 = scmp.eq.s32.totalorder %s34, 1
      %p225 = por %p223, %p224
      %p226 = scmp.ne.s32.totalorder %s217, %s218
      %p227 = scmp.eq.s32.totalorder %s34, 0
      %p228 = por %p226, %p227
      %p229 = scmp.ne.s32.totalorder %s217, %s218
      %p230 = scmp.eq.s32.totalorder %s35, 1
      %p231 = por %p229, %p230
      %p233 = scmp.ne.s32.totalorder %s218, %s232
      %p234 = scmp.eq.s32.totalorder %s35, 0
      %p235 = por %p233, %p234
      %s237 = sadd.s32 %s236, 1
      %p240 = scmp.eq.s32.totalorder %s29, 1
      %p241 = scmp.ne.s32.totalorder %s236, %s238
      %p242 = scmp.eq.s32.totalorder %s29, 0
      %p243 = por %p241, %p242
      %p244 = scmp.ne.s32.totalorder %s236, %s238
      %p245 = scmp.eq.s32.totalorder %s34, 1
      %p246 = por %p244, %p245
      %p247 = scmp.ne.s32.totalorder %s238, %s239
      %p248 = scmp.eq.s32.totalorder %s34, 0
      %p249 = por %p247, %p248
      %p250 = scmp.ne.s32.totalorder %s238, %s239
      %p251 = scmp.eq.s32.totalorder %s35, 1
      %p252 = por %p250, %p251
      %p254 = scmp.ne.s32.totalorder %s239, %s253
      %p255 = scmp.eq.s32.totalorder %s35, 0
      %p256 = por %p254, %p255
      %s258 = sadd.s32 %s257, 1
      %p261 = scmp.eq.s32.totalorder %s29, 1
      %p262 = scmp.ne.s32.totalorder %s257, %s259
      %p263 = scmp.eq.s32.totalorder %s29, 0
      %p264 = por %p262, %p263
      %p265 = scmp.ne.s32.totalorder %s257, %s259
      %p266 = scmp.eq.s32.totalorder %s34, 1
      %p267 = por %p265, %p266
      %p268 = scmp.ne.s32.totalorder %s259, %s260
      %p269 = scmp.eq.s32.totalorder %s34, 0
      %p270 = por %p268, %p269
      %p271 = scmp.ne.s32.totalorder %s259, %s260
      %p272 = scmp.eq.s32.totalorder %s35, 1
      %p273 = por %p271, %p272
      %p275 = scmp.ne.s32.totalorder %s260, %s274
      %p276 = scmp.eq.s32.totalorder %s35, 0
      %p277 = por %p275, %p276
      %s279 = sadd.s32 %s278, 1
      %p282 = scmp.eq.s32.totalorder %s29, 1
      %p283 = scmp.ne.s32.totalorder %s278, %s280
      %p284 = scmp.eq.s32.totalorder %s29, 0
      %p285 = por %p283, %p284
      %p286 = scmp.ne.s32.totalorder %s278, %s280
      %p287 = scmp.eq.s32.totalorder %s34, 1
      %p288 = por %p286, %p287
      %p289 = scmp.ne.s32.totalorder %s280, %s281
      %p290 = scmp.eq.s32.totalorder %s34, 0
      %p291 = por %p289, %p290
      %p292 = scmp.ne.s32.totalorder %s280, %s281
      %p293 = scmp.eq.s32.totalorder %s35, 1
      %p294 = por %p292, %p293
      %p296 = scmp.ne.s32.totalorder %s281, %s295
      %p297 = scmp.eq.s32.totalorder %s35, 0
      %p298 = por %p296, %p297
      %s300 = sadd.s32 %s299, 1
      %p303 = scmp.eq.s32.totalorder %s29, 1
      %p304 = scmp.ne.s32.totalorder %s299, %s301
      %p305 = scmp.eq.s32.totalorder %s29, 0
      %p306 = por %p304, %p305
      %p307 = scmp.ne.s32.totalorder %s299, %s301
      %p308 = scmp.eq.s32.totalorder %s34, 1
      %p309 = por %p307, %p308
      %p310 = scmp.ne.s32.totalorder %s301, %s302
      %p311 = scmp.eq.s32.totalorder %s34, 0
      %p312 = por %p310, %p311
      %p313 = scmp.ne.s32.totalorder %s301, %s302
      %p314 = scmp.eq.s32.totalorder %s35, 1
      %p315 = por %p313, %p314
      %p317 = scmp.ne.s32.totalorder %s302, %s316
      %p318 = scmp.eq.s32.totalorder %s35, 0
      %p319 = por %p317, %p318
      %s321 = sadd.s32 %s320, 1
      %p324 = scmp.eq.s32.totalorder %s29, 1
      %p325 = scmp.ne.s32.totalorder %s320, %s322
      %p326 = scmp.eq.s32.totalorder %s29, 0
      %p327 = por %p325, %p326
      %p328 = scmp.ne.s32.totalorder %s320, %s322
      %p329 = scmp.eq.s32.totalorder %s34, 1
      %p330 = por %p328, %p329
      %p331 = scmp.ne.s32.totalorder %s322, %s323
      %p332 = scmp.eq.s32.totalorder %s34, 0
      %p333 = por %p331, %p332
      %p334 = scmp.ne.s32.totalorder %s322, %s323
      %p335 = scmp.eq.s32.totalorder %s35, 1
      %p336 = por %p334, %p335
      %p338 = scmp.ne.s32.totalorder %s323, %s337
      %p339 = scmp.eq.s32.totalorder %s35, 0
      %p340 = por %p338, %p339
      %s342 = sadd.s32 %s341, 1
      %p345 = scmp.eq.s32.totalorder %s29, 1
      %p346 = scmp.ne.s32.totalorder %s341, %s343
      %p347 = scmp.eq.s32.totalorder %s29, 0
      %p348 = por %p346, %p347
      %p349 = scmp.ne.s32.totalorder %s341, %s343
      %p350 = scmp.eq.s32.totalorder %s34, 1
      %p351 = por %p349, %p350
      %p352 = scmp.ne.s32.totalorder %s343, %s344
      %p353 = scmp.eq.s32.totalorder %s34, 0
      %p354 = por %p352, %p353
      %p355 = scmp.ne.s32.totalorder %s343, %s344
      %p356 = scmp.eq.s32.totalorder %s35, 1
      %p357 = por %p355, %p356
      %p359 = scmp.ne.s32.totalorder %s344, %s358
      %p360 = scmp.eq.s32.totalorder %s35, 0
      %p361 = por %p359, %p360
      %s363 = sadd.s32 %s362, 1
      %p366 = scmp.eq.s32.totalorder %s29, 1
      %p367 = scmp.ne.s32.totalorder %s362, %s364
      %p368 = scmp.eq.s32.totalorder %s29, 0
      %p369 = por %p367, %p368
      %p370 = scmp.ne.s32.totalorder %s362, %s364
      %p371 = scmp.eq.s32.totalorder %s34, 1
      %p372 = por %p370, %p371
      %p373 = scmp.ne.s32.totalorder %s364, %s365
      %p374 = scmp.eq.s32.totalorder %s34, 0
      %p375 = por %p373, %p374
      %p376 = scmp.ne.s32.totalorder %s364, %s365
      %p377 = scmp.eq.s32.totalorder %s35, 1
      %p378 = por %p376, %p377
      %p380 = scmp.ne.s32.totalorder %s365, %s379
      %p381 = scmp.eq.s32.totalorder %s35, 0
      %p382 = por %p380, %p381
      %s384 = sadd.s32 %s383, 1
      %p387 = scmp.eq.s32.totalorder %s29, 1
      %p388 = scmp.ne.s32.totalorder %s383, %s385
      %p389 = scmp.eq.s32.totalorder %s29, 0
      %p390 = por %p388, %p389
      %p391 = scmp.ne.s32.totalorder %s383, %s385
      %p392 = scmp.eq.s32.totalorder %s34, 1
      %p393 = por %p391, %p392
      %p394 = scmp.ne.s32.totalorder %s385, %s386
      %p395 = scmp.eq.s32.totalorder %s34, 0
      %p396 = por %p394, %p395
      %p397 = scmp.ne.s32.totalorder %s385, %s386
      %p398 = scmp.eq.s32.totalorder %s35, 1
      %p399 = por %p397, %p398
      %p401 = scmp.ne.s32.totalorder %s386, %s400
      %p402 = scmp.eq.s32.totalorder %s35, 0
      %p403 = por %p401, %p402
      %s405 = sadd.s32 %s404, 1
      %p408 = scmp.eq.s32.totalorder %s29, 1
      %p409 = scmp.ne.s32.totalorder %s404, %s406
      %p410 = scmp.eq.s32.totalorder %s29, 0
      %p411 = por %p409, %p410
      %p412 = scmp.ne.s32.totalorder %s404, %s406
      %p413 = scmp.eq.s32.totalorder %s34, 1
      %p414 = por %p412, %p413
      %p415 = scmp.ne.s32.totalorder %s406, %s407
      %p416 = scmp.eq.s32.totalorder %s34, 0
      %p417 = por %p415, %p416
      %p418 = scmp.ne.s32.totalorder %s406, %s407
      %p419 = scmp.eq.s32.totalorder %s35, 1
      %p420 = por %p418, %p419
      %p422 = scmp.ne.s32.totalorder %s407, %s421
      %p423 = scmp.eq.s32.totalorder %s35, 0
      %p424 = por %p422, %p423
      %s426 = sadd.s32 %s425, 1
      %p429 = scmp.eq.s32.totalorder %s29, 1
      %p430 = scmp.ne.s32.totalorder %s425, %s427
      %p431 = scmp.eq.s32.totalorder %s29, 0
      %p432 = por %p430, %p431
      %p433 = scmp.ne.s32.totalorder %s425, %s427
      %p434 = scmp.eq.s32.totalorder %s34, 1
      %p435 = por %p433, %p434
      %p436 = scmp.ne.s32.totalorder %s427, %s428
      %p437 = scmp.eq.s32.totalorder %s34, 0
      %p438 = por %p436, %p437
      %p439 = scmp.ne.s32.totalorder %s427, %s428
      %p440 = scmp.eq.s32.totalorder %s35, 1
      %p441 = por %p439, %p440
      %p443 = scmp.ne.s32.totalorder %s428, %s442
      %p444 = scmp.eq.s32.totalorder %s35, 0
      %p445 = por %p443, %p444
      %s447 = sadd.s32 %s446, 1
      %p450 = scmp.eq.s32.totalorder %s29, 1
      %p451 = scmp.ne.s32.totalorder %s446, %s448
      %p452 = scmp.eq.s32.totalorder %s29, 0
      %p453 = por %p451, %p452
      %p454 = scmp.ne.s32.totalorder %s446, %s448
      %p455 = scmp.eq.s32.totalorder %s34, 1
      %p456 = por %p454, %p455
      %p457 = scmp.ne.s32.totalorder %s448, %s449
      %p458 = scmp.eq.s32.totalorder %s34, 0
      %p459 = por %p457, %p458
      %p460 = scmp.ne.s32.totalorder %s448, %s449
      %p461 = scmp.eq.s32.totalorder %s35, 1
      %p462 = por %p460, %p461
      %p464 = scmp.ne.s32.totalorder %s449, %s463
      %p465 = scmp.eq.s32.totalorder %s35, 0
      %p466 = por %p464, %p465
      %s467 = ssub.s32 %s29, %s36
      %p468 = scmp.eq.s32.totalorder %s467, 0
      %s470 = sadd.s32 %s469, 1
      %s471 = scalar_select %p468, %s469, %s470
      %p474 = pneg %p468
      %p475 = scmp.eq.s32.totalorder %s29, 1
      %p476 = por %p474, %p475
      %p477 = scmp.ne.s32.totalorder %s469, %s472
      %p478 = scmp.eq.s32.totalorder %s29, 0
      %p479 = por %p477, %p478
      %p480 = scmp.ne.s32.totalorder %s469, %s472
      %p481 = scmp.eq.s32.totalorder %s34, 1
      %p482 = por %p480, %p481
      %p483 = scmp.ne.s32.totalorder %s472, %s473
      %p484 = scmp.eq.s32.totalorder %s34, 0
      %p485 = por %p483, %p484
      %p486 = scmp.ne.s32.totalorder %s472, %s473
      %p487 = scmp.eq.s32.totalorder %s35, 1
      %p488 = por %p486, %p487
      %p490 = scmp.ne.s32.totalorder %s473, %s489
      %p491 = scmp.eq.s32.totalorder %s35, 0
      %p492 = por %p490, %p491
      %p493 = scmp.le.s32.totalorder 1, %s29
      %p494 = scmp.lt.s32.totalorder %s29, 3
      %p495 = pnand %p493, %p494
      %p496 = pneg %p495
      // Predicated region
      $region9: #{bert_for_class_forward.1} parent=5 // pred_check
        _
      $region10: #{bert_for_class_forward.1} parent=5 // pred_check_branch
        %498 = sbr.rel (%p495) target = $region12
      $region11: #{bert_for_class_forward.1} parent=5 // pred_region
        %s499 = ssub.s32 %s29, 1
        // Predicated region
        $region13: #{bert_for_class_forward.1} parent=11 // pred_check
          %p500 = pneg %p102
        $region14: #{bert_for_class_forward.1} parent=11 // pred_check_branch
          %502 = sbr.rel (%p500) target = $region16
        $region15: #{bert_for_class_forward.1} parent=11 // pred_region
          _
        $region16: #{bert_for_class_forward.1} parent=11 // pred_fallthru
          _
        // Predicated region
        $region17: #{bert_for_class_forward.1} parent=11 // pred_check
          %p503 = pneg %p123
        $region18: #{bert_for_class_forward.1} parent=11 // pred_check_branch
          %505 = sbr.rel (%p503) target = $region20
        $region19: #{bert_for_class_forward.1} parent=11 // pred_region
          _
        $region20: #{bert_for_class_forward.1} parent=11 // pred_fallthru
          _
        // Predicated region
        $region21: #{bert_for_class_forward.1} parent=11 // pred_check
          %p506 = pneg %p144
        $region22: #{bert_for_class_forward.1} parent=11 // pred_check_branch
          %508 = sbr.rel (%p506) target = $region24
        $region23: #{bert_for_class_forward.1} parent=11 // pred_region
          _
        $region24: #{bert_for_class_forward.1} parent=11 // pred_fallthru
          _
        // Predicated region
        $region25: #{bert_for_class_forward.1} parent=11 // pred_check
          %p509 = pneg %p165
        $region26: #{bert_for_class_forward.1} parent=11 // pred_check_branch
          %511 = sbr.rel (%p509) target = $region28
        $region27: #{bert_for_class_forward.1} parent=11 // pred_region
          _
        $region28: #{bert_for_class_forward.1} parent=11 // pred_fallthru
          _
        // Predicated region
        $region29: #{bert_for_class_forward.1} parent=11 // pred_check
          %p512 = pneg %p186
        $region30: #{bert_for_class_forward.1} parent=11 // pred_check_branch
          %514 = sbr.rel (%p512) target = $region32
        $region31: #{bert_for_class_forward.1} parent=11 // pred_region
          _
        $region32: #{bert_for_class_forward.1} parent=11 // pred_fallthru
          _
        // Predicated region
        $region33: #{bert_for_class_forward.1} parent=11 // pred_check
          %p515 = pneg %p207
        $region34: #{bert_for_class_forward.1} parent=11 // pred_check_branch
          %517 = sbr.rel (%p515) target = $region36
        $region35: #{bert_for_class_forward.1} parent=11 // pred_region
          _
        $region36: #{bert_for_class_forward.1} parent=11 // pred_fallthru
          _
        // Predicated region
        $region37: #{bert_for_class_forward.1} parent=11 // pred_check
          %p518 = pneg %p228
        $region38: #{bert_for_class_forward.1} parent=11 // pred_check_branch
          %520 = sbr.rel (%p518) target = $region40
        $region39: #{bert_for_class_forward.1} parent=11 // pred_region
          _
        $region40: #{bert_for_class_forward.1} parent=11 // pred_fallthru
          _
        // Predicated region
        $region41: #{bert_for_class_forward.1} parent=11 // pred_check
          %p521 = pneg %p249
        $region42: #{bert_for_class_forward.1} parent=11 // pred_check_branch
          %523 = sbr.rel (%p521) target = $region44
        $region43: #{bert_for_class_forward.1} parent=11 // pred_region
          _
        $region44: #{bert_for_class_forward.1} parent=11 // pred_fallthru
          _
        // Predicated region
        $region45: #{bert_for_class_forward.1} parent=11 // pred_check
          %p524 = pneg %p270
        $region46: #{bert_for_class_forward.1} parent=11 // pred_check_branch
          %526 = sbr.rel (%p524) target = $region48
        $region47: #{bert_for_class_forward.1} parent=11 // pred_region
          _
        $region48: #{bert_for_class_forward.1} parent=11 // pred_fallthru
          _
        // Predicated region
        $region49: #{bert_for_class_forward.1} parent=11 // pred_check
          %p527 = pneg %p291
        $region50: #{bert_for_class_forward.1} parent=11 // pred_check_branch
          %529 = sbr.rel (%p527) target = $region52
        $region51: #{bert_for_class_forward.1} parent=11 // pred_region
          _
        $region52: #{bert_for_class_forward.1} parent=11 // pred_fallthru
          _
        // Predicated region
        $region53: #{bert_for_class_forward.1} parent=11 // pred_check
          %p530 = pneg %p312
        $region54: #{bert_for_class_forward.1} parent=11 // pred_check_branch
          %532 = sbr.rel (%p530) target = $region56
        $region55: #{bert_for_class_forward.1} parent=11 // pred_region
          _
        $region56: #{bert_for_class_forward.1} parent=11 // pred_fallthru
          _
        // Predicated region
        $region57: #{bert_for_class_forward.1} parent=11 // pred_check
          %p533 = pneg %p333
        $region58: #{bert_for_class_forward.1} parent=11 // pred_check_branch
          %535 = sbr.rel (%p533) target = $region60
        $region59: #{bert_for_class_forward.1} parent=11 // pred_region
          _
        $region60: #{bert_for_class_forward.1} parent=11 // pred_fallthru
          _
        // Predicated region
        $region61: #{bert_for_class_forward.1} parent=11 // pred_check
          %p536 = pneg %p354
        $region62: #{bert_for_class_forward.1} parent=11 // pred_check_branch
          %538 = sbr.rel (%p536) target = $region64
        $region63: #{bert_for_class_forward.1} parent=11 // pred_region
          _
        $region64: #{bert_for_class_forward.1} parent=11 // pred_fallthru
          _
        // Predicated region
        $region65: #{bert_for_class_forward.1} parent=11 // pred_check
          %p539 = pneg %p375
        $region66: #{bert_for_class_forward.1} parent=11 // pred_check_branch
          %541 = sbr.rel (%p539) target = $region68
        $region67: #{bert_for_class_forward.1} parent=11 // pred_region
          _
        $region68: #{bert_for_class_forward.1} parent=11 // pred_fallthru
          _
        // Predicated region
        $region69: #{bert_for_class_forward.1} parent=11 // pred_check
          %p542 = pneg %p396
        $region70: #{bert_for_class_forward.1} parent=11 // pred_check_branch
          %544 = sbr.rel (%p542) target = $region72
        $region71: #{bert_for_class_forward.1} parent=11 // pred_region
          _
        $region72: #{bert_for_class_forward.1} parent=11 // pred_fallthru
          _
        // Predicated region
        $region73: #{bert_for_class_forward.1} parent=11 // pred_check
          %p545 = pneg %p417
        $region74: #{bert_for_class_forward.1} parent=11 // pred_check_branch
          %547 = sbr.rel (%p545) target = $region76
        $region75: #{bert_for_class_forward.1} parent=11 // pred_region
          _
        $region76: #{bert_for_class_forward.1} parent=11 // pred_fallthru
          _
        // Predicated region
        $region77: #{bert_for_class_forward.1} parent=11 // pred_check
          %p548 = pneg %p438
        $region78: #{bert_for_class_forward.1} parent=11 // pred_check_branch
          %550 = sbr.rel (%p548) target = $region80
        $region79: #{bert_for_class_forward.1} parent=11 // pred_region
          _
        $region80: #{bert_for_class_forward.1} parent=11 // pred_fallthru
          _
        // Predicated region
        $region81: #{bert_for_class_forward.1} parent=11 // pred_check
          %p551 = pneg %p459
        $region82: #{bert_for_class_forward.1} parent=11 // pred_check_branch
          %553 = sbr.rel (%p551) target = $region84
        $region83: #{bert_for_class_forward.1} parent=11 // pred_region
          _
        $region84: #{bert_for_class_forward.1} parent=11 // pred_fallthru
          _
      $region12: #{bert_for_class_forward.1} parent=5 // pred_fallthru
        _
      %p554 = scmp.lt.s32.totalorder %s29, 2
      // Predicated region
      $region85: #{bert_for_class_forward.1} parent=5 // pred_check
        %p555 = pneg %p554
      $region86: #{bert_for_class_forward.1} parent=5 // pred_check_branch
        %557 = sbr.rel (%p555) target = $region88
      $region87: #{bert_for_class_forward.1} parent=5 // pred_region
        // Predicated region
        $region89: #{bert_for_class_forward.1} parent=87 // pred_check
          %p558 = pneg %p49
        $region90: #{bert_for_class_forward.1} parent=87 // pred_check_branch
          %560 = sbr.rel (%p558) target = $region92
        $region91: #{bert_for_class_forward.1} parent=87 // pred_region
          %p561 = scmp.lt.s32.totalorder %s29, 1
          %s562 = scalar_select %p561, %s29, 1
          %s563 = smul.addr %s562, 8
          %s564 = scalar_lea.vmem %s0, %s563
        $region92: #{bert_for_class_forward.1} parent=87 // pred_fallthru
          _
        // Predicated region
        $region93: #{bert_for_class_forward.1} parent=87 // pred_check
          %p565 = pneg %p75
        $region94: #{bert_for_class_forward.1} parent=87 // pred_check_branch
          %567 = sbr.rel (%p565) target = $region96
        $region95: #{bert_for_class_forward.1} parent=87 // pred_region
          %p568 = scmp.lt.s32.totalorder %s29, 1
          %s569 = scalar_select %p568, %s29, 1
          %s570 = scalar_lea.vmem %s1, %s569
        $region96: #{bert_for_class_forward.1} parent=87 // pred_fallthru
          _
      $region88: #{bert_for_class_forward.1} parent=5 // pred_fallthru
        _
      %p571 = scmp.le.s32.totalorder 1, %s29
      %p572 = scmp.lt.s32.totalorder %s29, 3
      %p573 = pnand %p571, %p572
      %p574 = pneg %p573
      // Predicated region
      $region97: #{bert_for_class_forward.1} parent=5 // pred_check
        _
      $region98: #{bert_for_class_forward.1} parent=5 // pred_check_branch
        %576 = sbr.rel (%p573) target = $region100
      $region99: #{bert_for_class_forward.1} parent=5 // pred_region
        %s577 = ssub.s32 %s29, 1
        %p578 = scmp.lt.s32.totalorder %s34, 1
        %s579 = scalar_select %p578, %s34, 1
        %s580 = smul.addr %s579, 8
        %s581 = scalar_lea.vmem %s0, %s580
        %p582 = pneg %p55
        %p583 = pneg %p52
        %p584 = scmp.lt.s32.totalorder %s34, 1
        %s585 = scalar_select %p584, %s34, 1
        %s586 = scalar_lea.vmem %s1, %s585
        %p587 = pneg %p81
        %p588 = pneg %p78
        %p589 = pneg %p102
        %p590 = pneg %p99
        %p591 = pneg %p123
        %p592 = pneg %p120
        %p593 = pneg %p144
        %p594 = pneg %p141
        %p595 = pneg %p165
        %p596 = pneg %p162
        %p597 = pneg %p186
        %p598 = pneg %p183
        %p599 = pneg %p207
        %p600 = pneg %p204
        %p601 = pneg %p228
        %p602 = pneg %p225
        %p603 = pneg %p249
        %p604 = pneg %p246
        %p605 = pneg %p270
        %p606 = pneg %p267
        %p607 = pneg %p291
        %p608 = pneg %p288
        %p609 = pneg %p312
        %p610 = pneg %p309
        %p611 = pneg %p333
        %p612 = pneg %p330
        %p613 = pneg %p354
        %p614 = pneg %p351
        %p615 = pneg %p375
        %p616 = pneg %p372
        %p617 = pneg %p396
        %p618 = pneg %p393
        %p619 = pneg %p417
        %p620 = pneg %p414
        %p621 = pneg %p438
        %p622 = pneg %p435
        %p623 = pneg %p459
        %p624 = pneg %p456
        %p625 = pneg %p485
        %p626 = pneg %p482
        %s627 = sand.u32 %s472, 1
        %s628 = scalar_lea.sflag [#allocation3], %s627
        %s629 = sand.u32 %s472, 1
        %s630 = scalar_lea.vmem [#allocation2], %s629
        %p631 = scmp.lt.s32.totalorder %s34, 1
        %s632 = scalar_select %p631, %s34, 1
        %s633 = smul.addr %s632, 8
        %s634 = scalar_lea.vmem %s0, %s633
        %p635 = scmp.lt.s32.totalorder %s34, 1
        %s636 = scalar_select %p635, %s34, 1
        %s637 = scalar_lea.vmem %s1, %s636
        %v638 = vld [vmem:[%s634] sm:$0xff]
        %v639 = vld [vmem:[%s2] sm:$0x1]
        %v640 = vld [vmem:[%s3] sm:$0x1]
        %vm641 = vcmask 261120
        %v642 = vsel %vm641, %v638, 0.0
        %643 = vadd.xlane.f32.xlu0 %v642
        %v644 = vpop.xlane.xlu0 %643
        %v645 = vrcp.pop 32.0
        %v646 = vmul.f32 %v644, %v645
        %v647 = vsub.f32 %v638, %v646
        %v648 = vmul.f32 %v647, %v647
        %v649 = vsel %vm641, %v648, 0.0
        %650 = vadd.xlane.f32.xlu0 %v649
        %v651 = vpop.xlane.xlu0 %650
        %v652 = vmul.f32 %v651, %v645
        %v653 = vadd.f32 %v652, 1e-12
        %v654 = vrsqrt.pop %v653
        %v655 = vmul.f32 %v647, %v654
        %v657 = vlaneseq
        %v658 = vshrl.u32 %v657, 7
        %v659 = vsub.s32 0, %v658
        %v660 = vrot.slane %v639, %v659
        %v662 = vmul.f32 %v655, %v660
        %v664 = vlaneseq
        %v665 = vshrl.u32 %v664, 7
        %v666 = vsub.s32 0, %v665
        %v667 = vrot.slane %v640, %v666
        %v669 = vadd.f32 %v662, %v667
        %v670 = vld [vmem:[%s637] sm:$0x1]
        %v671 = vld [vmem:[%s4] sm:$0xff]
        %v672 = vld [vmem:[%s4 + $0x8] sm:$0xff]
        %v673 = vld [vmem:[%s4 + $0x10] sm:$0xff]
        %v674 = vld [vmem:[%s4 + $0x18] sm:$0xff]
        %v675 = vld [vmem:[%s5] sm:$0x1]
        %v677 = vlaneseq
        %v678 = vshrl.u32 %v677, 7
        %v679 = vsub.s32 0, %v678
        %v680 = vrot.slane %v675, %v679
        %v683 = vsel %vm641, %v669, 0
        %685 = vmatprep.subr.mxu0 0.0
        %686 = vmatpush1.msra.mxu0 %v671
        %687 = vmatprep.subr.mxu0 0.0
        %688 = vmatpush1.msra.mxu0 %v672
        %689 = vmatprep.subr.mxu0 0.0
        %690 = vmatpush1.msra.mxu0 %v673
        %691 = vmatprep.subr.mxu0 0.0
        %692 = vmatpush1.msra.mxu0 %v674
        %693 = vmatprep.subr.mxu0 0.0
        %694 = vmatpush1.msra.mxu0 0.0
        %695 = vmatprep.subr.mxu0 0.0
        %696 = vmatpush1.msra.mxu0 0.0
        %697 = vmatprep.subr.mxu0 0.0
        %698 = vmatpush1.msra.mxu0 0.0
        %699 = vmatprep.subr.mxu0 0.0
        %700 = vmatpush1.msra.mxu0 0.0
        %701 = vmatprep.subr.mxu0 0.0
        %702 = vmatpush1.msra.mxu0 0.0
        %703 = vmatprep.subr.mxu0 0.0
        %704 = vmatpush1.msra.mxu0 0.0
        %705 = vmatprep.subr.mxu0 0.0
        %706 = vmatpush1.msra.mxu0 0.0
        %707 = vmatprep.subr.mxu0 0.0
        %708 = vmatpush1.msra.mxu0 0.0
        %709 = vmatprep.subr.mxu0 0.0
        %710 = vmatpush1.msra.mxu0 0.0
        %711 = vmatprep.subr.mxu0 0.0
        %712 = vmatpush1.msra.mxu0 0.0
        %713 = vmatprep.subr.mxu0 0.0
        %714 = vmatpush1.msra.mxu0 0.0
        %715 = vmatprep.subr.mxu0 0.0
        %716 = vmatpush1.msra.mxu0 0.0
        %717 = vmatprep.subr.mxu0 0.0
        %718 = vmatpush1.msra.mxu0 0.0
        %719 = vmatprep.subr.mxu0 0.0
        %720 = vmatpush1.msra.mxu0 0.0
        %721 = vmatprep.subr.mxu0 0.0
        %722 = vmatpush1.msra.mxu0 0.0
        %723 = vmatprep.subr.mxu0 0.0
        %724 = vmatpush1.msra.mxu0 0.0
        %725 = vmatprep.subr.mxu0 0.0
        %726 = vmatpush1.msra.mxu0 0.0
        %727 = vmatprep.subr.mxu0 0.0
        %728 = vmatpush1.msra.mxu0 0.0
        %729 = vmatprep.subr.mxu0 0.0
        %730 = vmatpush1.msra.mxu0 0.0
        %731 = vmatprep.subr.mxu0 0.0
        %732 = vmatpush1.msra.mxu0 0.0
        %733 = vmatprep.subr.mxu0 0.0
        %734 = vmatpush1.msra.mxu0 0.0
        %735 = vmatprep.subr.mxu0 0.0
        %736 = vmatpush1.msra.mxu0 0.0
        %737 = vmatprep.subr.mxu0 0.0
        %738 = vmatpush1.msra.mxu0 0.0
        %739 = vmatprep.subr.mxu0 0.0
        %740 = vmatpush1.msra.mxu0 0.0
        %741 = vmatprep.subr.mxu0 0.0
        %742 = vmatpush1.msra.mxu0 0.0
        %743 = vmatprep.subr.mxu0 0.0
        %744 = vmatpush1.msra.mxu0 0.0
        %745 = vmatprep.subr.mxu0 0.0
        %746 = vmatpush1.msra.mxu0 0.0
        %747 = vmatprep.subr.mxu0 0.0
        %748 = vmatpush1.msra.mxu0 0.0
        %749 = vmatprep.mubr.f32.mxu0 0.0
        %750 = vmatmul.mubr.f32.gmra.mrb[0].mxu0 %v683
        %v751 = vpop.f32.mrb[0].mxu0
        %v752 = vadd.f32 %v680, %v751
        %v753 = vpop.f32.mrb[0].mxu0
        %754 = vdwg.mxu0
        %v755 = vld [vmem:[%s6] sm:$0xff]
        %v756 = vld [vmem:[%s6 + $0x8] sm:$0xff]
        %v757 = vld [vmem:[%s6 + $0x10] sm:$0xff]
        %v758 = vld [vmem:[%s6 + $0x18] sm:$0xff]
        %760 = vrot.lane.b32.xlu0 %v752, 96
        %v761 = vpop.permute.xlu0 %760
        %vm762 = vcmask 64512
        %v763 = vsel %vm762, %v752, 0
        %v765 = vsel %vm762, %v761, 0
        %767 = vmatprep.subr.mxu0 0.0
        %768 = vmatpush1.xpose.msra.mxu0 %v765
        %769 = vmatprep.subr.mxu0 0.0
        %770 = vmatpush1.xpose.msra.mxu0 0.0
        %771 = vmatprep.subr.mxu0 0.0
        %772 = vmatpush1.xpose.msra.mxu0 0.0
        %773 = vmatprep.subr.mxu0 0.0
        %774 = vmatpush1.xpose.msra.mxu0 0.0
        %775 = vmatprep.subr.mxu0 0.0
        %776 = vmatpush1.xpose.msra.mxu0 0.0
        %777 = vmatprep.subr.mxu0 0.0
        %778 = vmatpush1.xpose.msra.mxu0 0.0
        %779 = vmatprep.subr.mxu0 0.0
        %780 = vmatpush1.xpose.msra.mxu0 0.0
        %781 = vmatprep.subr.mxu0 0.0
        %782 = vmatpush1.xpose.msra.mxu0 0.0
        %783 = vmatprep.subr.mxu0 0.0
        %784 = vmatpush1.xpose.msra.mxu0 0.0
        %785 = vmatprep.subr.mxu0 0.0
        %786 = vmatpush1.xpose.msra.mxu0 0.0
        %787 = vmatprep.subr.mxu0 0.0
        %788 = vmatpush1.xpose.msra.mxu0 0.0
        %789 = vmatprep.subr.mxu0 0.0
        %790 = vmatpush1.xpose.msra.mxu0 0.0
        %791 = vmatprep.subr.mxu0 0.0
        %792 = vmatpush1.xpose.msra.mxu0 0.0
        %793 = vmatprep.subr.mxu0 0.0
        %794 = vmatpush1.xpose.msra.mxu0 0.0
        %795 = vmatprep.subr.mxu0 0.0
        %796 = vmatpush1.xpose.msra.mxu0 0.0
        %797 = vmatprep.subr.mxu0 0.0
        %798 = vmatpush1.xpose.msra.mxu0 0.0
        %799 = vmatprep.subr.mxu0 0.0
        %800 = vmatpush1.xpose.msra.mxu0 0.0
        %801 = vmatprep.subr.mxu0 0.0
        %802 = vmatpush1.xpose.msra.mxu0 0.0
        %803 = vmatprep.subr.mxu0 0.0
        %804 = vmatpush1.xpose.msra.mxu0 0.0
        %805 = vmatprep.subr.mxu0 0.0
        %806 = vmatpush1.xpose.msra.mxu0 0.0
        %807 = vmatprep.subr.mxu0 0.0
        %808 = vmatpush1.xpose.msra.mxu0 0.0
        %809 = vmatprep.subr.mxu0 0.0
        %810 = vmatpush1.xpose.msra.mxu0 0.0
        %811 = vmatprep.subr.mxu0 0.0
        %812 = vmatpush1.xpose.msra.mxu0 0.0
        %813 = vmatprep.subr.mxu0 0.0
        %814 = vmatpush1.xpose.msra.mxu0 0.0
        %815 = vmatprep.subr.mxu0 0.0
        %816 = vmatpush1.xpose.msra.mxu0 0.0
        %817 = vmatprep.subr.mxu0 0.0
        %818 = vmatpush1.xpose.msra.mxu0 0.0
        %819 = vmatprep.subr.mxu0 0.0
        %820 = vmatpush1.xpose.msra.mxu0 0.0
        %821 = vmatprep.subr.mxu0 0.0
        %822 = vmatpush1.xpose.msra.mxu0 0.0
        %823 = vmatprep.subr.mxu0 0.0
        %824 = vmatpush1.xpose.msra.mxu0 0.0
        %825 = vmatprep.subr.mxu0 0.0
        %826 = vmatpush1.xpose.msra.mxu0 0.0
        %827 = vmatprep.subr.mxu0 0.0
        %828 = vmatpush1.xpose.msra.mxu0 0.0
        %829 = vmatprep.subr.mxu0 0.0
        %830 = vmatpush1.xpose.msra.mxu0 0.0
        %831 = vmatprep.mubr.f32.mxu0 0.0
        %832 = vmatmul.mubr.f32.gmra.mrb[0].mxu0 %v763
        %v833 = vpop.f32.mrb[0].mxu0
        %v834 = vadd.f32 0.0, %v833
        %v835 = vpop.f32.mrb[0].mxu0
        %836 = vdwg.mxu0
        %v837 = vmul.f32 %v834, 0.35355338
        %v839 = vlaneseq
        %v840 = vshrl.u32 %v839, 7
        %v841 = vsub.s32 0, %v840
        %v842 = vrot.slane %v670, %v841
        %v844 = vadd.f32 %v837, %v842
        %v845 = vsel %vm762, %v844, -inf
        %846 = vmax.xlane.f32.xlu0 %v845
        %v847 = vpop.xlane.xlu0 %846
        %v848 = vsub.f32 %v844, %v847
        %v849 = vmul.f32 %v848, 1.442695
        %v850 = vpow.pop %v849
        %v851 = vsel %vm762, %v850, 0.0
        %852 = vadd.xlane.f32.xlu0 %v851
        %v853 = vpop.xlane.xlu0 %852
        %v854 = vrcp.pop %v853
        %v855 = vmul.f32 %v850, %v854
        %856 = vrot.lane.b32.xlu0 %v752, 64
        %v857 = vpop.permute.xlu0 %856
        %v860 = vsel %vm762, %v855, 0
        %862 = vmatprep.subr.mxu0 0.0
        %863 = vmatpush1.msra.mxu0 %v857
        %864 = vmatprep.subr.mxu0 0.0
        %865 = vmatpush1.msra.mxu0 0.0
        %866 = vmatprep.subr.mxu0 0.0
        %867 = vmatpush1.msra.mxu0 0.0
        %868 = vmatprep.subr.mxu0 0.0
        %869 = vmatpush1.msra.mxu0 0.0
        %870 = vmatprep.subr.mxu0 0.0
        %871 = vmatpush1.msra.mxu0 0.0
        %872 = vmatprep.subr.mxu0 0.0
        %873 = vmatpush1.msra.mxu0 0.0
        %874 = vmatprep.subr.mxu0 0.0
        %875 = vmatpush1.msra.mxu0 0.0
        %876 = vmatprep.subr.mxu0 0.0
        %877 = vmatpush1.msra.mxu0 0.0
        %878 = vmatprep.subr.mxu0 0.0
        %879 = vmatpush1.msra.mxu0 0.0
        %880 = vmatprep.subr.mxu0 0.0
        %881 = vmatpush1.msra.mxu0 0.0
        %882 = vmatprep.subr.mxu0 0.0
        %883 = vmatpush1.msra.mxu0 0.0
        %884 = vmatprep.subr.mxu0 0.0
        %885 = vmatpush1.msra.mxu0 0.0
        %886 = vmatprep.subr.mxu0 0.0
        %887 = vmatpush1.msra.mxu0 0.0
        %888 = vmatprep.subr.mxu0 0.0
        %889 = vmatpush1.msra.mxu0 0.0
        %890 = vmatprep.subr.mxu0 0.0
        %891 = vmatpush1.msra.mxu0 0.0
        %892 = vmatprep.subr.mxu0 0.0
        %893 = vmatpush1.msra.mxu0 0.0
        %894 = vmatprep.subr.mxu0 0.0
        %895 = vmatpush1.msra.mxu0 0.0
        %896 = vmatprep.subr.mxu0 0.0
        %897 = vmatpush1.msra.mxu0 0.0
        %898 = vmatprep.subr.mxu0 0.0
        %899 = vmatpush1.msra.mxu0 0.0
        %900 = vmatprep.subr.mxu0 0.0
        %901 = vmatpush1.msra.mxu0 0.0
        %902 = vmatprep.subr.mxu0 0.0
        %903 = vmatpush1.msra.mxu0 0.0
        %904 = vmatprep.subr.mxu0 0.0
        %905 = vmatpush1.msra.mxu0 0.0
        %906 = vmatprep.subr.mxu0 0.0
        %907 = vmatpush1.msra.mxu0 0.0
        %908 = vmatprep.subr.mxu0 0.0
        %909 = vmatpush1.msra.mxu0 0.0
        %910 = vmatprep.subr.mxu0 0.0
        %911 = vmatpush1.msra.mxu0 0.0
        %912 = vmatprep.subr.mxu0 0.0
        %913 = vmatpush1.msra.mxu0 0.0
        %914 = vmatprep.subr.mxu0 0.0
        %915 = vmatpush1.msra.mxu0 0.0
        %916 = vmatprep.subr.mxu0 0.0
        %917 = vmatpush1.msra.mxu0 0.0
        %918 = vmatprep.subr.mxu0 0.0
        %919 = vmatpush1.msra.mxu0 0.0
        %920 = vmatprep.subr.mxu0 0.0
        %921 = vmatpush1.msra.mxu0 0.0
        %922 = vmatprep.subr.mxu0 0.0
        %923 = vmatpush1.msra.mxu0 0.0
        %924 = vmatprep.subr.mxu0 0.0
        %925 = vmatpush1.msra.mxu0 0.0
        %926 = vmatprep.mubr.f32.mxu0 0.0
        %927 = vmatmul.mubr.f32.gmra.mrb[0].mxu0 %v860
        %v928 = vpop.f32.mrb[0].mxu0
        %v929 = vadd.f32 0.0, %v928
        %v930 = vpop.f32.mrb[0].mxu0
        %931 = vdwg.mxu0
        %932 = vrot.lane.b32.xlu0 %v752, 120
        %v933 = vpop.permute.xlu0 %932
        %934 = vrot.lane.b32.xlu0 %v752, 88
        %v935 = vpop.permute.xlu0 %934
        %v936 = vsel %vm762, %v933, 0
        %v938 = vsel %vm762, %v935, 0
        %940 = vmatprep.subr.mxu0 0.0
        %941 = vmatpush1.xpose.msra.mxu0 %v938
        %942 = vmatprep.subr.mxu0 0.0
        %943 = vmatpush1.xpose.msra.mxu0 0.0
        %944 = vmatprep.subr.mxu0 0.0
        %945 = vmatpush1.xpose.msra.mxu0 0.0
        %946 = vmatprep.subr.mxu0 0.0
        %947 = vmatpush1.xpose.msra.mxu0 0.0
        %948 = vmatprep.subr.mxu0 0.0
        %949 = vmatpush1.xpose.msra.mxu0 0.0
        %950 = vmatprep.subr.mxu0 0.0
        %951 = vmatpush1.xpose.msra.mxu0 0.0
        %952 = vmatprep.subr.mxu0 0.0
        %953 = vmatpush1.xpose.msra.mxu0 0.0
        %954 = vmatprep.subr.mxu0 0.0
        %955 = vmatpush1.xpose.msra.mxu0 0.0
        %956 = vmatprep.subr.mxu0 0.0
        %957 = vmatpush1.xpose.msra.mxu0 0.0
        %958 = vmatprep.subr.mxu0 0.0
        %959 = vmatpush1.xpose.msra.mxu0 0.0
        %960 = vmatprep.subr.mxu0 0.0
        %961 = vmatpush1.xpose.msra.mxu0 0.0
        %962 = vmatprep.subr.mxu0 0.0
        %963 = vmatpush1.xpose.msra.mxu0 0.0
        %964 = vmatprep.subr.mxu0 0.0
        %965 = vmatpush1.xpose.msra.mxu0 0.0
        %966 = vmatprep.subr.mxu0 0.0
        %967 = vmatpush1.xpose.msra.mxu0 0.0
        %968 = vmatprep.subr.mxu0 0.0
        %969 = vmatpush1.xpose.msra.mxu0 0.0
        %970 = vmatprep.subr.mxu0 0.0
        %971 = vmatpush1.xpose.msra.mxu0 0.0
        %972 = vmatprep.subr.mxu0 0.0
        %973 = vmatpush1.xpose.msra.mxu0 0.0
        %974 = vmatprep.subr.mxu0 0.0
        %975 = vmatpush1.xpose.msra.mxu0 0.0
        %976 = vmatprep.subr.mxu0 0.0
        %977 = vmatpush1.xpose.msra.mxu0 0.0
        %978 = vmatprep.subr.mxu0 0.0
        %979 = vmatpush1.xpose.msra.mxu0 0.0
        %980 = vmatprep.subr.mxu0 0.0
        %981 = vmatpush1.xpose.msra.mxu0 0.0
        %982 = vmatprep.subr.mxu0 0.0
        %983 = vmatpush1.xpose.msra.mxu0 0.0
        %984 = vmatprep.subr.mxu0 0.0
        %985 = vmatpush1.xpose.msra.mxu0 0.0
        %986 = vmatprep.subr.mxu0 0.0
        %987 = vmatpush1.xpose.msra.mxu0 0.0
        %988 = vmatprep.subr.mxu0 0.0
        %989 = vmatpush1.xpose.msra.mxu0 0.0
        %990 = vmatprep.subr.mxu0 0.0
        %991 = vmatpush1.xpose.msra.mxu0 0.0
        %992 = vmatprep.subr.mxu0 0.0
        %993 = vmatpush1.xpose.msra.mxu0 0.0
        %994 = vmatprep.subr.mxu0 0.0
        %995 = vmatpush1.xpose.msra.mxu0 0.0
        %996 = vmatprep.subr.mxu0 0.0
        %997 = vmatpush1.xpose.msra.mxu0 0.0
        %998 = vmatprep.subr.mxu0 0.0
        %999 = vmatpush1.xpose.msra.mxu0 0.0
        %1000 = vmatprep.subr.mxu0 0.0
        %1001 = vmatpush1.xpose.msra.mxu0 0.0
        %1002 = vmatprep.subr.mxu0 0.0
        %1003 = vmatpush1.xpose.msra.mxu0 0.0
        %1004 = vmatprep.mubr.f32.mxu0 0.0
        %1005 = vmatmul.mubr.f32.gmra.mrb[0].mxu0 %v936
        %v1006 = vpop.f32.mrb[0].mxu0
        %v1007 = vadd.f32 0.0, %v1006
        %v1008 = vpop.f32.mrb[0].mxu0
        %1009 = vdwg.mxu0
        %v1010 = vmul.f32 %v1007, 0.35355338
        %v1011 = vadd.f32 %v1010, %v842
        %v1012 = vsel %vm762, %v1011, -inf
        %1013 = vmax.xlane.f32.xlu0 %v1012
        %v1014 = vpop.xlane.xlu0 %1013
        %v1015 = vsub.f32 %v1011, %v1014
        %v1016 = vmul.f32 %v1015, 1.442695
        %v1017 = vpow.pop %v1016
        %v1018 = vsel %vm762, %v1017, 0.0
        %1019 = vadd.xlane.f32.xlu0 %v1018
        %v1020 = vpop.xlane.xlu0 %1019
        %v1021 = vrcp.pop %v1020
        %v1022 = vmul.f32 %v1017, %v1021
        %1023 = vrot.lane.b32.xlu0 %v752, 56
        %v1024 = vpop.permute.xlu0 %1023
        %v1027 = vsel %vm762, %v1022, 0
        %1029 = vmatprep.subr.mxu0 0.0
        %1030 = vmatpush1.msra.mxu0 %v1024
        %1031 = vmatprep.subr.mxu0 0.0
        %1032 = vmatpush1.msra.mxu0 0.0
        %1033 = vmatprep.subr.mxu0 0.0
        %1034 = vmatpush1.msra.mxu0 0.0
        %1035 = vmatprep.subr.mxu0 0.0
        %1036 = vmatpush1.msra.mxu0 0.0
        %1037 = vmatprep.subr.mxu0 0.0
        %1038 = vmatpush1.msra.mxu0 0.0
        %1039 = vmatprep.subr.mxu0 0.0
        %1040 = vmatpush1.msra.mxu0 0.0
        %1041 = vmatprep.subr.mxu0 0.0
        %1042 = vmatpush1.msra.mxu0 0.0
        %1043 = vmatprep.subr.mxu0 0.0
        %1044 = vmatpush1.msra.mxu0 0.0
        %1045 = vmatprep.subr.mxu0 0.0
        %1046 = vmatpush1.msra.mxu0 0.0
        %1047 = vmatprep.subr.mxu0 0.0
        %1048 = vmatpush1.msra.mxu0 0.0
        %1049 = vmatprep.subr.mxu0 0.0
        %1050 = vmatpush1.msra.mxu0 0.0
        %1051 = vmatprep.subr.mxu0 0.0
        %1052 = vmatpush1.msra.mxu0 0.0
        %1053 = vmatprep.subr.mxu0 0.0
        %1054 = vmatpush1.msra.mxu0 0.0
        %1055 = vmatprep.subr.mxu0 0.0
        %1056 = vmatpush1.msra.mxu0 0.0
        %1057 = vmatprep.subr.mxu0 0.0
        %1058 = vmatpush1.msra.mxu0 0.0
        %1059 = vmatprep.subr.mxu0 0.0
        %1060 = vmatpush1.msra.mxu0 0.0
        %1061 = vmatprep.subr.mxu0 0.0
        %1062 = vmatpush1.msra.mxu0 0.0
        %1063 = vmatprep.subr.mxu0 0.0
        %1064 = vmatpush1.msra.mxu0 0.0
        %1065 = vmatprep.subr.mxu0 0.0
        %1066 = vmatpush1.msra.mxu0 0.0
        %1067 = vmatprep.subr.mxu0 0.0
        %1068 = vmatpush1.msra.mxu0 0.0
        %1069 = vmatprep.subr.mxu0 0.0
        %1070 = vmatpush1.msra.mxu0 0.0
        %1071 = vmatprep.subr.mxu0 0.0
        %1072 = vmatpush1.msra.mxu0 0.0
        %1073 = vmatprep.subr.mxu0 0.0
        %1074 = vmatpush1.msra.mxu0 0.0
        %1075 = vmatprep.subr.mxu0 0.0
        %1076 = vmatpush1.msra.mxu0 0.0
        %1077 = vmatprep.subr.mxu0 0.0
        %1078 = vmatpush1.msra.mxu0 0.0
        %1079 = vmatprep.subr.mxu0 0.0
        %1080 = vmatpush1.msra.mxu0 0.0
        %1081 = vmatprep.subr.mxu0 0.0
        %1082 = vmatpush1.msra.mxu0 0.0
        %1083 = vmatprep.subr.mxu0 0.0
        %1084 = vmatpush1.msra.mxu0 0.0
        %1085 = vmatprep.subr.mxu0 0.0
        %1086 = vmatpush1.msra.mxu0 0.0
        %1087 = vmatprep.subr.mxu0 0.0
        %1088 = vmatpush1.msra.mxu0 0.0
        %1089 = vmatprep.subr.mxu0 0.0
        %1090 = vmatpush1.msra.mxu0 0.0
        %1091 = vmatprep.subr.mxu0 0.0
        %1092 = vmatpush1.msra.mxu0 0.0
        %1093 = vmatprep.mubr.f32.mxu0 0.0
        %1094 = vmatmul.mubr.f32.gmra.mrb[0].mxu0 %v1027
        %v1095 = vpop.f32.mrb[0].mxu0
        %v1096 = vadd.f32 0.0, %v1095
        %v1097 = vpop.f32.mrb[0].mxu0
        %1098 = vdwg.mxu0
        %v1100 = vsel %vm762, %v1096, 0
        %1102 = vmatprep.subr.mxu0 0.0
        %1103 = vmatpush1.msra.mxu0 %v756
        %1104 = vmatprep.subr.mxu0 0.0
        %1105 = vmatpush1.msra.mxu0 0.0
        %1106 = vmatprep.subr.mxu0 0.0
        %1107 = vmatpush1.msra.mxu0 0.0
        %1108 = vmatprep.subr.mxu0 0.0
        %1109 = vmatpush1.msra.mxu0 0.0
        %1110 = vmatprep.subr.mxu0 0.0
        %1111 = vmatpush1.msra.mxu0 0.0
        %1112 = vmatprep.subr.mxu0 0.0
        %1113 = vmatpush1.msra.mxu0 0.0
        %1114 = vmatprep.subr.mxu0 0.0
        %1115 = vmatpush1.msra.mxu0 0.0
        %1116 = vmatprep.subr.mxu0 0.0
        %1117 = vmatpush1.msra.mxu0 0.0
        %1118 = vmatprep.subr.mxu0 0.0
        %1119 = vmatpush1.msra.mxu0 0.0
        %1120 = vmatprep.subr.mxu0 0.0
        %1121 = vmatpush1.msra.mxu0 0.0
        %1122 = vmatprep.subr.mxu0 0.0
        %1123 = vmatpush1.msra.mxu0 0.0
        %1124 = vmatprep.subr.mxu0 0.0
        %1125 = vmatpush1.msra.mxu0 0.0
        %1126 = vmatprep.subr.mxu0 0.0
        %1127 = vmatpush1.msra.mxu0 0.0
        %1128 = vmatprep.subr.mxu0 0.0
        %1129 = vmatpush1.msra.mxu0 0.0
        %1130 = vmatprep.subr.mxu0 0.0
        %1131 = vmatpush1.msra.mxu0 0.0
        %1132 = vmatprep.subr.mxu0 0.0
        %1133 = vmatpush1.msra.mxu0 0.0
        %1134 = vmatprep.subr.mxu0 0.0
        %1135 = vmatpush1.msra.mxu0 0.0
        %1136 = vmatprep.subr.mxu0 0.0
        %1137 = vmatpush1.msra.mxu0 0.0
        %1138 = vmatprep.subr.mxu0 0.0
        %1139 = vmatpush1.msra.mxu0 0.0
        %1140 = vmatprep.subr.mxu0 0.0
        %1141 = vmatpush1.msra.mxu0 0.0
        %1142 = vmatprep.subr.mxu0 0.0
        %1143 = vmatpush1.msra.mxu0 0.0
        %1144 = vmatprep.subr.mxu0 0.0
        %1145 = vmatpush1.msra.mxu0 0.0
        %1146 = vmatprep.subr.mxu0 0.0
        %1147 = vmatpush1.msra.mxu0 0.0
        %1148 = vmatprep.subr.mxu0 0.0
        %1149 = vmatpush1.msra.mxu0 0.0
        %1150 = vmatprep.subr.mxu0 0.0
        %1151 = vmatpush1.msra.mxu0 0.0
        %1152 = vmatprep.subr.mxu0 0.0
        %1153 = vmatpush1.msra.mxu0 0.0
        %1154 = vmatprep.subr.mxu0 0.0
        %1155 = vmatpush1.msra.mxu0 0.0
        %1156 = vmatprep.subr.mxu0 0.0
        %1157 = vmatpush1.msra.mxu0 0.0
        %1158 = vmatprep.subr.mxu0 0.0
        %1159 = vmatpush1.msra.mxu0 0.0
        %1160 = vmatprep.subr.mxu0 0.0
        %1161 = vmatpush1.msra.mxu0 0.0
        %1162 = vmatprep.subr.mxu0 0.0
        %1163 = vmatpush1.msra.mxu0 0.0
        %1164 = vmatprep.subr.mxu0 0.0
        %1165 = vmatpush1.msra.mxu0 0.0
        %1166 = vmatprep.mubr.f32.mxu0 0.0
        %1167 = vmatmul.mubr.f32.gmra.mrb[0].mxu0 %v1100
        %v1168 = vpop.f32.mrb[0].mxu0
        %v1169 = vadd.f32 0.0, %v1168
        %v1170 = vpop.f32.mrb[0].mxu0
        %1171 = vdwg.mxu0
        %v1173 = vsel %vm762, %v929, 0
        %1175 = vmatprep.subr.mxu0 0.0
        %1176 = vmatpush1.msra.mxu0 %v755
        %1177 = vmatprep.subr.mxu0 0.0
        %1178 = vmatpush1.msra.mxu0 0.0
        %1179 = vmatprep.subr.mxu0 0.0
        %1180 = vmatpush1.msra.mxu0 0.0
        %1181 = vmatprep.subr.mxu0 0.0
        %1182 = vmatpush1.msra.mxu0 0.0
        %1183 = vmatprep.subr.mxu0 0.0
        %1184 = vmatpush1.msra.mxu0 0.0
        %1185 = vmatprep.subr.mxu0 0.0
        %1186 = vmatpush1.msra.mxu0 0.0
        %1187 = vmatprep.subr.mxu0 0.0
        %1188 = vmatpush1.msra.mxu0 0.0
        %1189 = vmatprep.subr.mxu0 0.0
        %1190 = vmatpush1.msra.mxu0 0.0
        %1191 = vmatprep.subr.mxu0 0.0
        %1192 = vmatpush1.msra.mxu0 0.0
        %1193 = vmatprep.subr.mxu0 0.0
        %1194 = vmatpush1.msra.mxu0 0.0
        %1195 = vmatprep.subr.mxu0 0.0
        %1196 = vmatpush1.msra.mxu0 0.0
        %1197 = vmatprep.subr.mxu0 0.0
        %1198 = vmatpush1.msra.mxu0 0.0
        %1199 = vmatprep.subr.mxu0 0.0
        %1200 = vmatpush1.msra.mxu0 0.0
        %1201 = vmatprep.subr.mxu0 0.0
        %1202 = vmatpush1.msra.mxu0 0.0
        %1203 = vmatprep.subr.mxu0 0.0
        %1204 = vmatpush1.msra.mxu0 0.0
        %1205 = vmatprep.subr.mxu0 0.0
        %1206 = vmatpush1.msra.mxu0 0.0
        %1207 = vmatprep.subr.mxu0 0.0
        %1208 = vmatpush1.msra.mxu0 0.0
        %1209 = vmatprep.subr.mxu0 0.0
        %1210 = vmatpush1.msra.mxu0 0.0
        %1211 = vmatprep.subr.mxu0 0.0
        %1212 = vmatpush1.msra.mxu0 0.0
        %1213 = vmatprep.subr.mxu0 0.0
        %1214 = vmatpush1.msra.mxu0 0.0
        %1215 = vmatprep.subr.mxu0 0.0
        %1216 = vmatpush1.msra.mxu0 0.0
        %1217 = vmatprep.subr.mxu0 0.0
        %1218 = vmatpush1.msra.mxu0 0.0
        %1219 = vmatprep.subr.mxu0 0.0
        %1220 = vmatpush1.msra.mxu0 0.0
        %1221 = vmatprep.subr.mxu0 0.0
        %1222 = vmatpush1.msra.mxu0 0.0
        %1223 = vmatprep.subr.mxu0 0.0
        %1224 = vmatpush1.msra.mxu0 0.0
        %1225 = vmatprep.subr.mxu0 0.0
        %1226 = vmatpush1.msra.mxu0 0.0
        %1227 = vmatprep.subr.mxu0 0.0
        %1228 = vmatpush1.msra.mxu0 0.0
        %1229 = vmatprep.subr.mxu0 0.0
        %1230 = vmatpush1.msra.mxu0 0.0
        %1231 = vmatprep.subr.mxu0 0.0
        %1232 = vmatpush1.msra.mxu0 0.0
        %1233 = vmatprep.subr.mxu0 0.0
        %1234 = vmatpush1.msra.mxu0 0.0
        %1235 = vmatprep.subr.mxu0 0.0
        %1236 = vmatpush1.msra.mxu0 0.0
        %1237 = vmatprep.subr.mxu0 0.0
        %1238 = vmatpush1.msra.mxu0 0.0
        %1239 = vmatprep.mubr.f32.mxu0 0.0
        %1240 = vmatmul.mubr.f32.gmra.mrb[0].mxu0 %v1173
        %v1241 = vpop.f32.mrb[0].mxu0
        %v1242 = vadd.f32 %v1169, %v1241
        %v1243 = vpop.f32.mrb[0].mxu0
        %1244 = vdwg.mxu0
        %1245 = vrot.lane.b32.xlu0 %v752, 112
        %v1246 = vpop.permute.xlu0 %1245
        %1247 = vrot.lane.b32.xlu0 %v752, 80
        %v1248 = vpop.permute.xlu0 %1247
        %v1249 = vsel %vm762, %v1246, 0
        %v1251 = vsel %vm762, %v1248, 0
        %1253 = vmatprep.subr.mxu0 0.0
        %1254 = vmatpush1.xpose.msra.mxu0 %v1251
        %1255 = vmatprep.subr.mxu0 0.0
        %1256 = vmatpush1.xpose.msra.mxu0 0.0
        %1257 = vmatprep.subr.mxu0 0.0
        %1258 = vmatpush1.xpose.msra.mxu0 0.0
        %1259 = vmatprep.subr.mxu0 0.0
        %1260 = vmatpush1.xpose.msra.mxu0 0.0
        %1261 = vmatprep.subr.mxu0 0.0
        %1262 = vmatpush1.xpose.msra.mxu0 0.0
        %1263 = vmatprep.subr.mxu0 0.0
        %1264 = vmatpush1.xpose.msra.mxu0 0.0
        %1265 = vmatprep.subr.mxu0 0.0
        %1266 = vmatpush1.xpose.msra.mxu0 0.0
        %1267 = vmatprep.subr.mxu0 0.0
        %1268 = vmatpush1.xpose.msra.mxu0 0.0
        %1269 = vmatprep.subr.mxu0 0.0
        %1270 = vmatpush1.xpose.msra.mxu0 0.0
        %1271 = vmatprep.subr.mxu0 0.0
        %1272 = vmatpush1.xpose.msra.mxu0 0.0
        %1273 = vmatprep.subr.mxu0 0.0
        %1274 = vmatpush1.xpose.msra.mxu0 0.0
        %1275 = vmatprep.subr.mxu0 0.0
        %1276 = vmatpush1.xpose.msra.mxu0 0.0
        %1277 = vmatprep.subr.mxu0 0.0
        %1278 = vmatpush1.xpose.msra.mxu0 0.0
        %1279 = vmatprep.subr.mxu0 0.0
        %1280 = vmatpush1.xpose.msra.mxu0 0.0
        %1281 = vmatprep.subr.mxu0 0.0
        %1282 = vmatpush1.xpose.msra.mxu0 0.0
        %1283 = vmatprep.subr.mxu0 0.0
        %1284 = vmatpush1.xpose.msra.mxu0 0.0
        %1285 = vmatprep.subr.mxu0 0.0
        %1286 = vmatpush1.xpose.msra.mxu0 0.0
        %1287 = vmatprep.subr.mxu0 0.0
        %1288 = vmatpush1.xpose.msra.mxu0 0.0
        %1289 = vmatprep.subr.mxu0 0.0
        %1290 = vmatpush1.xpose.msra.mxu0 0.0
        %1291 = vmatprep.subr.mxu0 0.0
        %1292 = vmatpush1.xpose.msra.mxu0 0.0
        %1293 = vmatprep.subr.mxu0 0.0
        %1294 = vmatpush1.xpose.msra.mxu0 0.0
        %1295 = vmatprep.subr.mxu0 0.0
        %1296 = vmatpush1.xpose.msra.mxu0 0.0
        %1297 = vmatprep.subr.mxu0 0.0
        %1298 = vmatpush1.xpose.msra.mxu0 0.0
        %1299 = vmatprep.subr.mxu0 0.0
        %1300 = vmatpush1.xpose.msra.mxu0 0.0
        %1301 = vmatprep.subr.mxu0 0.0
        %1302 = vmatpush1.xpose.msra.mxu0 0.0
        %1303 = vmatprep.subr.mxu0 0.0
        %1304 = vmatpush1.xpose.msra.mxu0 0.0
        %1305 = vmatprep.subr.mxu0 0.0
        %1306 = vmatpush1.xpose.msra.mxu0 0.0
        %1307 = vmatprep.subr.mxu0 0.0
        %1308 = vmatpush1.xpose.msra.mxu0 0.0
        %1309 = vmatprep.subr.mxu0 0.0
        %1310 = vmatpush1.xpose.msra.mxu0 0.0
        %1311 = vmatprep.subr.mxu0 0.0
        %1312 = vmatpush1.xpose.msra.mxu0 0.0
        %1313 = vmatprep.subr.mxu0 0.0
        %1314 = vmatpush1.xpose.msra.mxu0 0.0
        %1315 = vmatprep.subr.mxu0 0.0
        %1316 = vmatpush1.xpose.msra.mxu0 0.0
        %1317 = vmatprep.mubr.f32.mxu0 0.0
        %1318 = vmatmul.mubr.f32.gmra.mrb[0].mxu0 %v1249
        %v1319 = vpop.f32.mrb[0].mxu0
        %v1320 = vadd.f32 0.0, %v1319
        %v1321 = vpop.f32.mrb[0].mxu0
        %1322 = vdwg.mxu0
        %v1323 = vmul.f32 %v1320, 0.35355338
        %v1324 = vadd.f32 %v1323, %v842
        %v1325 = vsel %vm762, %v1324, -inf
        %1326 = vmax.xlane.f32.xlu0 %v1325
        %v1327 = vpop.xlane.xlu0 %1326
        %v1328 = vsub.f32 %v1324, %v1327
        %v1329 = vmul.f32 %v1328, 1.442695
        %v1330 = vpow.pop %v1329
        %v1331 = vsel %vm762, %v1330, 0.0
        %1332 = vadd.xlane.f32.xlu0 %v1331
        %v1333 = vpop.xlane.xlu0 %1332
        %v1334 = vrcp.pop %v1333
        %v1335 = vmul.f32 %v1330, %v1334
        %1336 = vrot.lane.b32.xlu0 %v752, 48
        %v1337 = vpop.permute.xlu0 %1336
        %v1340 = vsel %vm762, %v1335, 0
        %1342 = vmatprep.subr.mxu0 0.0
        %1343 = vmatpush1.msra.mxu0 %v1337
        %1344 = vmatprep.subr.mxu0 0.0
        %1345 = vmatpush1.msra.mxu0 0.0
        %1346 = vmatprep.subr.mxu0 0.0
        %1347 = vmatpush1.msra.mxu0 0.0
        %1348 = vmatprep.subr.mxu0 0.0
        %1349 = vmatpush1.msra.mxu0 0.0
        %1350 = vmatprep.subr.mxu0 0.0
        %1351 = vmatpush1.msra.mxu0 0.0
        %1352 = vmatprep.subr.mxu0 0.0
        %1353 = vmatpush1.msra.mxu0 0.0
        %1354 = vmatprep.subr.mxu0 0.0
        %1355 = vmatpush1.msra.mxu0 0.0
        %1356 = vmatprep.subr.mxu0 0.0
        %1357 = vmatpush1.msra.mxu0 0.0
        %1358 = vmatprep.subr.mxu0 0.0
        %1359 = vmatpush1.msra.mxu0 0.0
        %1360 = vmatprep.subr.mxu0 0.0
        %1361 = vmatpush1.msra.mxu0 0.0
        %1362 = vmatprep.subr.mxu0 0.0
        %1363 = vmatpush1.msra.mxu0 0.0
        %1364 = vmatprep.subr.mxu0 0.0
        %1365 = vmatpush1.msra.mxu0 0.0
        %1366 = vmatprep.subr.mxu0 0.0
        %1367 = vmatpush1.msra.mxu0 0.0
        %1368 = vmatprep.subr.mxu0 0.0
        %1369 = vmatpush1.msra.mxu0 0.0
        %1370 = vmatprep.subr.mxu0 0.0
        %1371 = vmatpush1.msra.mxu0 0.0
        %1372 = vmatprep.subr.mxu0 0.0
        %1373 = vmatpush1.msra.mxu0 0.0
        %1374 = vmatprep.subr.mxu0 0.0
        %1375 = vmatpush1.msra.mxu0 0.0
        %1376 = vmatprep.subr.mxu0 0.0
        %1377 = vmatpush1.msra.mxu0 0.0
        %1378 = vmatprep.subr.mxu0 0.0
        %1379 = vmatpush1.msra.mxu0 0.0
        %1380 = vmatprep.subr.mxu0 0.0
        %1381 = vmatpush1.msra.mxu0 0.0
        %1382 = vmatprep.subr.mxu0 0.0
        %1383 = vmatpush1.msra.mxu0 0.0
        %1384 = vmatprep.subr.mxu0 0.0
        %1385 = vmatpush1.msra.mxu0 0.0
        %1386 = vmatprep.subr.mxu0 0.0
        %1387 = vmatpush1.msra.mxu0 0.0
        %1388 = vmatprep.subr.mxu0 0.0
        %1389 = vmatpush1.msra.mxu0 0.0
        %1390 = vmatprep.subr.mxu0 0.0
        %1391 = vmatpush1.msra.mxu0 0.0
        %1392 = vmatprep.subr.mxu0 0.0
        %1393 = vmatpush1.msra.mxu0 0.0
        %1394 = vmatprep.subr.mxu0 0.0
        %1395 = vmatpush1.msra.mxu0 0.0
        %1396 = vmatprep.subr.mxu0 0.0
        %1397 = vmatpush1.msra.mxu0 0.0
        %1398 = vmatprep.subr.mxu0 0.0
        %1399 = vmatpush1.msra.mxu0 0.0
        %1400 = vmatprep.subr.mxu0 0.0
        %1401 = vmatpush1.msra.mxu0 0.0
        %1402 = vmatprep.subr.mxu0 0.0
        %1403 = vmatpush1.msra.mxu0 0.0
        %1404 = vmatprep.subr.mxu0 0.0
        %1405 = vmatpush1.msra.mxu0 0.0
        %1406 = vmatprep.mubr.f32.mxu0 0.0
        %1407 = vmatmul.mubr.f32.gmra.mrb[0].mxu0 %v1340
        %v1408 = vpop.f32.mrb[0].mxu0
        %v1409 = vadd.f32 0.0, %v1408
        %v1410 = vpop.f32.mrb[0].mxu0
        %1411 = vdwg.mxu0
        %v1413 = vsel %vm762, %v1409, 0
        %1415 = vmatprep.subr.mxu0 0.0
        %1416 = vmatpush1.msra.mxu0 %v757
        %1417 = vmatprep.subr.mxu0 0.0
        %1418 = vmatpush1.msra.mxu0 0.0
        %1419 = vmatprep.subr.mxu0 0.0
        %1420 = vmatpush1.msra.mxu0 0.0
        %1421 = vmatprep.subr.mxu0 0.0
        %1422 = vmatpush1.msra.mxu0 0.0
        %1423 = vmatprep.subr.mxu0 0.0
        %1424 = vmatpush1.msra.mxu0 0.0
        %1425 = vmatprep.subr.mxu0 0.0
        %1426 = vmatpush1.msra.mxu0 0.0
        %1427 = vmatprep.subr.mxu0 0.0
        %1428 = vmatpush1.msra.mxu0 0.0
        %1429 = vmatprep.subr.mxu0 0.0
        %1430 = vmatpush1.msra.mxu0 0.0
        %1431 = vmatprep.subr.mxu0 0.0
        %1432 = vmatpush1.msra.mxu0 0.0
        %1433 = vmatprep.subr.mxu0 0.0
        %1434 = vmatpush1.msra.mxu0 0.0
        %1435 = vmatprep.subr.mxu0 0.0
        %1436 = vmatpush1.msra.mxu0 0.0
        %1437 = vmatprep.subr.mxu0 0.0
        %1438 = vmatpush1.msra.mxu0 0.0
        %1439 = vmatprep.subr.mxu0 0.0
        %1440 = vmatpush1.msra.mxu0 0.0
        %1441 = vmatprep.subr.mxu0 0.0
        %1442 = vmatpush1.msra.mxu0 0.0
        %1443 = vmatprep.subr.mxu0 0.0
        %1444 = vmatpush1.msra.mxu0 0.0
        %1445 = vmatprep.subr.mxu0 0.0
        %1446 = vmatpush1.msra.mxu0 0.0
        %1447 = vmatprep.subr.mxu0 0.0
        %1448 = vmatpush1.msra.mxu0 0.0
        %1449 = vmatprep.subr.mxu0 0.0
        %1450 = vmatpush1.msra.mxu0 0.0
        %1451 = vmatprep.subr.mxu0 0.0
        %1452 = vmatpush1.msra.mxu0 0.0
        %1453 = vmatprep.subr.mxu0 0.0
        %1454 = vmatpush1.msra.mxu0 0.0
        %1455 = vmatprep.subr.mxu0 0.0
        %1456 = vmatpush1.msra.mxu0 0.0
        %1457 = vmatprep.subr.mxu0 0.0
        %1458 = vmatpush1.msra.mxu0 0.0
        %1459 = vmatprep.subr.mxu0 0.0
        %1460 = vmatpush1.msra.mxu0 0.0
        %1461 = vmatprep.subr.mxu0 0.0
        %1462 = vmatpush1.msra.mxu0 0.0
        %1463 = vmatprep.subr.mxu0 0.0
        %1464 = vmatpush1.msra.mxu0 0.0
        %1465 = vmatprep.subr.mxu0 0.0
        %1466 = vmatpush1.msra.mxu0 0.0
        %1467 = vmatprep.subr.mxu0 0.0
        %1468 = vmatpush1.msra.mxu0 0.0
        %1469 = vmatprep.subr.mxu0 0.0
        %1470 = vmatpush1.msra.mxu0 0.0
        %1471 = vmatprep.subr.mxu0 0.0
        %1472 = vmatpush1.msra.mxu0 0.0
        %1473 = vmatprep.subr.mxu0 0.0
        %1474 = vmatpush1.msra.mxu0 0.0
        %1475 = vmatprep.subr.mxu0 0.0
        %1476 = vmatpush1.msra.mxu0 0.0
        %1477 = vmatprep.subr.mxu0 0.0
        %1478 = vmatpush1.msra.mxu0 0.0
        %1479 = vmatprep.mubr.f32.mxu0 0.0
        %1480 = vmatmul.mubr.f32.gmra.mrb[0].mxu0 %v1413
        %v1481 = vpop.f32.mrb[0].mxu0
        %v1482 = vadd.f32 0.0, %v1481
        %v1483 = vpop.f32.mrb[0].mxu0
        %1484 = vdwg.mxu0
        %v1485 = vadd.f32 %v1242, %v1482
        %1486 = vrot.lane.b32.xlu0 %v752, 104
        %v1487 = vpop.permute.xlu0 %1486
        %1488 = vrot.lane.b32.xlu0 %v752, 72
        %v1489 = vpop.permute.xlu0 %1488
        %v1490 = vsel %vm762, %v1487, 0
        %v1492 = vsel %vm762, %v1489, 0
        %1494 = vmatprep.subr.mxu0 0.0
        %1495 = vmatpush1.xpose.msra.mxu0 %v1492
        %1496 = vmatprep.subr.mxu0 0.0
        %1497 = vmatpush1.xpose.msra.mxu0 0.0
        %1498 = vmatprep.subr.mxu0 0.0
        %1499 = vmatpush1.xpose.msra.mxu0 0.0
        %1500 = vmatprep.subr.mxu0 0.0
        %1501 = vmatpush1.xpose.msra.mxu0 0.0
        %1502 = vmatprep.subr.mxu0 0.0
        %1503 = vmatpush1.xpose.msra.mxu0 0.0
        %1504 = vmatprep.subr.mxu0 0.0
        %1505 = vmatpush1.xpose.msra.mxu0 0.0
        %1506 = vmatprep.subr.mxu0 0.0
        %1507 = vmatpush1.xpose.msra.mxu0 0.0
        %1508 = vmatprep.subr.mxu0 0.0
        %1509 = vmatpush1.xpose.msra.mxu0 0.0
        %1510 = vmatprep.subr.mxu0 0.0
        %1511 = vmatpush1.xpose.msra.mxu0 0.0
        %1512 = vmatprep.subr.mxu0 0.0
        %1513 = vmatpush1.xpose.msra.mxu0 0.0
        %1514 = vmatprep.subr.mxu0 0.0
        %1515 = vmatpush1.xpose.msra.mxu0 0.0
        %1516 = vmatprep.subr.mxu0 0.0
        %1517 = vmatpush1.xpose.msra.mxu0 0.0
        %1518 = vmatprep.subr.mxu0 0.0
        %1519 = vmatpush1.xpose.msra.mxu0 0.0
        %1520 = vmatprep.subr.mxu0 0.0
        %1521 = vmatpush1.xpose.msra.mxu0 0.0
        %1522 = vmatprep.subr.mxu0 0.0
        %1523 = vmatpush1.xpose.msra.mxu0 0.0
        %1524 = vmatprep.subr.mxu0 0.0
        %1525 = vmatpush1.xpose.msra.mxu0 0.0
        %1526 = vmatprep.subr.mxu0 0.0
        %1527 = vmatpush1.xpose.msra.mxu0 0.0
        %1528 = vmatprep.subr.mxu0 0.0
        %1529 = vmatpush1.xpose.msra.mxu0 0.0
        %1530 = vmatprep.subr.mxu0 0.0
        %1531 = vmatpush1.xpose.msra.mxu0 0.0
        %1532 = vmatprep.subr.mxu0 0.0
        %1533 = vmatpush1.xpose.msra.mxu0 0.0
        %1534 = vmatprep.subr.mxu0 0.0
        %1535 = vmatpush1.xpose.msra.mxu0 0.0
        %1536 = vmatprep.subr.mxu0 0.0
        %1537 = vmatpush1.xpose.msra.mxu0 0.0
        %1538 = vmatprep.subr.mxu0 0.0
        %1539 = vmatpush1.xpose.msra.mxu0 0.0
        %1540 = vmatprep.subr.mxu0 0.0
        %1541 = vmatpush1.xpose.msra.mxu0 0.0
        %1542 = vmatprep.subr.mxu0 0.0
        %1543 = vmatpush1.xpose.msra.mxu0 0.0
        %1544 = vmatprep.subr.mxu0 0.0
        %1545 = vmatpush1.xpose.msra.mxu0 0.0
        %1546 = vmatprep.subr.mxu0 0.0
        %1547 = vmatpush1.xpose.msra.mxu0 0.0
        %1548 = vmatprep.subr.mxu0 0.0
        %1549 = vmatpush1.xpose.msra.mxu0 0.0
        %1550 = vmatprep.subr.mxu0 0.0
        %1551 = vmatpush1.xpose.msra.mxu0 0.0
        %1552 = vmatprep.subr.mxu0 0.0
        %1553 = vmatpush1.xpose.msra.mxu0 0.0
        %1554 = vmatprep.subr.mxu0 0.0
        %1555 = vmatpush1.xpose.msra.mxu0 0.0
        %1556 = vmatprep.subr.mxu0 0.0
        %1557 = vmatpush1.xpose.msra.mxu0 0.0
        %1558 = vmatprep.mubr.f32.mxu0 0.0
        %1559 = vmatmul.mubr.f32.gmra.mrb[0].mxu0 %v1490
        %v1560 = vpop.f32.mrb[0].mxu0
        %v1561 = vadd.f32 0.0, %v1560
        %v1562 = vpop.f32.mrb[0].mxu0
        %1563 = vdwg.mxu0
        %v1564 = vmul.f32 %v1561, 0.35355338
        %v1565 = vadd.f32 %v1564, %v842
        %v1566 = vsel %vm762, %v1565, -inf
        %1567 = vmax.xlane.f32.xlu0 %v1566
        %v1568 = vpop.xlane.xlu0 %1567
        %v1569 = vsub.f32 %v1565, %v1568
        %v1570 = vmul.f32 %v1569, 1.442695
        %v1571 = vpow.pop %v1570
        %v1572 = vsel %vm762, %v1571, 0.0
        %1573 = vadd.xlane.f32.xlu0 %v1572
        %v1574 = vpop.xlane.xlu0 %1573
        %v1575 = vrcp.pop %v1574
        %v1576 = vmul.f32 %v1571, %v1575
        %1577 = vrot.lane.b32.xlu0 %v752, 40
        %v1578 = vpop.permute.xlu0 %1577
        %v1581 = vsel %vm762, %v1576, 0
        %1583 = vmatprep.subr.mxu0 0.0
        %1584 = vmatpush1.msra.mxu0 %v1578
        %1585 = vmatprep.subr.mxu0 0.0
        %1586 = vmatpush1.msra.mxu0 0.0
        %1587 = vmatprep.subr.mxu0 0.0
        %1588 = vmatpush1.msra.mxu0 0.0
        %1589 = vmatprep.subr.mxu0 0.0
        %1590 = vmatpush1.msra.mxu0 0.0
        %1591 = vmatprep.subr.mxu0 0.0
        %1592 = vmatpush1.msra.mxu0 0.0
        %1593 = vmatprep.subr.mxu0 0.0
        %1594 = vmatpush1.msra.mxu0 0.0
        %1595 = vmatprep.subr.mxu0 0.0
        %1596 = vmatpush1.msra.mxu0 0.0
        %1597 = vmatprep.subr.mxu0 0.0
        %1598 = vmatpush1.msra.mxu0 0.0
        %1599 = vmatprep.subr.mxu0 0.0
        %1600 = vmatpush1.msra.mxu0 0.0
        %1601 = vmatprep.subr.mxu0 0.0
        %1602 = vmatpush1.msra.mxu0 0.0
        %1603 = vmatprep.subr.mxu0 0.0
        %1604 = vmatpush1.msra.mxu0 0.0
        %1605 = vmatprep.subr.mxu0 0.0
        %1606 = vmatpush1.msra.mxu0 0.0
        %1607 = vmatprep.subr.mxu0 0.0
        %1608 = vmatpush1.msra.mxu0 0.0
        %1609 = vmatprep.subr.mxu0 0.0
        %1610 = vmatpush1.msra.mxu0 0.0
        %1611 = vmatprep.subr.mxu0 0.0
        %1612 = vmatpush1.msra.mxu0 0.0
        %1613 = vmatprep.subr.mxu0 0.0
        %1614 = vmatpush1.msra.mxu0 0.0
        %1615 = vmatprep.subr.mxu0 0.0
        %1616 = vmatpush1.msra.mxu0 0.0
        %1617 = vmatprep.subr.mxu0 0.0
        %1618 = vmatpush1.msra.mxu0 0.0
        %1619 = vmatprep.subr.mxu0 0.0
        %1620 = vmatpush1.msra.mxu0 0.0
        %1621 = vmatprep.subr.mxu0 0.0
        %1622 = vmatpush1.msra.mxu0 0.0
        %1623 = vmatprep.subr.mxu0 0.0
        %1624 = vmatpush1.msra.mxu0 0.0
        %1625 = vmatprep.subr.mxu0 0.0
        %1626 = vmatpush1.msra.mxu0 0.0
        %1627 = vmatprep.subr.mxu0 0.0
        %1628 = vmatpush1.msra.mxu0 0.0
        %1629 = vmatprep.subr.mxu0 0.0
        %1630 = vmatpush1.msra.mxu0 0.0
        %1631 = vmatprep.subr.mxu0 0.0
        %1632 = vmatpush1.msra.mxu0 0.0
        %1633 = vmatprep.subr.mxu0 0.0
        %1634 = vmatpush1.msra.mxu0 0.0
        %1635 = vmatprep.subr.mxu0 0.0
        %1636 = vmatpush1.msra.mxu0 0.0
        %1637 = vmatprep.subr.mxu0 0.0
        %1638 = vmatpush1.msra.mxu0 0.0
        %1639 = vmatprep.subr.mxu0 0.0
        %1640 = vmatpush1.msra.mxu0 0.0
        %1641 = vmatprep.subr.mxu0 0.0
        %1642 = vmatpush1.msra.mxu0 0.0
        %1643 = vmatprep.subr.mxu0 0.0
        %1644 = vmatpush1.msra.mxu0 0.0
        %1645 = vmatprep.subr.mxu0 0.0
        %1646 = vmatpush1.msra.mxu0 0.0
        %1647 = vmatprep.mubr.f32.mxu0 0.0
        %1648 = vmatmul.mubr.f32.gmra.mrb[0].mxu0 %v1581
        %v1649 = vpop.f32.mrb[0].mxu0
        %v1650 = vadd.f32 0.0, %v1649
        %v1651 = vpop.f32.mrb[0].mxu0
        %1652 = vdwg.mxu0
        %v1654 = vsel %vm762, %v1650, 0
        %1656 = vmatprep.subr.mxu0 0.0
        %1657 = vmatpush1.msra.mxu0 %v758
        %1658 = vmatprep.subr.mxu0 0.0
        %1659 = vmatpush1.msra.mxu0 0.0
        %1660 = vmatprep.subr.mxu0 0.0
        %1661 = vmatpush1.msra.mxu0 0.0
        %1662 = vmatprep.subr.mxu0 0.0
        %1663 = vmatpush1.msra.mxu0 0.0
        %1664 = vmatprep.subr.mxu0 0.0
        %1665 = vmatpush1.msra.mxu0 0.0
        %1666 = vmatprep.subr.mxu0 0.0
        %1667 = vmatpush1.msra.mxu0 0.0
        %1668 = vmatprep.subr.mxu0 0.0
        %1669 = vmatpush1.msra.mxu0 0.0
        %1670 = vmatprep.subr.mxu0 0.0
        %1671 = vmatpush1.msra.mxu0 0.0
        %1672 = vmatprep.subr.mxu0 0.0
        %1673 = vmatpush1.msra.mxu0 0.0
        %1674 = vmatprep.subr.mxu0 0.0
        %1675 = vmatpush1.msra.mxu0 0.0
        %1676 = vmatprep.subr.mxu0 0.0
        %1677 = vmatpush1.msra.mxu0 0.0
        %1678 = vmatprep.subr.mxu0 0.0
        %1679 = vmatpush1.msra.mxu0 0.0
        %1680 = vmatprep.subr.mxu0 0.0
        %1681 = vmatpush1.msra.mxu0 0.0
        %1682 = vmatprep.subr.mxu0 0.0
        %1683 = vmatpush1.msra.mxu0 0.0
        %1684 = vmatprep.subr.mxu0 0.0
        %1685 = vmatpush1.msra.mxu0 0.0
        %1686 = vmatprep.subr.mxu0 0.0
        %1687 = vmatpush1.msra.mxu0 0.0
        %1688 = vmatprep.subr.mxu0 0.0
        %1689 = vmatpush1.msra.mxu0 0.0
        %1690 = vmatprep.subr.mxu0 0.0
        %1691 = vmatpush1.msra.mxu0 0.0
        %1692 = vmatprep.subr.mxu0 0.0
        %1693 = vmatpush1.msra.mxu0 0.0
        %1694 = vmatprep.subr.mxu0 0.0
        %1695 = vmatpush1.msra.mxu0 0.0
        %1696 = vmatprep.subr.mxu0 0.0
        %1697 = vmatpush1.msra.mxu0 0.0
        %1698 = vmatprep.subr.mxu0 0.0
        %1699 = vmatpush1.msra.mxu0 0.0
        %1700 = vmatprep.subr.mxu0 0.0
        %1701 = vmatpush1.msra.mxu0 0.0
        %1702 = vmatprep.subr.mxu0 0.0
        %1703 = vmatpush1.msra.mxu0 0.0
        %1704 = vmatprep.subr.mxu0 0.0
        %1705 = vmatpush1.msra.mxu0 0.0
        %1706 = vmatprep.subr.mxu0 0.0
        %1707 = vmatpush1.msra.mxu0 0.0
        %1708 = vmatprep.subr.mxu0 0.0
        %1709 = vmatpush1.msra.mxu0 0.0
        %1710 = vmatprep.subr.mxu0 0.0
        %1711 = vmatpush1.msra.mxu0 0.0
        %1712 = vmatprep.subr.mxu0 0.0
        %1713 = vmatpush1.msra.mxu0 0.0
        %1714 = vmatprep.subr.mxu0 0.0
        %1715 = vmatpush1.msra.mxu0 0.0
        %1716 = vmatprep.subr.mxu0 0.0
        %1717 = vmatpush1.msra.mxu0 0.0
        %1718 = vmatprep.subr.mxu0 0.0
        %1719 = vmatpush1.msra.mxu0 0.0
        %1720 = vmatprep.mubr.f32.mxu0 0.0
        %1721 = vmatmul.mubr.f32.gmra.mrb[0].mxu0 %v1654
        %v1722 = vpop.f32.mrb[0].mxu0
        %v1723 = vadd.f32 0.0, %v1722
        %v1724 = vpop.f32.mrb[0].mxu0
        %1725 = vdwg.mxu0
        %v1726 = vadd.f32 %v1485, %v1723
        %v1727 = vld [vmem:[%s7] sm:$0x1]
        %v1729 = vlaneseq
        %v1730 = vshrl.u32 %v1729, 7
        %v1731 = vsub.s32 0, %v1730
        %v1732 = vrot.slane %v1727, %v1731
        %v1734 = vadd.f32 %v1726, %v1732
        %v1735 = vadd.f32 %v1734, %v669
        %v1736 = vld [vmem:[%s8] sm:$0x1]
        %v1737 = vld [vmem:[%s9] sm:$0x1]
        %v1738 = vsel %vm641, %v1735, 0.0
        %1739 = vadd.xlane.f32.xlu0 %v1738
        %v1740 = vpop.xlane.xlu0 %1739
        %v1741 = vmul.f32 %v1740, %v645
        %v1742 = vsub.f32 %v1735, %v1741
        %v1743 = vmul.f32 %v1742, %v1742
        %v1744 = vsel %vm641, %v1743, 0.0
        %1745 = vadd.xlane.f32.xlu0 %v1744
        %v1746 = vpop.xlane.xlu0 %1745
        %v1747 = vmul.f32 %v1746, %v645
        %v1748 = vadd.f32 %v1747, 1e-12
        %v1749 = vrsqrt.pop %v1748
        %v1750 = vmul.f32 %v1742, %v1749
        %v1752 = vlaneseq
        %v1753 = vshrl.u32 %v1752, 7
        %v1754 = vsub.s32 0, %v1753
        %v1755 = vrot.slane %v1736, %v1754
        %v1757 = vmul.f32 %v1750, %v1755
        %v1759 = vlaneseq
        %v1760 = vshrl.u32 %v1759, 7
        %v1761 = vsub.s32 0, %v1760
        %v1762 = vrot.slane %v1737, %v1761
        %v1764 = vadd.f32 %v1757, %v1762
        %v1765 = vld [vmem:[%s10] sm:$0xff]
        %v1766 = vld [vmem:[%s10 + $0x8] sm:$0xff]
        %v1767 = vld [vmem:[%s10 + $0x10] sm:$0xff]
        %v1768 = vld [vmem:[%s10 + $0x18] sm:$0xff]
        %v1769 = vld [vmem:[%s11] sm:$0x1]
        %v1771 = vlaneseq
        %v1772 = vshrl.u32 %v1771, 7
        %v1773 = vsub.s32 0, %v1772
        %v1774 = vrot.slane %v1769, %v1773
        %v1777 = vsel %vm641, %v1764, 0
        %1779 = vmatprep.subr.mxu0 0.0
        %1780 = vmatpush1.msra.mxu0 %v1765
        %1781 = vmatprep.subr.mxu0 0.0
        %1782 = vmatpush1.msra.mxu0 %v1766
        %1783 = vmatprep.subr.mxu0 0.0
        %1784 = vmatpush1.msra.mxu0 %v1767
        %1785 = vmatprep.subr.mxu0 0.0
        %1786 = vmatpush1.msra.mxu0 %v1768
        %1787 = vmatprep.subr.mxu0 0.0
        %1788 = vmatpush1.msra.mxu0 0.0
        %1789 = vmatprep.subr.mxu0 0.0
        %1790 = vmatpush1.msra.mxu0 0.0
        %1791 = vmatprep.subr.mxu0 0.0
        %1792 = vmatpush1.msra.mxu0 0.0
        %1793 = vmatprep.subr.mxu0 0.0
        %1794 = vmatpush1.msra.mxu0 0.0
        %1795 = vmatprep.subr.mxu0 0.0
        %1796 = vmatpush1.msra.mxu0 0.0
        %1797 = vmatprep.subr.mxu0 0.0
        %1798 = vmatpush1.msra.mxu0 0.0
        %1799 = vmatprep.subr.mxu0 0.0
        %1800 = vmatpush1.msra.mxu0 0.0
        %1801 = vmatprep.subr.mxu0 0.0
        %1802 = vmatpush1.msra.mxu0 0.0
        %1803 = vmatprep.subr.mxu0 0.0
        %1804 = vmatpush1.msra.mxu0 0.0
        %1805 = vmatprep.subr.mxu0 0.0
        %1806 = vmatpush1.msra.mxu0 0.0
        %1807 = vmatprep.subr.mxu0 0.0
        %1808 = vmatpush1.msra.mxu0 0.0
        %1809 = vmatprep.subr.mxu0 0.0
        %1810 = vmatpush1.msra.mxu0 0.0
        %1811 = vmatprep.subr.mxu0 0.0
        %1812 = vmatpush1.msra.mxu0 0.0
        %1813 = vmatprep.subr.mxu0 0.0
        %1814 = vmatpush1.msra.mxu0 0.0
        %1815 = vmatprep.subr.mxu0 0.0
        %1816 = vmatpush1.msra.mxu0 0.0
        %1817 = vmatprep.subr.mxu0 0.0
        %1818 = vmatpush1.msra.mxu0 0.0
        %1819 = vmatprep.subr.mxu0 0.0
        %1820 = vmatpush1.msra.mxu0 0.0
        %1821 = vmatprep.subr.mxu0 0.0
        %1822 = vmatpush1.msra.mxu0 0.0
        %1823 = vmatprep.subr.mxu0 0.0
        %1824 = vmatpush1.msra.mxu0 0.0
        %1825 = vmatprep.subr.mxu0 0.0
        %1826 = vmatpush1.msra.mxu0 0.0
        %1827 = vmatprep.subr.mxu0 0.0
        %1828 = vmatpush1.msra.mxu0 0.0
        %1829 = vmatprep.subr.mxu0 0.0
        %1830 = vmatpush1.msra.mxu0 0.0
        %1831 = vmatprep.subr.mxu0 0.0
        %1832 = vmatpush1.msra.mxu0 0.0
        %1833 = vmatprep.subr.mxu0 0.0
        %1834 = vmatpush1.msra.mxu0 0.0
        %1835 = vmatprep.subr.mxu0 0.0
        %1836 = vmatpush1.msra.mxu0 0.0
        %1837 = vmatprep.subr.mxu0 0.0
        %1838 = vmatpush1.msra.mxu0 0.0
        %1839 = vmatprep.subr.mxu0 0.0
        %1840 = vmatpush1.msra.mxu0 0.0
        %1841 = vmatprep.subr.mxu0 0.0
        %1842 = vmatpush1.msra.mxu0 0.0
        %1843 = vmatprep.mubr.f32.mxu0 0.0
        %1844 = vmatmul.mubr.f32.gmra.mrb[0].mxu0 %v1777
        %v1845 = vpop.f32.mrb[0].mxu0
        %v1846 = vadd.f32 %v1774, %v1845
        %v1847 = vpop.f32.mrb[0].mxu0
        %1848 = vdwg.mxu0
        %v1849 = vmul.f32 %v1846, %v1846
        %v1850 = vmul.f32 %v1846, %v1849
        %v1851 = vmul.f32 %v1850, 0.044715
        %v1852 = vadd.f32 %v1846, %v1851
        %v1853 = vmul.f32 %v1852, 0.7978846
        %v1854 = vtanh.pop %v1853
        %v1855 = vadd.f32 %v1854, 1.0
        %v1856 = vmul.f32 %v1855, 0.5
        %v1857 = vmul.f32 %v1846, %v1856
        %v1858 = vld [vmem:[%s12] sm:$0xff]
        %v1859 = vld [vmem:[%s12 + $0x8] sm:$0xff]
        %v1860 = vld [vmem:[%s12 + $0x10] sm:$0xff]
        %v1861 = vld [vmem:[%s12 + $0x18] sm:$0xff]
        %v1862 = vld [vmem:[%s12 + $0x20] sm:$0xff]
        %v1863 = vld [vmem:[%s12 + $0x28] sm:$0xff]
        %v1864 = vld [vmem:[%s12 + $0x30] sm:$0xff]
        %v1865 = vld [vmem:[%s12 + $0x38] sm:$0xff]
        %v1866 = vld [vmem:[%s13] sm:$0x1]
        %v1868 = vlaneseq
        %v1869 = vshrl.u32 %v1868, 7
        %v1870 = vsub.s32 0, %v1869
        %v1871 = vrot.slane %v1866, %v1870
        %vm1873 = vcmask 523264
        %v1875 = vsel %vm1873, %v1857, 0
        %1877 = vmatprep.subr.mxu0 0.0
        %1878 = vmatpush1.msra.mxu0 %v1858
        %1879 = vmatprep.subr.mxu0 0.0
        %1880 = vmatpush1.msra.mxu0 %v1859
        %1881 = vmatprep.subr.mxu0 0.0
        %1882 = vmatpush1.msra.mxu0 %v1860
        %1883 = vmatprep.subr.mxu0 0.0
        %1884 = vmatpush1.msra.mxu0 %v1861
        %1885 = vmatprep.subr.mxu0 0.0
        %1886 = vmatpush1.msra.mxu0 %v1862
        %1887 = vmatprep.subr.mxu0 0.0
        %1888 = vmatpush1.msra.mxu0 %v1863
        %1889 = vmatprep.subr.mxu0 0.0
        %1890 = vmatpush1.msra.mxu0 %v1864
        %1891 = vmatprep.subr.mxu0 0.0
        %1892 = vmatpush1.msra.mxu0 %v1865
        %1893 = vmatprep.subr.mxu0 0.0
        %1894 = vmatpush1.msra.mxu0 0.0
        %1895 = vmatprep.subr.mxu0 0.0
        %1896 = vmatpush1.msra.mxu0 0.0
        %1897 = vmatprep.subr.mxu0 0.0
        %1898 = vmatpush1.msra.mxu0 0.0
        %1899 = vmatprep.subr.mxu0 0.0
        %1900 = vmatpush1.msra.mxu0 0.0
        %1901 = vmatprep.subr.mxu0 0.0
        %1902 = vmatpush1.msra.mxu0 0.0
        %1903 = vmatprep.subr.mxu0 0.0
        %1904 = vmatpush1.msra.mxu0 0.0
        %1905 = vmatprep.subr.mxu0 0.0
        %1906 = vmatpush1.msra.mxu0 0.0
        %1907 = vmatprep.subr.mxu0 0.0
        %1908 = vmatpush1.msra.mxu0 0.0
        %1909 = vmatprep.subr.mxu0 0.0
        %1910 = vmatpush1.msra.mxu0 0.0
        %1911 = vmatprep.subr.mxu0 0.0
        %1912 = vmatpush1.msra.mxu0 0.0
        %1913 = vmatprep.subr.mxu0 0.0
        %1914 = vmatpush1.msra.mxu0 0.0
        %1915 = vmatprep.subr.mxu0 0.0
        %1916 = vmatpush1.msra.mxu0 0.0
        %1917 = vmatprep.subr.mxu0 0.0
        %1918 = vmatpush1.msra.mxu0 0.0
        %1919 = vmatprep.subr.mxu0 0.0
        %1920 = vmatpush1.msra.mxu0 0.0
        %1921 = vmatprep.subr.mxu0 0.0
        %1922 = vmatpush1.msra.mxu0 0.0
        %1923 = vmatprep.subr.mxu0 0.0
        %1924 = vmatpush1.msra.mxu0 0.0
        %1925 = vmatprep.subr.mxu0 0.0
        %1926 = vmatpush1.msra.mxu0 0.0
        %1927 = vmatprep.subr.mxu0 0.0
        %1928 = vmatpush1.msra.mxu0 0.0
        %1929 = vmatprep.subr.mxu0 0.0
        %1930 = vmatpush1.msra.mxu0 0.0
        %1931 = vmatprep.subr.mxu0 0.0
        %1932 = vmatpush1.msra.mxu0 0.0
        %1933 = vmatprep.subr.mxu0 0.0
        %1934 = vmatpush1.msra.mxu0 0.0
        %1935 = vmatprep.subr.mxu0 0.0
        %1936 = vmatpush1.msra.mxu0 0.0
        %1937 = vmatprep.subr.mxu0 0.0
        %1938 = vmatpush1.msra.mxu0 0.0
        %1939 = vmatprep.subr.mxu0 0.0
        %1940 = vmatpush1.msra.mxu0 0.0
        %1941 = vmatprep.mubr.f32.mxu0 0.0
        %1942 = vmatmul.mubr.f32.gmra.mrb[0].mxu0 %v1875
        %v1943 = vpop.f32.mrb[0].mxu0
        %v1944 = vadd.f32 %v1871, %v1943
        %v1945 = vpop.f32.mrb[0].mxu0
        %1946 = vdwg.mxu0
        %v1947 = vadd.f32 %v1944, %v1764
        %v1948 = vld [vmem:[%s14] sm:$0x1]
        %v1949 = vld [vmem:[%s15] sm:$0x1]
        %v1950 = vsel %vm641, %v1947, 0.0
        %1951 = vadd.xlane.f32.xlu0 %v1950
        %v1952 = vpop.xlane.xlu0 %1951
        %v1953 = vmul.f32 %v1952, %v645
        %v1954 = vsub.f32 %v1947, %v1953
        %v1955 = vmul.f32 %v1954, %v1954
        %v1956 = vsel %vm641, %v1955, 0.0
        %1957 = vadd.xlane.f32.xlu0 %v1956
        %v1958 = vpop.xlane.xlu0 %1957
        %v1959 = vmul.f32 %v1958, %v645
        %v1960 = vadd.f32 %v1959, 1e-12
        %v1961 = vrsqrt.pop %v1960
        %v1962 = vmul.f32 %v1954, %v1961
        %v1964 = vlaneseq
        %v1965 = vshrl.u32 %v1964, 7
        %v1966 = vsub.s32 0, %v1965
        %v1967 = vrot.slane %v1948, %v1966
        %v1969 = vmul.f32 %v1962, %v1967
        %v1971 = vlaneseq
        %v1972 = vshrl.u32 %v1971, 7
        %v1973 = vsub.s32 0, %v1972
        %v1974 = vrot.slane %v1949, %v1973
        %v1976 = vadd.f32 %v1969, %v1974
        %s1977 = scalar_lea.vmem %s4, 32
        %v1978 = vld [vmem:[%s1977] sm:$0xff]
        %v1979 = vld [vmem:[%s1977 + $0x8] sm:$0xff]
        %v1980 = vld [vmem:[%s1977 + $0x10] sm:$0xff]
        %v1981 = vld [vmem:[%s1977 + $0x18] sm:$0xff]
        %s1982 = scalar_lea.vmem %s5, 1
        %v1983 = vld [vmem:[%s1982] sm:$0x1]
        %v1985 = vlaneseq
        %v1986 = vshrl.u32 %v1985, 7
        %v1987 = vsub.s32 0, %v1986
        %v1988 = vrot.slane %v1983, %v1987
        %v1991 = vsel %vm641, %v1976, 0
        %1993 = vmatprep.subr.mxu0 0.0
        %1994 = vmatpush1.msra.mxu0 %v1978
        %1995 = vmatprep.subr.mxu0 0.0
        %1996 = vmatpush1.msra.mxu0 %v1979
        %1997 = vmatprep.subr.mxu0 0.0
        %1998 = vmatpush1.msra.mxu0 %v1980
        %1999 = vmatprep.subr.mxu0 0.0
        %2000 = vmatpush1.msra.mxu0 %v1981
        %2001 = vmatprep.subr.mxu0 0.0
        %2002 = vmatpush1.msra.mxu0 0.0
        %2003 = vmatprep.subr.mxu0 0.0
        %2004 = vmatpush1.msra.mxu0 0.0
        %2005 = vmatprep.subr.mxu0 0.0
        %2006 = vmatpush1.msra.mxu0 0.0
        %2007 = vmatprep.subr.mxu0 0.0
        %2008 = vmatpush1.msra.mxu0 0.0
        %2009 = vmatprep.subr.mxu0 0.0
        %2010 = vmatpush1.msra.mxu0 0.0
        %2011 = vmatprep.subr.mxu0 0.0
        %2012 = vmatpush1.msra.mxu0 0.0
        %2013 = vmatprep.subr.mxu0 0.0
        %2014 = vmatpush1.msra.mxu0 0.0
        %2015 = vmatprep.subr.mxu0 0.0
        %2016 = vmatpush1.msra.mxu0 0.0
        %2017 = vmatprep.subr.mxu0 0.0
        %2018 = vmatpush1.msra.mxu0 0.0
        %2019 = vmatprep.subr.mxu0 0.0
        %2020 = vmatpush1.msra.mxu0 0.0
        %2021 = vmatprep.subr.mxu0 0.0
        %2022 = vmatpush1.msra.mxu0 0.0
        %2023 = vmatprep.subr.mxu0 0.0
        %2024 = vmatpush1.msra.mxu0 0.0
        %2025 = vmatprep.subr.mxu0 0.0
        %2026 = vmatpush1.msra.mxu0 0.0
        %2027 = vmatprep.subr.mxu0 0.0
        %2028 = vmatpush1.msra.mxu0 0.0
        %2029 = vmatprep.subr.mxu0 0.0
        %2030 = vmatpush1.msra.mxu0 0.0
        %2031 = vmatprep.subr.mxu0 0.0
        %2032 = vmatpush1.msra.mxu0 0.0
        %2033 = vmatprep.subr.mxu0 0.0
        %2034 = vmatpush1.msra.mxu0 0.0
        %2035 = vmatprep.subr.mxu0 0.0
        %2036 = vmatpush1.msra.mxu0 0.0
        %2037 = vmatprep.subr.mxu0 0.0
        %2038 = vmatpush1.msra.mxu0 0.0
        %2039 = vmatprep.subr.mxu0 0.0
        %2040 = vmatpush1.msra.mxu0 0.0
        %2041 = vmatprep.subr.mxu0 0.0
        %2042 = vmatpush1.msra.mxu0 0.0
        %2043 = vmatprep.subr.mxu0 0.0
        %2044 = vmatpush1.msra.mxu0 0.0
        %2045 = vmatprep.subr.mxu0 0.0
        %2046 = vmatpush1.msra.mxu0 0.0
        %2047 = vmatprep.subr.mxu0 0.0
        %2048 = vmatpush1.msra.mxu0 0.0
        %2049 = vmatprep.subr.mxu0 0.0
        %2050 = vmatpush1.msra.mxu0 0.0
        %2051 = vmatprep.subr.mxu0 0.0
        %2052 = vmatpush1.msra.mxu0 0.0
        %2053 = vmatprep.subr.mxu0 0.0
        %2054 = vmatpush1.msra.mxu0 0.0
        %2055 = vmatprep.subr.mxu0 0.0
        %2056 = vmatpush1.msra.mxu0 0.0
        %2057 = vmatprep.mubr.f32.mxu0 0.0
        %2058 = vmatmul.mubr.f32.gmra.mrb[0].mxu0 %v1991
        %v2059 = vpop.f32.mrb[0].mxu0
        %v2060 = vadd.f32 %v1988, %v2059
        %v2061 = vpop.f32.mrb[0].mxu0
        %2062 = vdwg.mxu0
        %s2063 = scalar_lea.vmem %s6, 32
        %v2064 = vld [vmem:[%s2063] sm:$0xff]
        %v2065 = vld [vmem:[%s2063 + $0x8] sm:$0xff]
        %v2066 = vld [vmem:[%s2063 + $0x10] sm:$0xff]
        %v2067 = vld [vmem:[%s2063 + $0x18] sm:$0xff]
        %2069 = vrot.lane.b32.xlu0 %v2060, 96
        %v2070 = vpop.permute.xlu0 %2069
        %v2071 = vsel %vm762, %v2060, 0
        %v2073 = vsel %vm762, %v2070, 0
        %2075 = vmatprep.subr.mxu0 0.0
        %2076 = vmatpush1.xpose.msra.mxu0 %v2073
        %2077 = vmatprep.subr.mxu0 0.0
        %2078 = vmatpush1.xpose.msra.mxu0 0.0
        %2079 = vmatprep.subr.mxu0 0.0
        %2080 = vmatpush1.xpose.msra.mxu0 0.0
        %2081 = vmatprep.subr.mxu0 0.0
        %2082 = vmatpush1.xpose.msra.mxu0 0.0
        %2083 = vmatprep.subr.mxu0 0.0
        %2084 = vmatpush1.xpose.msra.mxu0 0.0
        %2085 = vmatprep.subr.mxu0 0.0
        %2086 = vmatpush1.xpose.msra.mxu0 0.0
        %2087 = vmatprep.subr.mxu0 0.0
        %2088 = vmatpush1.xpose.msra.mxu0 0.0
        %2089 = vmatprep.subr.mxu0 0.0
        %2090 = vmatpush1.xpose.msra.mxu0 0.0
        %2091 = vmatprep.subr.mxu0 0.0
        %2092 = vmatpush1.xpose.msra.mxu0 0.0
        %2093 = vmatprep.subr.mxu0 0.0
        %2094 = vmatpush1.xpose.msra.mxu0 0.0
        %2095 = vmatprep.subr.mxu0 0.0
        %2096 = vmatpush1.xpose.msra.mxu0 0.0
        %2097 = vmatprep.subr.mxu0 0.0
        %2098 = vmatpush1.xpose.msra.mxu0 0.0
        %2099 = vmatprep.subr.mxu0 0.0
        %2100 = vmatpush1.xpose.msra.mxu0 0.0
        %2101 = vmatprep.subr.mxu0 0.0
        %2102 = vmatpush1.xpose.msra.mxu0 0.0
        %2103 = vmatprep.subr.mxu0 0.0
        %2104 = vmatpush1.xpose.msra.mxu0 0.0
        %2105 = vmatprep.subr.mxu0 0.0
        %2106 = vmatpush1.xpose.msra.mxu0 0.0
        %2107 = vmatprep.subr.mxu0 0.0
        %2108 = vmatpush1.xpose.msra.mxu0 0.0
        %2109 = vmatprep.subr.mxu0 0.0
        %2110 = vmatpush1.xpose.msra.mxu0 0.0
        %2111 = vmatprep.subr.mxu0 0.0
        %2112 = vmatpush1.xpose.msra.mxu0 0.0
        %2113 = vmatprep.subr.mxu0 0.0
        %2114 = vmatpush1.xpose.msra.mxu0 0.0
        %2115 = vmatprep.subr.mxu0 0.0
        %2116 = vmatpush1.xpose.msra.mxu0 0.0
        %2117 = vmatprep.subr.mxu0 0.0
        %2118 = vmatpush1.xpose.msra.mxu0 0.0
        %2119 = vmatprep.subr.mxu0 0.0
        %2120 = vmatpush1.xpose.msra.mxu0 0.0
        %2121 = vmatprep.subr.mxu0 0.0
        %2122 = vmatpush1.xpose.msra.mxu0 0.0
        %2123 = vmatprep.subr.mxu0 0.0
        %2124 = vmatpush1.xpose.msra.mxu0 0.0
        %2125 = vmatprep.subr.mxu0 0.0
        %2126 = vmatpush1.xpose.msra.mxu0 0.0
        %2127 = vmatprep.subr.mxu0 0.0
        %2128 = vmatpush1.xpose.msra.mxu0 0.0
        %2129 = vmatprep.subr.mxu0 0.0
        %2130 = vmatpush1.xpose.msra.mxu0 0.0
        %2131 = vmatprep.subr.mxu0 0.0
        %2132 = vmatpush1.xpose.msra.mxu0 0.0
        %2133 = vmatprep.subr.mxu0 0.0
        %2134 = vmatpush1.xpose.msra.mxu0 0.0
        %2135 = vmatprep.subr.mxu0 0.0
        %2136 = vmatpush1.xpose.msra.mxu0 0.0
        %2137 = vmatprep.subr.mxu0 0.0
        %2138 = vmatpush1.xpose.msra.mxu0 0.0
        %2139 = vmatprep.mubr.f32.mxu0 0.0
        %2140 = vmatmul.mubr.f32.gmra.mrb[0].mxu0 %v2071
        %v2141 = vpop.f32.mrb[0].mxu0
        %v2142 = vadd.f32 0.0, %v2141
        %v2143 = vpop.f32.mrb[0].mxu0
        %2144 = vdwg.mxu0
        %v2145 = vmul.f32 %v2142, 0.35355338
        %v2146 = vadd.f32 %v2145, %v842
        %v2147 = vsel %vm762, %v2146, -inf
        %2148 = vmax.xlane.f32.xlu0 %v2147
        %v2149 = vpop.xlane.xlu0 %2148
        %v2150 = vsub.f32 %v2146, %v2149
        %v2151 = vmul.f32 %v2150, 1.442695
        %v2152 = vpow.pop %v2151
        %v2153 = vsel %vm762, %v2152, 0.0
        %2154 = vadd.xlane.f32.xlu0 %v2153
        %v2155 = vpop.xlane.xlu0 %2154
        %v2156 = vrcp.pop %v2155
        %v2157 = vmul.f32 %v2152, %v2156
        %2158 = vrot.lane.b32.xlu0 %v2060, 64
        %v2159 = vpop.permute.xlu0 %2158
        %v2162 = vsel %vm762, %v2157, 0
        %2164 = vmatprep.subr.mxu0 0.0
        %2165 = vmatpush1.msra.mxu0 %v2159
        %2166 = vmatprep.subr.mxu0 0.0
        %2167 = vmatpush1.msra.mxu0 0.0
        %2168 = vmatprep.subr.mxu0 0.0
        %2169 = vmatpush1.msra.mxu0 0.0
        %2170 = vmatprep.subr.mxu0 0.0
        %2171 = vmatpush1.msra.mxu0 0.0
        %2172 = vmatprep.subr.mxu0 0.0
        %2173 = vmatpush1.msra.mxu0 0.0
        %2174 = vmatprep.subr.mxu0 0.0
        %2175 = vmatpush1.msra.mxu0 0.0
        %2176 = vmatprep.subr.mxu0 0.0
        %2177 = vmatpush1.msra.mxu0 0.0
        %2178 = vmatprep.subr.mxu0 0.0
        %2179 = vmatpush1.msra.mxu0 0.0
        %2180 = vmatprep.subr.mxu0 0.0
        %2181 = vmatpush1.msra.mxu0 0.0
        %2182 = vmatprep.subr.mxu0 0.0
        %2183 = vmatpush1.msra.mxu0 0.0
        %2184 = vmatprep.subr.mxu0 0.0
        %2185 = vmatpush1.msra.mxu0 0.0
        %2186 = vmatprep.subr.mxu0 0.0
        %2187 = vmatpush1.msra.mxu0 0.0
        %2188 = vmatprep.subr.mxu0 0.0
        %2189 = vmatpush1.msra.mxu0 0.0
        %2190 = vmatprep.subr.mxu0 0.0
        %2191 = vmatpush1.msra.mxu0 0.0
        %2192 = vmatprep.subr.mxu0 0.0
        %2193 = vmatpush1.msra.mxu0 0.0
        %2194 = vmatprep.subr.mxu0 0.0
        %2195 = vmatpush1.msra.mxu0 0.0
        %2196 = vmatprep.subr.mxu0 0.0
        %2197 = vmatpush1.msra.mxu0 0.0
        %2198 = vmatprep.subr.mxu0 0.0
        %2199 = vmatpush1.msra.mxu0 0.0
        %2200 = vmatprep.subr.mxu0 0.0
        %2201 = vmatpush1.msra.mxu0 0.0
        %2202 = vmatprep.subr.mxu0 0.0
        %2203 = vmatpush1.msra.mxu0 0.0
        %2204 = vmatprep.subr.mxu0 0.0
        %2205 = vmatpush1.msra.mxu0 0.0
        %2206 = vmatprep.subr.mxu0 0.0
        %2207 = vmatpush1.msra.mxu0 0.0
        %2208 = vmatprep.subr.mxu0 0.0
        %2209 = vmatpush1.msra.mxu0 0.0
        %2210 = vmatprep.subr.mxu0 0.0
        %2211 = vmatpush1.msra.mxu0 0.0
        %2212 = vmatprep.subr.mxu0 0.0
        %2213 = vmatpush1.msra.mxu0 0.0
        %2214 = vmatprep.subr.mxu0 0.0
        %2215 = vmatpush1.msra.mxu0 0.0
        %2216 = vmatprep.subr.mxu0 0.0
        %2217 = vmatpush1.msra.mxu0 0.0
        %2218 = vmatprep.subr.mxu0 0.0
        %2219 = vmatpush1.msra.mxu0 0.0
        %2220 = vmatprep.subr.mxu0 0.0
        %2221 = vmatpush1.msra.mxu0 0.0
        %2222 = vmatprep.subr.mxu0 0.0
        %2223 = vmatpush1.msra.mxu0 0.0
        %2224 = vmatprep.subr.mxu0 0.0
        %2225 = vmatpush1.msra.mxu0 0.0
        %2226 = vmatprep.subr.mxu0 0.0
        %2227 = vmatpush1.msra.mxu0 0.0
        %2228 = vmatprep.mubr.f32.mxu0 0.0
        %2229 = vmatmul.mubr.f32.gmra.mrb[0].mxu0 %v2162
        %v2230 = vpop.f32.mrb[0].mxu0
        %v2231 = vadd.f32 0.0, %v2230
        %v2232 = vpop.f32.mrb[0].mxu0
        %2233 = vdwg.mxu0
        %2234 = vrot.lane.b32.xlu0 %v2060, 120
        %v2235 = vpop.permute.xlu0 %2234
        %2236 = vrot.lane.b32.xlu0 %v2060, 88
        %v2237 = vpop.permute.xlu0 %2236
        %v2238 = vsel %vm762, %v2235, 0
        %v2240 = vsel %vm762, %v2237, 0
        %2242 = vmatprep.subr.mxu0 0.0
        %2243 = vmatpush1.xpose.msra.mxu0 %v2240
        %2244 = vmatprep.subr.mxu0 0.0
        %2245 = vmatpush1.xpose.msra.mxu0 0.0
        %2246 = vmatprep.subr.mxu0 0.0
        %2247 = vmatpush1.xpose.msra.mxu0 0.0
        %2248 = vmatprep.subr.mxu0 0.0
        %2249 = vmatpush1.xpose.msra.mxu0 0.0
        %2250 = vmatprep.subr.mxu0 0.0
        %2251 = vmatpush1.xpose.msra.mxu0 0.0
        %2252 = vmatprep.subr.mxu0 0.0
        %2253 = vmatpush1.xpose.msra.mxu0 0.0
        %2254 = vmatprep.subr.mxu0 0.0
        %2255 = vmatpush1.xpose.msra.mxu0 0.0
        %2256 = vmatprep.subr.mxu0 0.0
        %2257 = vmatpush1.xpose.msra.mxu0 0.0
        %2258 = vmatprep.subr.mxu0 0.0
        %2259 = vmatpush1.xpose.msra.mxu0 0.0
        %2260 = vmatprep.subr.mxu0 0.0
        %2261 = vmatpush1.xpose.msra.mxu0 0.0
        %2262 = vmatprep.subr.mxu0 0.0
        %2263 = vmatpush1.xpose.msra.mxu0 0.0
        %2264 = vmatprep.subr.mxu0 0.0
        %2265 = vmatpush1.xpose.msra.mxu0 0.0
        %2266 = vmatprep.subr.mxu0 0.0
        %2267 = vmatpush1.xpose.msra.mxu0 0.0
        %2268 = vmatprep.subr.mxu0 0.0
        %2269 = vmatpush1.xpose.msra.mxu0 0.0
        %2270 = vmatprep.subr.mxu0 0.0
        %2271 = vmatpush1.xpose.msra.mxu0 0.0
        %2272 = vmatprep.subr.mxu0 0.0
        %2273 = vmatpush1.xpose.msra.mxu0 0.0
        %2274 = vmatprep.subr.mxu0 0.0
        %2275 = vmatpush1.xpose.msra.mxu0 0.0
        %2276 = vmatprep.subr.mxu0 0.0
        %2277 = vmatpush1.xpose.msra.mxu0 0.0
        %2278 = vmatprep.subr.mxu0 0.0
        %2279 = vmatpush1.xpose.msra.mxu0 0.0
        %2280 = vmatprep.subr.mxu0 0.0
        %2281 = vmatpush1.xpose.msra.mxu0 0.0
        %2282 = vmatprep.subr.mxu0 0.0
        %2283 = vmatpush1.xpose.msra.mxu0 0.0
        %2284 = vmatprep.subr.mxu0 0.0
        %2285 = vmatpush1.xpose.msra.mxu0 0.0
        %2286 = vmatprep.subr.mxu0 0.0
        %2287 = vmatpush1.xpose.msra.mxu0 0.0
        %2288 = vmatprep.subr.mxu0 0.0
        %2289 = vmatpush1.xpose.msra.mxu0 0.0
        %2290 = vmatprep.subr.mxu0 0.0
        %2291 = vmatpush1.xpose.msra.mxu0 0.0
        %2292 = vmatprep.subr.mxu0 0.0
        %2293 = vmatpush1.xpose.msra.mxu0 0.0
        %2294 = vmatprep.subr.mxu0 0.0
        %2295 = vmatpush1.xpose.msra.mxu0 0.0
        %2296 = vmatprep.subr.mxu0 0.0
        %2297 = vmatpush1.xpose.msra.mxu0 0.0
        %2298 = vmatprep.subr.mxu0 0.0
        %2299 = vmatpush1.xpose.msra.mxu0 0.0
        %2300 = vmatprep.subr.mxu0 0.0
        %2301 = vmatpush1.xpose.msra.mxu0 0.0
        %2302 = vmatprep.subr.mxu0 0.0
        %2303 = vmatpush1.xpose.msra.mxu0 0.0
        %2304 = vmatprep.subr.mxu0 0.0
        %2305 = vmatpush1.xpose.msra.mxu0 0.0
        %2306 = vmatprep.mubr.f32.mxu0 0.0
        %2307 = vmatmul.mubr.f32.gmra.mrb[0].mxu0 %v2238
        %v2308 = vpop.f32.mrb[0].mxu0
        %v2309 = vadd.f32 0.0, %v2308
        %v2310 = vpop.f32.mrb[0].mxu0
        %2311 = vdwg.mxu0
        %v2312 = vmul.f32 %v2309, 0.35355338
        %v2313 = vadd.f32 %v2312, %v842
        %v2314 = vsel %vm762, %v2313, -inf
        %2315 = vmax.xlane.f32.xlu0 %v2314
        %v2316 = vpop.xlane.xlu0 %2315
        %v2317 = vsub.f32 %v2313, %v2316
        %v2318 = vmul.f32 %v2317, 1.442695
        %v2319 = vpow.pop %v2318
        %v2320 = vsel %vm762, %v2319, 0.0
        %2321 = vadd.xlane.f32.xlu0 %v2320
        %v2322 = vpop.xlane.xlu0 %2321
        %v2323 = vrcp.pop %v2322
        %v2324 = vmul.f32 %v2319, %v2323
        %2325 = vrot.lane.b32.xlu0 %v2060, 56
        %v2326 = vpop.permute.xlu0 %2325
        %v2329 = vsel %vm762, %v2324, 0
        %2331 = vmatprep.subr.mxu0 0.0
        %2332 = vmatpush1.msra.mxu0 %v2326
        %2333 = vmatprep.subr.mxu0 0.0
        %2334 = vmatpush1.msra.mxu0 0.0
        %2335 = vmatprep.subr.mxu0 0.0
        %2336 = vmatpush1.msra.mxu0 0.0
        %2337 = vmatprep.subr.mxu0 0.0
        %2338 = vmatpush1.msra.mxu0 0.0
        %2339 = vmatprep.subr.mxu0 0.0
        %2340 = vmatpush1.msra.mxu0 0.0
        %2341 = vmatprep.subr.mxu0 0.0
        %2342 = vmatpush1.msra.mxu0 0.0
        %2343 = vmatprep.subr.mxu0 0.0
        %2344 = vmatpush1.msra.mxu0 0.0
        %2345 = vmatprep.subr.mxu0 0.0
        %2346 = vmatpush1.msra.mxu0 0.0
        %2347 = vmatprep.subr.mxu0 0.0
        %2348 = vmatpush1.msra.mxu0 0.0
        %2349 = vmatprep.subr.mxu0 0.0
        %2350 = vmatpush1.msra.mxu0 0.0
        %2351 = vmatprep.subr.mxu0 0.0
        %2352 = vmatpush1.msra.mxu0 0.0
        %2353 = vmatprep.subr.mxu0 0.0
        %2354 = vmatpush1.msra.mxu0 0.0
        %2355 = vmatprep.subr.mxu0 0.0
        %2356 = vmatpush1.msra.mxu0 0.0
        %2357 = vmatprep.subr.mxu0 0.0
        %2358 = vmatpush1.msra.mxu0 0.0
        %2359 = vmatprep.subr.mxu0 0.0
        %2360 = vmatpush1.msra.mxu0 0.0
        %2361 = vmatprep.subr.mxu0 0.0
        %2362 = vmatpush1.msra.mxu0 0.0
        %2363 = vmatprep.subr.mxu0 0.0
        %2364 = vmatpush1.msra.mxu0 0.0
        %2365 = vmatprep.subr.mxu0 0.0
        %2366 = vmatpush1.msra.mxu0 0.0
        %2367 = vmatprep.subr.mxu0 0.0
        %2368 = vmatpush1.msra.mxu0 0.0
        %2369 = vmatprep.subr.mxu0 0.0
        %2370 = vmatpush1.msra.mxu0 0.0
        %2371 = vmatprep.subr.mxu0 0.0
        %2372 = vmatpush1.msra.mxu0 0.0
        %2373 = vmatprep.subr.mxu0 0.0
        %2374 = vmatpush1.msra.mxu0 0.0
        %2375 = vmatprep.subr.mxu0 0.0
        %2376 = vmatpush1.msra.mxu0 0.0
        %2377 = vmatprep.subr.mxu0 0.0
        %2378 = vmatpush1.msra.mxu0 0.0
        %2379 = vmatprep.subr.mxu0 0.0
        %2380 = vmatpush1.msra.mxu0 0.0
        %2381 = vmatprep.subr.mxu0 0.0
        %2382 = vmatpush1.msra.mxu0 0.0
        %2383 = vmatprep.subr.mxu0 0.0
        %2384 = vmatpush1.msra.mxu0 0.0
        %2385 = vmatprep.subr.mxu0 0.0
        %2386 = vmatpush1.msra.mxu0 0.0
        %2387 = vmatprep.subr.mxu0 0.0
        %2388 = vmatpush1.msra.mxu0 0.0
        %2389 = vmatprep.subr.mxu0 0.0
        %2390 = vmatpush1.msra.mxu0 0.0
        %2391 = vmatprep.subr.mxu0 0.0
        %2392 = vmatpush1.msra.mxu0 0.0
        %2393 = vmatprep.subr.mxu0 0.0
        %2394 = vmatpush1.msra.mxu0 0.0
        %2395 = vmatprep.mubr.f32.mxu0 0.0
        %2396 = vmatmul.mubr.f32.gmra.mrb[0].mxu0 %v2329
        %v2397 = vpop.f32.mrb[0].mxu0
        %v2398 = vadd.f32 0.0, %v2397
        %v2399 = vpop.f32.mrb[0].mxu0
        %2400 = vdwg.mxu0
        %v2402 = vsel %vm762, %v2398, 0
        %2404 = vmatprep.subr.mxu0 0.0
        %2405 = vmatpush1.msra.mxu0 %v2065
        %2406 = vmatprep.subr.mxu0 0.0
        %2407 = vmatpush1.msra.mxu0 0.0
        %2408 = vmatprep.subr.mxu0 0.0
        %2409 = vmatpush1.msra.mxu0 0.0
        %2410 = vmatprep.subr.mxu0 0.0
        %2411 = vmatpush1.msra.mxu0 0.0
        %2412 = vmatprep.subr.mxu0 0.0
        %2413 = vmatpush1.msra.mxu0 0.0
        %2414 = vmatprep.subr.mxu0 0.0
        %2415 = vmatpush1.msra.mxu0 0.0
        %2416 = vmatprep.subr.mxu0 0.0
        %2417 = vmatpush1.msra.mxu0 0.0
        %2418 = vmatprep.subr.mxu0 0.0
        %2419 = vmatpush1.msra.mxu0 0.0
        %2420 = vmatprep.subr.mxu0 0.0
        %2421 = vmatpush1.msra.mxu0 0.0
        %2422 = vmatprep.subr.mxu0 0.0
        %2423 = vmatpush1.msra.mxu0 0.0
        %2424 = vmatprep.subr.mxu0 0.0
        %2425 = vmatpush1.msra.mxu0 0.0
        %2426 = vmatprep.subr.mxu0 0.0
        %2427 = vmatpush1.msra.mxu0 0.0
        %2428 = vmatprep.subr.mxu0 0.0
        %2429 = vmatpush1.msra.mxu0 0.0
        %2430 = vmatprep.subr.mxu0 0.0
        %2431 = vmatpush1.msra.mxu0 0.0
        %2432 = vmatprep.subr.mxu0 0.0
        %2433 = vmatpush1.msra.mxu0 0.0
        %2434 = vmatprep.subr.mxu0 0.0
        %2435 = vmatpush1.msra.mxu0 0.0
        %2436 = vmatprep.subr.mxu0 0.0
        %2437 = vmatpush1.msra.mxu0 0.0
        %2438 = vmatprep.subr.mxu0 0.0
        %2439 = vmatpush1.msra.mxu0 0.0
        %2440 = vmatprep.subr.mxu0 0.0
        %2441 = vmatpush1.msra.mxu0 0.0
        %2442 = vmatprep.subr.mxu0 0.0
        %2443 = vmatpush1.msra.mxu0 0.0
        %2444 = vmatprep.subr.mxu0 0.0
        %2445 = vmatpush1.msra.mxu0 0.0
        %2446 = vmatprep.subr.mxu0 0.0
        %2447 = vmatpush1.msra.mxu0 0.0
        %2448 = vmatprep.subr.mxu0 0.0
        %2449 = vmatpush1.msra.mxu0 0.0
        %2450 = vmatprep.subr.mxu0 0.0
        %2451 = vmatpush1.msra.mxu0 0.0
        %2452 = vmatprep.subr.mxu0 0.0
        %2453 = vmatpush1.msra.mxu0 0.0
        %2454 = vmatprep.subr.mxu0 0.0
        %2455 = vmatpush1.msra.mxu0 0.0
        %2456 = vmatprep.subr.mxu0 0.0
        %2457 = vmatpush1.msra.mxu0 0.0
        %2458 = vmatprep.subr.mxu0 0.0
        %2459 = vmatpush1.msra.mxu0 0.0
        %2460 = vmatprep.subr.mxu0 0.0
        %2461 = vmatpush1.msra.mxu0 0.0
        %2462 = vmatprep.subr.mxu0 0.0
        %2463 = vmatpush1.msra.mxu0 0.0
        %2464 = vmatprep.subr.mxu0 0.0
        %2465 = vmatpush1.msra.mxu0 0.0
        %2466 = vmatprep.subr.mxu0 0.0
        %2467 = vmatpush1.msra.mxu0 0.0
        %2468 = vmatprep.mubr.f32.mxu0 0.0
        %2469 = vmatmul.mubr.f32.gmra.mrb[0].mxu0 %v2402
        %v2470 = vpop.f32.mrb[0].mxu0
        %v2471 = vadd.f32 0.0, %v2470
        %v2472 = vpop.f32.mrb[0].mxu0
        %2473 = vdwg.mxu0
        %v2475 = vsel %vm762, %v2231, 0
        %2477 = vmatprep.subr.mxu0 0.0
        %2478 = vmatpush1.msra.mxu0 %v2064
        %2479 = vmatprep.subr.mxu0 0.0
        %2480 = vmatpush1.msra.mxu0 0.0
        %2481 = vmatprep.subr.mxu0 0.0
        %2482 = vmatpush1.msra.mxu0 0.0
        %2483 = vmatprep.subr.mxu0 0.0
        %2484 = vmatpush1.msra.mxu0 0.0
        %2485 = vmatprep.subr.mxu0 0.0
        %2486 = vmatpush1.msra.mxu0 0.0
        %2487 = vmatprep.subr.mxu0 0.0
        %2488 = vmatpush1.msra.mxu0 0.0
        %2489 = vmatprep.subr.mxu0 0.0
        %2490 = vmatpush1.msra.mxu0 0.0
        %2491 = vmatprep.subr.mxu0 0.0
        %2492 = vmatpush1.msra.mxu0 0.0
        %2493 = vmatprep.subr.mxu0 0.0
        %2494 = vmatpush1.msra.mxu0 0.0
        %2495 = vmatprep.subr.mxu0 0.0
        %2496 = vmatpush1.msra.mxu0 0.0
        %2497 = vmatprep.subr.mxu0 0.0
        %2498 = vmatpush1.msra.mxu0 0.0
        %2499 = vmatprep.subr.mxu0 0.0
        %2500 = vmatpush1.msra.mxu0 0.0
        %2501 = vmatprep.subr.mxu0 0.0
        %2502 = vmatpush1.msra.mxu0 0.0
        %2503 = vmatprep.subr.mxu0 0.0
        %2504 = vmatpush1.msra.mxu0 0.0
        %2505 = vmatprep.subr.mxu0 0.0
        %2506 = vmatpush1.msra.mxu0 0.0
        %2507 = vmatprep.subr.mxu0 0.0
        %2508 = vmatpush1.msra.mxu0 0.0
        %2509 = vmatprep.subr.mxu0 0.0
        %2510 = vmatpush1.msra.mxu0 0.0
        %2511 = vmatprep.subr.mxu0 0.0
        %2512 = vmatpush1.msra.mxu0 0.0
        %2513 = vmatprep.subr.mxu0 0.0
        %2514 = vmatpush1.msra.mxu0 0.0
        %2515 = vmatprep.subr.mxu0 0.0
        %2516 = vmatpush1.msra.mxu0 0.0
        %2517 = vmatprep.subr.mxu0 0.0
        %2518 = vmatpush1.msra.mxu0 0.0
        %2519 = vmatprep.subr.mxu0 0.0
        %2520 = vmatpush1.msra.mxu0 0.0
        %2521 = vmatprep.subr.mxu0 0.0
        %2522 = vmatpush1.msra.mxu0 0.0
        %2523 = vmatprep.subr.mxu0 0.0
        %2524 = vmatpush1.msra.mxu0 0.0
        %2525 = vmatprep.subr.mxu0 0.0
        %2526 = vmatpush1.msra.mxu0 0.0
        %2527 = vmatprep.subr.mxu0 0.0
        %2528 = vmatpush1.msra.mxu0 0.0
        %2529 = vmatprep.subr.mxu0 0.0
        %2530 = vmatpush1.msra.mxu0 0.0
        %2531 = vmatprep.subr.mxu0 0.0
        %2532 = vmatpush1.msra.mxu0 0.0
        %2533 = vmatprep.subr.mxu0 0.0
        %2534 = vmatpush1.msra.mxu0 0.0
        %2535 = vmatprep.subr.mxu0 0.0
        %2536 = vmatpush1.msra.mxu0 0.0
        %2537 = vmatprep.subr.mxu0 0.0
        %2538 = vmatpush1.msra.mxu0 0.0
        %2539 = vmatprep.subr.mxu0 0.0
        %2540 = vmatpush1.msra.mxu0 0.0
        %2541 = vmatprep.mubr.f32.mxu0 0.0
        %2542 = vmatmul.mubr.f32.gmra.mrb[0].mxu0 %v2475
        %v2543 = vpop.f32.mrb[0].mxu0
        %v2544 = vadd.f32 %v2471, %v2543
        %v2545 = vpop.f32.mrb[0].mxu0
        %2546 = vdwg.mxu0
        %2547 = vrot.lane.b32.xlu0 %v2060, 112
        %v2548 = vpop.permute.xlu0 %2547
        %2549 = vrot.lane.b32.xlu0 %v2060, 80
        %v2550 = vpop.permute.xlu0 %2549
        %v2551 = vsel %vm762, %v2548, 0
        %v2553 = vsel %vm762, %v2550, 0
        %2555 = vmatprep.subr.mxu0 0.0
        %2556 = vmatpush1.xpose.msra.mxu0 %v2553
        %2557 = vmatprep.subr.mxu0 0.0
        %2558 = vmatpush1.xpose.msra.mxu0 0.0
        %2559 = vmatprep.subr.mxu0 0.0
        %2560 = vmatpush1.xpose.msra.mxu0 0.0
        %2561 = vmatprep.subr.mxu0 0.0
        %2562 = vmatpush1.xpose.msra.mxu0 0.0
        %2563 = vmatprep.subr.mxu0 0.0
        %2564 = vmatpush1.xpose.msra.mxu0 0.0
        %2565 = vmatprep.subr.mxu0 0.0
        %2566 = vmatpush1.xpose.msra.mxu0 0.0
        %2567 = vmatprep.subr.mxu0 0.0
        %2568 = vmatpush1.xpose.msra.mxu0 0.0
        %2569 = vmatprep.subr.mxu0 0.0
        %2570 = vmatpush1.xpose.msra.mxu0 0.0
        %2571 = vmatprep.subr.mxu0 0.0
        %2572 = vmatpush1.xpose.msra.mxu0 0.0
        %2573 = vmatprep.subr.mxu0 0.0
        %2574 = vmatpush1.xpose.msra.mxu0 0.0
        %2575 = vmatprep.subr.mxu0 0.0
        %2576 = vmatpush1.xpose.msra.mxu0 0.0
        %2577 = vmatprep.subr.mxu0 0.0
        %2578 = vmatpush1.xpose.msra.mxu0 0.0
        %2579 = vmatprep.subr.mxu0 0.0
        %2580 = vmatpush1.xpose.msra.mxu0 0.0
        %2581 = vmatprep.subr.mxu0 0.0
        %2582 = vmatpush1.xpose.msra.mxu0 0.0
        %2583 = vmatprep.subr.mxu0 0.0
        %2584 = vmatpush1.xpose.msra.mxu0 0.0
        %2585 = vmatprep.subr.mxu0 0.0
        %2586 = vmatpush1.xpose.msra.mxu0 0.0
        %2587 = vmatprep.subr.mxu0 0.0
        %2588 = vmatpush1.xpose.msra.mxu0 0.0
        %2589 = vmatprep.subr.mxu0 0.0
        %2590 = vmatpush1.xpose.msra.mxu0 0.0
        %2591 = vmatprep.subr.mxu0 0.0
        %2592 = vmatpush1.xpose.msra.mxu0 0.0
        %2593 = vmatprep.subr.mxu0 0.0
        %2594 = vmatpush1.xpose.msra.mxu0 0.0
        %2595 = vmatprep.subr.mxu0 0.0
        %2596 = vmatpush1.xpose.msra.mxu0 0.0
        %2597 = vmatprep.subr.mxu0 0.0
        %2598 = vmatpush1.xpose.msra.mxu0 0.0
        %2599 = vmatprep.subr.mxu0 0.0
        %2600 = vmatpush1.xpose.msra.mxu0 0.0
        %2601 = vmatprep.subr.mxu0 0.0
        %2602 = vmatpush1.xpose.msra.mxu0 0.0
        %2603 = vmatprep.subr.mxu0 0.0
        %2604 = vmatpush1.xpose.msra.mxu0 0.0
        %2605 = vmatprep.subr.mxu0 0.0
        %2606 = vmatpush1.xpose.msra.mxu0 0.0
        %2607 = vmatprep.subr.mxu0 0.0
        %2608 = vmatpush1.xpose.msra.mxu0 0.0
        %2609 = vmatprep.subr.mxu0 0.0
        %2610 = vmatpush1.xpose.msra.mxu0 0.0
        %2611 = vmatprep.subr.mxu0 0.0
        %2612 = vmatpush1.xpose.msra.mxu0 0.0
        %2613 = vmatprep.subr.mxu0 0.0
        %2614 = vmatpush1.xpose.msra.mxu0 0.0
        %2615 = vmatprep.subr.mxu0 0.0
        %2616 = vmatpush1.xpose.msra.mxu0 0.0
        %2617 = vmatprep.subr.mxu0 0.0
        %2618 = vmatpush1.xpose.msra.mxu0 0.0
        %2619 = vmatprep.mubr.f32.mxu0 0.0
        %2620 = vmatmul.mubr.f32.gmra.mrb[0].mxu0 %v2551
        %v2621 = vpop.f32.mrb[0].mxu0
        %v2622 = vadd.f32 0.0, %v2621
        %v2623 = vpop.f32.mrb[0].mxu0
        %2624 = vdwg.mxu0
        %v2625 = vmul.f32 %v2622, 0.35355338
        %v2626 = vadd.f32 %v2625, %v842
        %v2627 = vsel %vm762, %v2626, -inf
        %2628 = vmax.xlane.f32.xlu0 %v2627
        %v2629 = vpop.xlane.xlu0 %2628
        %v2630 = vsub.f32 %v2626, %v2629
        %v2631 = vmul.f32 %v2630, 1.442695
        %v2632 = vpow.pop %v2631
        %v2633 = vsel %vm762, %v2632, 0.0
        %2634 = vadd.xlane.f32.xlu0 %v2633
        %v2635 = vpop.xlane.xlu0 %2634
        %v2636 = vrcp.pop %v2635
        %v2637 = vmul.f32 %v2632, %v2636
        %2638 = vrot.lane.b32.xlu0 %v2060, 48
        %v2639 = vpop.permute.xlu0 %2638
        %v2642 = vsel %vm762, %v2637, 0
        %2644 = vmatprep.subr.mxu0 0.0
        %2645 = vmatpush1.msra.mxu0 %v2639
        %2646 = vmatprep.subr.mxu0 0.0
        %2647 = vmatpush1.msra.mxu0 0.0
        %2648 = vmatprep.subr.mxu0 0.0
        %2649 = vmatpush1.msra.mxu0 0.0
        %2650 = vmatprep.subr.mxu0 0.0
        %2651 = vmatpush1.msra.mxu0 0.0
        %2652 = vmatprep.subr.mxu0 0.0
        %2653 = vmatpush1.msra.mxu0 0.0
        %2654 = vmatprep.subr.mxu0 0.0
        %2655 = vmatpush1.msra.mxu0 0.0
        %2656 = vmatprep.subr.mxu0 0.0
        %2657 = vmatpush1.msra.mxu0 0.0
        %2658 = vmatprep.subr.mxu0 0.0
        %2659 = vmatpush1.msra.mxu0 0.0
        %2660 = vmatprep.subr.mxu0 0.0
        %2661 = vmatpush1.msra.mxu0 0.0
        %2662 = vmatprep.subr.mxu0 0.0
        %2663 = vmatpush1.msra.mxu0 0.0
        %2664 = vmatprep.subr.mxu0 0.0
        %2665 = vmatpush1.msra.mxu0 0.0
        %2666 = vmatprep.subr.mxu0 0.0
        %2667 = vmatpush1.msra.mxu0 0.0
        %2668 = vmatprep.subr.mxu0 0.0
        %2669 = vmatpush1.msra.mxu0 0.0
        %2670 = vmatprep.subr.mxu0 0.0
        %2671 = vmatpush1.msra.mxu0 0.0
        %2672 = vmatprep.subr.mxu0 0.0
        %2673 = vmatpush1.msra.mxu0 0.0
        %2674 = vmatprep.subr.mxu0 0.0
        %2675 = vmatpush1.msra.mxu0 0.0
        %2676 = vmatprep.subr.mxu0 0.0
        %2677 = vmatpush1.msra.mxu0 0.0
        %2678 = vmatprep.subr.mxu0 0.0
        %2679 = vmatpush1.msra.mxu0 0.0
        %2680 = vmatprep.subr.mxu0 0.0
        %2681 = vmatpush1.msra.mxu0 0.0
        %2682 = vmatprep.subr.mxu0 0.0
        %2683 = vmatpush1.msra.mxu0 0.0
        %2684 = vmatprep.subr.mxu0 0.0
        %2685 = vmatpush1.msra.mxu0 0.0
        %2686 = vmatprep.subr.mxu0 0.0
        %2687 = vmatpush1.msra.mxu0 0.0
        %2688 = vmatprep.subr.mxu0 0.0
        %2689 = vmatpush1.msra.mxu0 0.0
        %2690 = vmatprep.subr.mxu0 0.0
        %2691 = vmatpush1.msra.mxu0 0.0
        %2692 = vmatprep.subr.mxu0 0.0
        %2693 = vmatpush1.msra.mxu0 0.0
        %2694 = vmatprep.subr.mxu0 0.0
        %2695 = vmatpush1.msra.mxu0 0.0
        %2696 = vmatprep.subr.mxu0 0.0
        %2697 = vmatpush1.msra.mxu0 0.0
        %2698 = vmatprep.subr.mxu0 0.0
        %2699 = vmatpush1.msra.mxu0 0.0
        %2700 = vmatprep.subr.mxu0 0.0
        %2701 = vmatpush1.msra.mxu0 0.0
        %2702 = vmatprep.subr.mxu0 0.0
        %2703 = vmatpush1.msra.mxu0 0.0
        %2704 = vmatprep.subr.mxu0 0.0
        %2705 = vmatpush1.msra.mxu0 0.0
        %2706 = vmatprep.subr.mxu0 0.0
        %2707 = vmatpush1.msra.mxu0 0.0
        %2708 = vmatprep.mubr.f32.mxu0 0.0
        %2709 = vmatmul.mubr.f32.gmra.mrb[0].mxu0 %v2642
        %v2710 = vpop.f32.mrb[0].mxu0
        %v2711 = vadd.f32 0.0, %v2710
        %v2712 = vpop.f32.mrb[0].mxu0
        %2713 = vdwg.mxu0
        %v2715 = vsel %vm762, %v2711, 0
        %2717 = vmatprep.subr.mxu0 0.0
        %2718 = vmatpush1.msra.mxu0 %v2066
        %2719 = vmatprep.subr.mxu0 0.0
        %2720 = vmatpush1.msra.mxu0 0.0
        %2721 = vmatprep.subr.mxu0 0.0
        %2722 = vmatpush1.msra.mxu0 0.0
        %2723 = vmatprep.subr.mxu0 0.0
        %2724 = vmatpush1.msra.mxu0 0.0
        %2725 = vmatprep.subr.mxu0 0.0
        %2726 = vmatpush1.msra.mxu0 0.0
        %2727 = vmatprep.subr.mxu0 0.0
        %2728 = vmatpush1.msra.mxu0 0.0
        %2729 = vmatprep.subr.mxu0 0.0
        %2730 = vmatpush1.msra.mxu0 0.0
        %2731 = vmatprep.subr.mxu0 0.0
        %2732 = vmatpush1.msra.mxu0 0.0
        %2733 = vmatprep.subr.mxu0 0.0
        %2734 = vmatpush1.msra.mxu0 0.0
        %2735 = vmatprep.subr.mxu0 0.0
        %2736 = vmatpush1.msra.mxu0 0.0
        %2737 = vmatprep.subr.mxu0 0.0
        %2738 = vmatpush1.msra.mxu0 0.0
        %2739 = vmatprep.subr.mxu0 0.0
        %2740 = vmatpush1.msra.mxu0 0.0
        %2741 = vmatprep.subr.mxu0 0.0
        %2742 = vmatpush1.msra.mxu0 0.0
        %2743 = vmatprep.subr.mxu0 0.0
        %2744 = vmatpush1.msra.mxu0 0.0
        %2745 = vmatprep.subr.mxu0 0.0
        %2746 = vmatpush1.msra.mxu0 0.0
        %2747 = vmatprep.subr.mxu0 0.0
        %2748 = vmatpush1.msra.mxu0 0.0
        %2749 = vmatprep.subr.mxu0 0.0
        %2750 = vmatpush1.msra.mxu0 0.0
        %2751 = vmatprep.subr.mxu0 0.0
        %2752 = vmatpush1.msra.mxu0 0.0
        %2753 = vmatprep.subr.mxu0 0.0
        %2754 = vmatpush1.msra.mxu0 0.0
        %2755 = vmatprep.subr.mxu0 0.0
        %2756 = vmatpush1.msra.mxu0 0.0
        %2757 = vmatprep.subr.mxu0 0.0
        %2758 = vmatpush1.msra.mxu0 0.0
        %2759 = vmatprep.subr.mxu0 0.0
        %2760 = vmatpush1.msra.mxu0 0.0
        %2761 = vmatprep.subr.mxu0 0.0
        %2762 = vmatpush1.msra.mxu0 0.0
        %2763 = vmatprep.subr.mxu0 0.0
        %2764 = vmatpush1.msra.mxu0 0.0
        %2765 = vmatprep.subr.mxu0 0.0
        %2766 = vmatpush1.msra.mxu0 0.0
        %2767 = vmatprep.subr.mxu0 0.0
        %2768 = vmatpush1.msra.mxu0 0.0
        %2769 = vmatprep.subr.mxu0 0.0
        %2770 = vmatpush1.msra.mxu0 0.0
        %2771 = vmatprep.subr.mxu0 0.0
        %2772 = vmatpush1.msra.mxu0 0.0
        %2773 = vmatprep.subr.mxu0 0.0
        %2774 = vmatpush1.msra.mxu0 0.0
        %2775 = vmatprep.subr.mxu0 0.0
        %2776 = vmatpush1.msra.mxu0 0.0
        %2777 = vmatprep.subr.mxu0 0.0
        %2778 = vmatpush1.msra.mxu0 0.0
        %2779 = vmatprep.subr.mxu0 0.0
        %2780 = vmatpush1.msra.mxu0 0.0
        %2781 = vmatprep.mubr.f32.mxu0 0.0
        %2782 = vmatmul.mubr.f32.gmra.mrb[0].mxu0 %v2715
        %v2783 = vpop.f32.mrb[0].mxu0
        %v2784 = vadd.f32 0.0, %v2783
        %v2785 = vpop.f32.mrb[0].mxu0
        %2786 = vdwg.mxu0
        %v2787 = vadd.f32 %v2544, %v2784
        %2788 = vrot.lane.b32.xlu0 %v2060, 104
        %v2789 = vpop.permute.xlu0 %2788
        %2790 = vrot.lane.b32.xlu0 %v2060, 72
        %v2791 = vpop.permute.xlu0 %2790
        %v2792 = vsel %vm762, %v2789, 0
        %v2794 = vsel %vm762, %v2791, 0
        %2796 = vmatprep.subr.mxu0 0.0
        %2797 = vmatpush1.xpose.msra.mxu0 %v2794
        %2798 = vmatprep.subr.mxu0 0.0
        %2799 = vmatpush1.xpose.msra.mxu0 0.0
        %2800 = vmatprep.subr.mxu0 0.0
        %2801 = vmatpush1.xpose.msra.mxu0 0.0
        %2802 = vmatprep.subr.mxu0 0.0
        %2803 = vmatpush1.xpose.msra.mxu0 0.0
        %2804 = vmatprep.subr.mxu0 0.0
        %2805 = vmatpush1.xpose.msra.mxu0 0.0
        %2806 = vmatprep.subr.mxu0 0.0
        %2807 = vmatpush1.xpose.msra.mxu0 0.0
        %2808 = vmatprep.subr.mxu0 0.0
        %2809 = vmatpush1.xpose.msra.mxu0 0.0
        %2810 = vmatprep.subr.mxu0 0.0
        %2811 = vmatpush1.xpose.msra.mxu0 0.0
        %2812 = vmatprep.subr.mxu0 0.0
        %2813 = vmatpush1.xpose.msra.mxu0 0.0
        %2814 = vmatprep.subr.mxu0 0.0
        %2815 = vmatpush1.xpose.msra.mxu0 0.0
        %2816 = vmatprep.subr.mxu0 0.0
        %2817 = vmatpush1.xpose.msra.mxu0 0.0
        %2818 = vmatprep.subr.mxu0 0.0
        %2819 = vmatpush1.xpose.msra.mxu0 0.0
        %2820 = vmatprep.subr.mxu0 0.0
        %2821 = vmatpush1.xpose.msra.mxu0 0.0
        %2822 = vmatprep.subr.mxu0 0.0
        %2823 = vmatpush1.xpose.msra.mxu0 0.0
        %2824 = vmatprep.subr.mxu0 0.0
        %2825 = vmatpush1.xpose.msra.mxu0 0.0
        %2826 = vmatprep.subr.mxu0 0.0
        %2827 = vmatpush1.xpose.msra.mxu0 0.0
        %2828 = vmatprep.subr.mxu0 0.0
        %2829 = vmatpush1.xpose.msra.mxu0 0.0
        %2830 = vmatprep.subr.mxu0 0.0
        %2831 = vmatpush1.xpose.msra.mxu0 0.0
        %2832 = vmatprep.subr.mxu0 0.0
        %2833 = vmatpush1.xpose.msra.mxu0 0.0
        %2834 = vmatprep.subr.mxu0 0.0
        %2835 = vmatpush1.xpose.msra.mxu0 0.0
        %2836 = vmatprep.subr.mxu0 0.0
        %2837 = vmatpush1.xpose.msra.mxu0 0.0
        %2838 = vmatprep.subr.mxu0 0.0
        %2839 = vmatpush1.xpose.msra.mxu0 0.0
        %2840 = vmatprep.subr.mxu0 0.0
        %2841 = vmatpush1.xpose.msra.mxu0 0.0
        %2842 = vmatprep.subr.mxu0 0.0
        %2843 = vmatpush1.xpose.msra.mxu0 0.0
        %2844 = vmatprep.subr.mxu0 0.0
        %2845 = vmatpush1.xpose.msra.mxu0 0.0
        %2846 = vmatprep.subr.mxu0 0.0
        %2847 = vmatpush1.xpose.msra.mxu0 0.0
        %2848 = vmatprep.subr.mxu0 0.0
        %2849 = vmatpush1.xpose.msra.mxu0 0.0
        %2850 = vmatprep.subr.mxu0 0.0
        %2851 = vmatpush1.xpose.msra.mxu0 0.0
        %2852 = vmatprep.subr.mxu0 0.0
        %2853 = vmatpush1.xpose.msra.mxu0 0.0
        %2854 = vmatprep.subr.mxu0 0.0
        %2855 = vmatpush1.xpose.msra.mxu0 0.0
        %2856 = vmatprep.subr.mxu0 0.0
        %2857 = vmatpush1.xpose.msra.mxu0 0.0
        %2858 = vmatprep.subr.mxu0 0.0
        %2859 = vmatpush1.xpose.msra.mxu0 0.0
        %2860 = vmatprep.mubr.f32.mxu0 0.0
        %2861 = vmatmul.mubr.f32.gmra.mrb[0].mxu0 %v2792
        %v2862 = vpop.f32.mrb[0].mxu0
        %v2863 = vadd.f32 0.0, %v2862
        %v2864 = vpop.f32.mrb[0].mxu0
        %2865 = vdwg.mxu0
        %v2866 = vmul.f32 %v2863, 0.35355338
        %v2867 = vadd.f32 %v2866, %v842
        %v2868 = vsel %vm762, %v2867, -inf
        %2869 = vmax.xlane.f32.xlu0 %v2868
        %v2870 = vpop.xlane.xlu0 %2869
        %v2871 = vsub.f32 %v2867, %v2870
        %v2872 = vmul.f32 %v2871, 1.442695
        %v2873 = vpow.pop %v2872
        %v2874 = vsel %vm762, %v2873, 0.0
        %2875 = vadd.xlane.f32.xlu0 %v2874
        %v2876 = vpop.xlane.xlu0 %2875
        %v2877 = vrcp.pop %v2876
        %v2878 = vmul.f32 %v2873, %v2877
        %2879 = vrot.lane.b32.xlu0 %v2060, 40
        %v2880 = vpop.permute.xlu0 %2879
        %v2883 = vsel %vm762, %v2878, 0
        %2885 = vmatprep.subr.mxu0 0.0
        %2886 = vmatpush1.msra.mxu0 %v2880
        %2887 = vmatprep.subr.mxu0 0.0
        %2888 = vmatpush1.msra.mxu0 0.0
        %2889 = vmatprep.subr.mxu0 0.0
        %2890 = vmatpush1.msra.mxu0 0.0
        %2891 = vmatprep.subr.mxu0 0.0
        %2892 = vmatpush1.msra.mxu0 0.0
        %2893 = vmatprep.subr.mxu0 0.0
        %2894 = vmatpush1.msra.mxu0 0.0
        %2895 = vmatprep.subr.mxu0 0.0
        %2896 = vmatpush1.msra.mxu0 0.0
        %2897 = vmatprep.subr.mxu0 0.0
        %2898 = vmatpush1.msra.mxu0 0.0
        %2899 = vmatprep.subr.mxu0 0.0
        %2900 = vmatpush1.msra.mxu0 0.0
        %2901 = vmatprep.subr.mxu0 0.0
        %2902 = vmatpush1.msra.mxu0 0.0
        %2903 = vmatprep.subr.mxu0 0.0
        %2904 = vmatpush1.msra.mxu0 0.0
        %2905 = vmatprep.subr.mxu0 0.0
        %2906 = vmatpush1.msra.mxu0 0.0
        %2907 = vmatprep.subr.mxu0 0.0
        %2908 = vmatpush1.msra.mxu0 0.0
        %2909 = vmatprep.subr.mxu0 0.0
        %2910 = vmatpush1.msra.mxu0 0.0
        %2911 = vmatprep.subr.mxu0 0.0
        %2912 = vmatpush1.msra.mxu0 0.0
        %2913 = vmatprep.subr.mxu0 0.0
        %2914 = vmatpush1.msra.mxu0 0.0
        %2915 = vmatprep.subr.mxu0 0.0
        %2916 = vmatpush1.msra.mxu0 0.0
        %2917 = vmatprep.subr.mxu0 0.0
        %2918 = vmatpush1.msra.mxu0 0.0
        %2919 = vmatprep.subr.mxu0 0.0
        %2920 = vmatpush1.msra.mxu0 0.0
        %2921 = vmatprep.subr.mxu0 0.0
        %2922 = vmatpush1.msra.mxu0 0.0
        %2923 = vmatprep.subr.mxu0 0.0
        %2924 = vmatpush1.msra.mxu0 0.0
        %2925 = vmatprep.subr.mxu0 0.0
        %2926 = vmatpush1.msra.mxu0 0.0
        %2927 = vmatprep.subr.mxu0 0.0
        %2928 = vmatpush1.msra.mxu0 0.0
        %2929 = vmatprep.subr.mxu0 0.0
        %2930 = vmatpush1.msra.mxu0 0.0
        %2931 = vmatprep.subr.mxu0 0.0
        %2932 = vmatpush1.msra.mxu0 0.0
        %2933 = vmatprep.subr.mxu0 0.0
        %2934 = vmatpush1.msra.mxu0 0.0
        %2935 = vmatprep.subr.mxu0 0.0
        %2936 = vmatpush1.msra.mxu0 0.0
        %2937 = vmatprep.subr.mxu0 0.0
        %2938 = vmatpush1.msra.mxu0 0.0
        %2939 = vmatprep.subr.mxu0 0.0
        %2940 = vmatpush1.msra.mxu0 0.0
        %2941 = vmatprep.subr.mxu0 0.0
        %2942 = vmatpush1.msra.mxu0 0.0
        %2943 = vmatprep.subr.mxu0 0.0
        %2944 = vmatpush1.msra.mxu0 0.0
        %2945 = vmatprep.subr.mxu0 0.0
        %2946 = vmatpush1.msra.mxu0 0.0
        %2947 = vmatprep.subr.mxu0 0.0
        %2948 = vmatpush1.msra.mxu0 0.0
        %2949 = vmatprep.mubr.f32.mxu0 0.0
        %2950 = vmatmul.mubr.f32.gmra.mrb[0].mxu0 %v2883
        %v2951 = vpop.f32.mrb[0].mxu0
        %v2952 = vadd.f32 0.0, %v2951
        %v2953 = vpop.f32.mrb[0].mxu0
        %2954 = vdwg.mxu0
        %v2956 = vsel %vm762, %v2952, 0
        %2958 = vmatprep.subr.mxu0 0.0
        %2959 = vmatpush1.msra.mxu0 %v2067
        %2960 = vmatprep.subr.mxu0 0.0
        %2961 = vmatpush1.msra.mxu0 0.0
        %2962 = vmatprep.subr.mxu0 0.0
        %2963 = vmatpush1.msra.mxu0 0.0
        %2964 = vmatprep.subr.mxu0 0.0
        %2965 = vmatpush1.msra.mxu0 0.0
        %2966 = vmatprep.subr.mxu0 0.0
        %2967 = vmatpush1.msra.mxu0 0.0
        %2968 = vmatprep.subr.mxu0 0.0
        %2969 = vmatpush1.msra.mxu0 0.0
        %2970 = vmatprep.subr.mxu0 0.0
        %2971 = vmatpush1.msra.mxu0 0.0
        %2972 = vmatprep.subr.mxu0 0.0
        %2973 = vmatpush1.msra.mxu0 0.0
        %2974 = vmatprep.subr.mxu0 0.0
        %2975 = vmatpush1.msra.mxu0 0.0
        %2976 = vmatprep.subr.mxu0 0.0
        %2977 = vmatpush1.msra.mxu0 0.0
        %2978 = vmatprep.subr.mxu0 0.0
        %2979 = vmatpush1.msra.mxu0 0.0
        %2980 = vmatprep.subr.mxu0 0.0
        %2981 = vmatpush1.msra.mxu0 0.0
        %2982 = vmatprep.subr.mxu0 0.0
        %2983 = vmatpush1.msra.mxu0 0.0
        %2984 = vmatprep.subr.mxu0 0.0
        %2985 = vmatpush1.msra.mxu0 0.0
        %2986 = vmatprep.subr.mxu0 0.0
        %2987 = vmatpush1.msra.mxu0 0.0
        %2988 = vmatprep.subr.mxu0 0.0
        %2989 = vmatpush1.msra.mxu0 0.0
        %2990 = vmatprep.subr.mxu0 0.0
        %2991 = vmatpush1.msra.mxu0 0.0
        %2992 = vmatprep.subr.mxu0 0.0
        %2993 = vmatpush1.msra.mxu0 0.0
        %2994 = vmatprep.subr.mxu0 0.0
        %2995 = vmatpush1.msra.mxu0 0.0
        %2996 = vmatprep.subr.mxu0 0.0
        %2997 = vmatpush1.msra.mxu0 0.0
        %2998 = vmatprep.subr.mxu0 0.0
        %2999 = vmatpush1.msra.mxu0 0.0
        %3000 = vmatprep.subr.mxu0 0.0
        %3001 = vmatpush1.msra.mxu0 0.0
        %3002 = vmatprep.subr.mxu0 0.0
        %3003 = vmatpush1.msra.mxu0 0.0
        %3004 = vmatprep.subr.mxu0 0.0
        %3005 = vmatpush1.msra.mxu0 0.0
        %3006 = vmatprep.subr.mxu0 0.0
        %3007 = vmatpush1.msra.mxu0 0.0
        %3008 = vmatprep.subr.mxu0 0.0
        %3009 = vmatpush1.msra.mxu0 0.0
        %3010 = vmatprep.subr.mxu0 0.0
        %3011 = vmatpush1.msra.mxu0 0.0
        %3012 = vmatprep.subr.mxu0 0.0
        %3013 = vmatpush1.msra.mxu0 0.0
        %3014 = vmatprep.subr.mxu0 0.0
        %3015 = vmatpush1.msra.mxu0 0.0
        %3016 = vmatprep.subr.mxu0 0.0
        %3017 = vmatpush1.msra.mxu0 0.0
        %3018 = vmatprep.subr.mxu0 0.0
        %3019 = vmatpush1.msra.mxu0 0.0
        %3020 = vmatprep.subr.mxu0 0.0
        %3021 = vmatpush1.msra.mxu0 0.0
        %3022 = vmatprep.mubr.f32.mxu0 0.0
        %3023 = vmatmul.mubr.f32.gmra.mrb[0].mxu0 %v2956
        %v3024 = vpop.f32.mrb[0].mxu0
        %v3025 = vadd.f32 0.0, %v3024
        %v3026 = vpop.f32.mrb[0].mxu0
        %3027 = vdwg.mxu0
        %v3028 = vadd.f32 %v2787, %v3025
        %s3029 = scalar_lea.vmem %s7, 1
        %v3030 = vld [vmem:[%s3029] sm:$0x1]
        %v3032 = vlaneseq
        %v3033 = vshrl.u32 %v3032, 7
        %v3034 = vsub.s32 0, %v3033
        %v3035 = vrot.slane %v3030, %v3034
        %v3037 = vadd.f32 %v3028, %v3035
        %v3038 = vadd.f32 %v3037, %v1976
        %s3039 = scalar_lea.vmem %s8, 1
        %v3040 = vld [vmem:[%s3039] sm:$0x1]
        %s3041 = scalar_lea.vmem %s9, 1
        %v3042 = vld [vmem:[%s3041] sm:$0x1]
        %v3043 = vsel %vm641, %v3038, 0.0
        %3044 = vadd.xlane.f32.xlu0 %v3043
        %v3045 = vpop.xlane.xlu0 %3044
        %v3046 = vmul.f32 %v3045, %v645
        %v3047 = vsub.f32 %v3038, %v3046
        %v3048 = vmul.f32 %v3047, %v3047
        %v3049 = vsel %vm641, %v3048, 0.0
        %3050 = vadd.xlane.f32.xlu0 %v3049
        %v3051 = vpop.xlane.xlu0 %3050
        %v3052 = vmul.f32 %v3051, %v645
        %v3053 = vadd.f32 %v3052, 1e-12
        %v3054 = vrsqrt.pop %v3053
        %v3055 = vmul.f32 %v3047, %v3054
        %v3057 = vlaneseq
        %v3058 = vshrl.u32 %v3057, 7
        %v3059 = vsub.s32 0, %v3058
        %v3060 = vrot.slane %v3040, %v3059
        %v3062 = vmul.f32 %v3055, %v3060
        %v3064 = vlaneseq
        %v3065 = vshrl.u32 %v3064, 7
        %v3066 = vsub.s32 0, %v3065
        %v3067 = vrot.slane %v3042, %v3066
        %v3069 = vadd.f32 %v3062, %v3067
        %s3070 = scalar_lea.vmem %s10, 32
        %v3071 = vld [vmem:[%s3070] sm:$0xff]
        %v3072 = vld [vmem:[%s3070 + $0x8] sm:$0xff]
        %v3073 = vld [vmem:[%s3070 + $0x10] sm:$0xff]
        %v3074 = vld [vmem:[%s3070 + $0x18] sm:$0xff]
        %s3075 = scalar_lea.vmem %s11, 1
        %v3076 = vld [vmem:[%s3075] sm:$0x1]
        %v3078 = vlaneseq
        %v3079 = vshrl.u32 %v3078, 7
        %v3080 = vsub.s32 0, %v3079
        %v3081 = vrot.slane %v3076, %v3080
        %v3084 = vsel %vm641, %v3069, 0
        %3086 = vmatprep.subr.mxu0 0.0
        %3087 = vmatpush1.msra.mxu0 %v3071
        %3088 = vmatprep.subr.mxu0 0.0
        %3089 = vmatpush1.msra.mxu0 %v3072
        %3090 = vmatprep.subr.mxu0 0.0
        %3091 = vmatpush1.msra.mxu0 %v3073
        %3092 = vmatprep.subr.mxu0 0.0
        %3093 = vmatpush1.msra.mxu0 %v3074
        %3094 = vmatprep.subr.mxu0 0.0
        %3095 = vmatpush1.msra.mxu0 0.0
        %3096 = vmatprep.subr.mxu0 0.0
        %3097 = vmatpush1.msra.mxu0 0.0
        %3098 = vmatprep.subr.mxu0 0.0
        %3099 = vmatpush1.msra.mxu0 0.0
        %3100 = vmatprep.subr.mxu0 0.0
        %3101 = vmatpush1.msra.mxu0 0.0
        %3102 = vmatprep.subr.mxu0 0.0
        %3103 = vmatpush1.msra.mxu0 0.0
        %3104 = vmatprep.subr.mxu0 0.0
        %3105 = vmatpush1.msra.mxu0 0.0
        %3106 = vmatprep.subr.mxu0 0.0
        %3107 = vmatpush1.msra.mxu0 0.0
        %3108 = vmatprep.subr.mxu0 0.0
        %3109 = vmatpush1.msra.mxu0 0.0
        %3110 = vmatprep.subr.mxu0 0.0
        %3111 = vmatpush1.msra.mxu0 0.0
        %3112 = vmatprep.subr.mxu0 0.0
        %3113 = vmatpush1.msra.mxu0 0.0
        %3114 = vmatprep.subr.mxu0 0.0
        %3115 = vmatpush1.msra.mxu0 0.0
        %3116 = vmatprep.subr.mxu0 0.0
        %3117 = vmatpush1.msra.mxu0 0.0
        %3118 = vmatprep.subr.mxu0 0.0
        %3119 = vmatpush1.msra.mxu0 0.0
        %3120 = vmatprep.subr.mxu0 0.0
        %3121 = vmatpush1.msra.mxu0 0.0
        %3122 = vmatprep.subr.mxu0 0.0
        %3123 = vmatpush1.msra.mxu0 0.0
        %3124 = vmatprep.subr.mxu0 0.0
        %3125 = vmatpush1.msra.mxu0 0.0
        %3126 = vmatprep.subr.mxu0 0.0
        %3127 = vmatpush1.msra.mxu0 0.0
        %3128 = vmatprep.subr.mxu0 0.0
        %3129 = vmatpush1.msra.mxu0 0.0
        %3130 = vmatprep.subr.mxu0 0.0
        %3131 = vmatpush1.msra.mxu0 0.0
        %3132 = vmatprep.subr.mxu0 0.0
        %3133 = vmatpush1.msra.mxu0 0.0
        %3134 = vmatprep.subr.mxu0 0.0
        %3135 = vmatpush1.msra.mxu0 0.0
        %3136 = vmatprep.subr.mxu0 0.0
        %3137 = vmatpush1.msra.mxu0 0.0
        %3138 = vmatprep.subr.mxu0 0.0
        %3139 = vmatpush1.msra.mxu0 0.0
        %3140 = vmatprep.subr.mxu0 0.0
        %3141 = vmatpush1.msra.mxu0 0.0
        %3142 = vmatprep.subr.mxu0 0.0
        %3143 = vmatpush1.msra.mxu0 0.0
        %3144 = vmatprep.subr.mxu0 0.0
        %3145 = vmatpush1.msra.mxu0 0.0
        %3146 = vmatprep.subr.mxu0 0.0
        %3147 = vmatpush1.msra.mxu0 0.0
        %3148 = vmatprep.subr.mxu0 0.0
        %3149 = vmatpush1.msra.mxu0 0.0
        %3150 = vmatprep.mubr.f32.mxu0 0.0
        %3151 = vmatmul.mubr.f32.gmra.mrb[0].mxu0 %v3084
        %v3152 = vpop.f32.mrb[0].mxu0
        %v3153 = vadd.f32 %v3081, %v3152
        %v3154 = vpop.f32.mrb[0].mxu0
        %3155 = vdwg.mxu0
        %v3156 = vmul.f32 %v3153, %v3153
        %v3157 = vmul.f32 %v3153, %v3156
        %v3158 = vmul.f32 %v3157, 0.044715
        %v3159 = vadd.f32 %v3153, %v3158
        %v3160 = vmul.f32 %v3159, 0.7978846
        %v3161 = vtanh.pop %v3160
        %v3162 = vadd.f32 %v3161, 1.0
        %v3163 = vmul.f32 %v3162, 0.5
        %v3164 = vmul.f32 %v3153, %v3163
        %s3165 = scalar_lea.vmem %s12, 64
        %v3166 = vld [vmem:[%s3165] sm:$0xff]
        %v3167 = vld [vmem:[%s3165 + $0x8] sm:$0xff]
        %v3168 = vld [vmem:[%s3165 + $0x10] sm:$0xff]
        %v3169 = vld [vmem:[%s3165 + $0x18] sm:$0xff]
        %v3170 = vld [vmem:[%s3165 + $0x20] sm:$0xff]
        %v3171 = vld [vmem:[%s3165 + $0x28] sm:$0xff]
        %v3172 = vld [vmem:[%s3165 + $0x30] sm:$0xff]
        %v3173 = vld [vmem:[%s3165 + $0x38] sm:$0xff]
        %s3174 = scalar_lea.vmem %s13, 1
        %v3175 = vld [vmem:[%s3174] sm:$0x1]
        %v3177 = vlaneseq
        %v3178 = vshrl.u32 %v3177, 7
        %v3179 = vsub.s32 0, %v3178
        %v3180 = vrot.slane %v3175, %v3179
        %v3183 = vsel %vm1873, %v3164, 0
        %3185 = vmatprep.subr.mxu0 0.0
        %3186 = vmatpush1.msra.mxu0 %v3166
        %3187 = vmatprep.subr.mxu0 0.0
        %3188 = vmatpush1.msra.mxu0 %v3167
        %3189 = vmatprep.subr.mxu0 0.0
        %3190 = vmatpush1.msra.mxu0 %v3168
        %3191 = vmatprep.subr.mxu0 0.0
        %3192 = vmatpush1.msra.mxu0 %v3169
        %3193 = vmatprep.subr.mxu0 0.0
        %3194 = vmatpush1.msra.mxu0 %v3170
        %3195 = vmatprep.subr.mxu0 0.0
        %3196 = vmatpush1.msra.mxu0 %v3171
        %3197 = vmatprep.subr.mxu0 0.0
        %3198 = vmatpush1.msra.mxu0 %v3172
        %3199 = vmatprep.subr.mxu0 0.0
        %3200 = vmatpush1.msra.mxu0 %v3173
        %3201 = vmatprep.subr.mxu0 0.0
        %3202 = vmatpush1.msra.mxu0 0.0
        %3203 = vmatprep.subr.mxu0 0.0
        %3204 = vmatpush1.msra.mxu0 0.0
        %3205 = vmatprep.subr.mxu0 0.0
        %3206 = vmatpush1.msra.mxu0 0.0
        %3207 = vmatprep.subr.mxu0 0.0
        %3208 = vmatpush1.msra.mxu0 0.0
        %3209 = vmatprep.subr.mxu0 0.0
        %3210 = vmatpush1.msra.mxu0 0.0
        %3211 = vmatprep.subr.mxu0 0.0
        %3212 = vmatpush1.msra.mxu0 0.0
        %3213 = vmatprep.subr.mxu0 0.0
        %3214 = vmatpush1.msra.mxu0 0.0
        %3215 = vmatprep.subr.mxu0 0.0
        %3216 = vmatpush1.msra.mxu0 0.0
        %3217 = vmatprep.subr.mxu0 0.0
        %3218 = vmatpush1.msra.mxu0 0.0
        %3219 = vmatprep.subr.mxu0 0.0
        %3220 = vmatpush1.msra.mxu0 0.0
        %3221 = vmatprep.subr.mxu0 0.0
        %3222 = vmatpush1.msra.mxu0 0.0
        %3223 = vmatprep.subr.mxu0 0.0
        %3224 = vmatpush1.msra.mxu0 0.0
        %3225 = vmatprep.subr.mxu0 0.0
        %3226 = vmatpush1.msra.mxu0 0.0
        %3227 = vmatprep.subr.mxu0 0.0
        %3228 = vmatpush1.msra.mxu0 0.0
        %3229 = vmatprep.subr.mxu0 0.0
        %3230 = vmatpush1.msra.mxu0 0.0
        %3231 = vmatprep.subr.mxu0 0.0
        %3232 = vmatpush1.msra.mxu0 0.0
        %3233 = vmatprep.subr.mxu0 0.0
        %3234 = vmatpush1.msra.mxu0 0.0
        %3235 = vmatprep.subr.mxu0 0.0
        %3236 = vmatpush1.msra.mxu0 0.0
        %3237 = vmatprep.subr.mxu0 0.0
        %3238 = vmatpush1.msra.mxu0 0.0
        %3239 = vmatprep.subr.mxu0 0.0
        %3240 = vmatpush1.msra.mxu0 0.0
        %3241 = vmatprep.subr.mxu0 0.0
        %3242 = vmatpush1.msra.mxu0 0.0
        %3243 = vmatprep.subr.mxu0 0.0
        %3244 = vmatpush1.msra.mxu0 0.0
        %3245 = vmatprep.subr.mxu0 0.0
        %3246 = vmatpush1.msra.mxu0 0.0
        %3247 = vmatprep.subr.mxu0 0.0
        %3248 = vmatpush1.msra.mxu0 0.0
        %3249 = vmatprep.mubr.f32.mxu0 0.0
        %3250 = vmatmul.mubr.f32.gmra.mrb[0].mxu0 %v3183
        %v3251 = vpop.f32.mrb[0].mxu0
        %v3252 = vadd.f32 %v3180, %v3251
        %v3253 = vpop.f32.mrb[0].mxu0
        %3254 = vdwg.mxu0
        %v3255 = vadd.f32 %v3252, %v3069
        %s3256 = scalar_lea.vmem %s14, 1
        %v3257 = vld [vmem:[%s3256] sm:$0x1]
        %s3258 = scalar_lea.vmem %s15, 1
        %v3259 = vld [vmem:[%s3258] sm:$0x1]
        %v3260 = vsel %vm641, %v3255, 0.0
        %3261 = vadd.xlane.f32.xlu0 %v3260
        %v3262 = vpop.xlane.xlu0 %3261
        %v3263 = vmul.f32 %v3262, %v645
        %v3264 = vsub.f32 %v3255, %v3263
        %v3265 = vmul.f32 %v3264, %v3264
        %v3266 = vsel %vm641, %v3265, 0.0
        %3267 = vadd.xlane.f32.xlu0 %v3266
        %v3268 = vpop.xlane.xlu0 %3267
        %v3269 = vmul.f32 %v3268, %v645
        %v3270 = vadd.f32 %v3269, 1e-12
        %v3271 = vrsqrt.pop %v3270
        %v3272 = vmul.f32 %v3264, %v3271
        %v3274 = vlaneseq
        %v3275 = vshrl.u32 %v3274, 7
        %v3276 = vsub.s32 0, %v3275
        %v3277 = vrot.slane %v3257, %v3276
        %v3279 = vmul.f32 %v3272, %v3277
        %v3281 = vlaneseq
        %v3282 = vshrl.u32 %v3281, 7
        %v3283 = vsub.s32 0, %v3282
        %v3284 = vrot.slane %v3259, %v3283
        %v3286 = vadd.f32 %v3279, %v3284
        %v3287 = vld [vmem:[%s16] sm:$0xff]
        %v3288 = vld [vmem:[%s16 + $0x8] sm:$0xff]
        %v3289 = vld [vmem:[%s16 + $0x10] sm:$0xff]
        %v3290 = vld [vmem:[%s16 + $0x18] sm:$0xff]
        %v3291 = vld [vmem:[%s17] sm:$0x1]
        %v3293 = vsel %vm641, %v3286, 0
        %3295 = vmatprep.subr.mxu0 0.0
        %3296 = vmatpush1.msra.mxu0 %v3287
        %3297 = vmatprep.subr.mxu0 0.0
        %3298 = vmatpush1.msra.mxu0 %v3288
        %3299 = vmatprep.subr.mxu0 0.0
        %3300 = vmatpush1.msra.mxu0 %v3289
        %3301 = vmatprep.subr.mxu0 0.0
        %3302 = vmatpush1.msra.mxu0 %v3290
        %3303 = vmatprep.subr.mxu0 0.0
        %3304 = vmatpush1.msra.mxu0 0.0
        %3305 = vmatprep.subr.mxu0 0.0
        %3306 = vmatpush1.msra.mxu0 0.0
        %3307 = vmatprep.subr.mxu0 0.0
        %3308 = vmatpush1.msra.mxu0 0.0
        %3309 = vmatprep.subr.mxu0 0.0
        %3310 = vmatpush1.msra.mxu0 0.0
        %3311 = vmatprep.subr.mxu0 0.0
        %3312 = vmatpush1.msra.mxu0 0.0
        %3313 = vmatprep.subr.mxu0 0.0
        %3314 = vmatpush1.msra.mxu0 0.0
        %3315 = vmatprep.subr.mxu0 0.0
        %3316 = vmatpush1.msra.mxu0 0.0
        %3317 = vmatprep.subr.mxu0 0.0
        %3318 = vmatpush1.msra.mxu0 0.0
        %3319 = vmatprep.subr.mxu0 0.0
        %3320 = vmatpush1.msra.mxu0 0.0
        %3321 = vmatprep.subr.mxu0 0.0
        %3322 = vmatpush1.msra.mxu0 0.0
        %3323 = vmatprep.subr.mxu0 0.0
        %3324 = vmatpush1.msra.mxu0 0.0
        %3325 = vmatprep.subr.mxu0 0.0
        %3326 = vmatpush1.msra.mxu0 0.0
        %3327 = vmatprep.subr.mxu0 0.0
        %3328 = vmatpush1.msra.mxu0 0.0
        %3329 = vmatprep.subr.mxu0 0.0
        %3330 = vmatpush1.msra.mxu0 0.0
        %3331 = vmatprep.subr.mxu0 0.0
        %3332 = vmatpush1.msra.mxu0 0.0
        %3333 = vmatprep.subr.mxu0 0.0
        %3334 = vmatpush1.msra.mxu0 0.0
        %3335 = vmatprep.subr.mxu0 0.0
        %3336 = vmatpush1.msra.mxu0 0.0
        %3337 = vmatprep.subr.mxu0 0.0
        %3338 = vmatpush1.msra.mxu0 0.0
        %3339 = vmatprep.subr.mxu0 0.0
        %3340 = vmatpush1.msra.mxu0 0.0
        %3341 = vmatprep.subr.mxu0 0.0
        %3342 = vmatpush1.msra.mxu0 0.0
        %3343 = vmatprep.subr.mxu0 0.0
        %3344 = vmatpush1.msra.mxu0 0.0
        %3345 = vmatprep.subr.mxu0 0.0
        %3346 = vmatpush1.msra.mxu0 0.0
        %3347 = vmatprep.subr.mxu0 0.0
        %3348 = vmatpush1.msra.mxu0 0.0
        %3349 = vmatprep.subr.mxu0 0.0
        %3350 = vmatpush1.msra.mxu0 0.0
        %3351 = vmatprep.subr.mxu0 0.0
        %3352 = vmatpush1.msra.mxu0 0.0
        %3353 = vmatprep.subr.mxu0 0.0
        %3354 = vmatpush1.msra.mxu0 0.0
        %3355 = vmatprep.subr.mxu0 0.0
        %3356 = vmatpush1.msra.mxu0 0.0
        %3357 = vmatprep.subr.mxu0 0.0
        %3358 = vmatpush1.msra.mxu0 0.0
        %3359 = vmatprep.mubr.f32.mxu0 0.0
        %3360 = vmatmul.mubr.f32.gmra.mrb[0].mxu0 %v3293
        %v3361 = vpop.f32.mrb[0].mxu0
        %v3362 = vadd.f32 %v3291, %v3361
        %v3363 = vpop.f32.mrb[0].mxu0
        %3364 = vdwg.mxu0
        %v3365 = vtanh.pop %v3362
        %v3366 = vsel %vm641, %v3286, 0.0
        %v3367 = vrot.slane %v3366, 4
        %v3368 = vadd.f32 %v3366, %v3367
        %v3369 = vrot.slane %v3368, 2
        %v3370 = vadd.f32 %v3368, %v3369
        %v3371 = vrot.slane %v3370, 1
        %v3372 = vadd.f32 %v3370, %v3371
        %v3373 = vrcp.pop 8.0
        %v3374 = vmul.f32 %v3372, %v3373
        %v3375 = vld [vmem:[%s18] sm:$0xff]
        %v3376 = vld [vmem:[%s18 + $0x8] sm:$0xff]
        %v3377 = vld [vmem:[%s18 + $0x10] sm:$0xff]
        %v3378 = vld [vmem:[%s18 + $0x18] sm:$0xff]
        %v3379 = vld [vmem:[%s18 + $0x20] sm:$0xff]
        %v3380 = vld [vmem:[%s18 + $0x28] sm:$0xff]
        %v3381 = vld [vmem:[%s18 + $0x30] sm:$0xff]
        %v3382 = vld [vmem:[%s18 + $0x38] sm:$0xff]
        %v3384 = vsel %vm641, %v3365, 0
        %3386 = vmatprep.subr.mxu0 0.0
        %3387 = vmatpush1.msra.mxu0 %v3379
        %3388 = vmatprep.subr.mxu0 0.0
        %3389 = vmatpush1.msra.mxu0 %v3380
        %3390 = vmatprep.subr.mxu0 0.0
        %3391 = vmatpush1.msra.mxu0 %v3381
        %3392 = vmatprep.subr.mxu0 0.0
        %3393 = vmatpush1.msra.mxu0 %v3382
        %3394 = vmatprep.subr.mxu0 0.0
        %3395 = vmatpush1.msra.mxu0 0.0
        %3396 = vmatprep.subr.mxu0 0.0
        %3397 = vmatpush1.msra.mxu0 0.0
        %3398 = vmatprep.subr.mxu0 0.0
        %3399 = vmatpush1.msra.mxu0 0.0
        %3400 = vmatprep.subr.mxu0 0.0
        %3401 = vmatpush1.msra.mxu0 0.0
        %3402 = vmatprep.subr.mxu0 0.0
        %3403 = vmatpush1.msra.mxu0 0.0
        %3404 = vmatprep.subr.mxu0 0.0
        %3405 = vmatpush1.msra.mxu0 0.0
        %3406 = vmatprep.subr.mxu0 0.0
        %3407 = vmatpush1.msra.mxu0 0.0
        %3408 = vmatprep.subr.mxu0 0.0
        %3409 = vmatpush1.msra.mxu0 0.0
        %3410 = vmatprep.subr.mxu0 0.0
        %3411 = vmatpush1.msra.mxu0 0.0
        %3412 = vmatprep.subr.mxu0 0.0
        %3413 = vmatpush1.msra.mxu0 0.0
        %3414 = vmatprep.subr.mxu0 0.0
        %3415 = vmatpush1.msra.mxu0 0.0
        %3416 = vmatprep.subr.mxu0 0.0
        %3417 = vmatpush1.msra.mxu0 0.0
        %3418 = vmatprep.subr.mxu0 0.0
        %3419 = vmatpush1.msra.mxu0 0.0
        %3420 = vmatprep.subr.mxu0 0.0
        %3421 = vmatpush1.msra.mxu0 0.0
        %3422 = vmatprep.subr.mxu0 0.0
        %3423 = vmatpush1.msra.mxu0 0.0
        %3424 = vmatprep.subr.mxu0 0.0
        %3425 = vmatpush1.msra.mxu0 0.0
        %3426 = vmatprep.subr.mxu0 0.0
        %3427 = vmatpush1.msra.mxu0 0.0
        %3428 = vmatprep.subr.mxu0 0.0
        %3429 = vmatpush1.msra.mxu0 0.0
        %3430 = vmatprep.subr.mxu0 0.0
        %3431 = vmatpush1.msra.mxu0 0.0
        %3432 = vmatprep.subr.mxu0 0.0
        %3433 = vmatpush1.msra.mxu0 0.0
        %3434 = vmatprep.subr.mxu0 0.0
        %3435 = vmatpush1.msra.mxu0 0.0
        %3436 = vmatprep.subr.mxu0 0.0
        %3437 = vmatpush1.msra.mxu0 0.0
        %3438 = vmatprep.subr.mxu0 0.0
        %3439 = vmatpush1.msra.mxu0 0.0
        %3440 = vmatprep.subr.mxu0 0.0
        %3441 = vmatpush1.msra.mxu0 0.0
        %3442 = vmatprep.subr.mxu0 0.0
        %3443 = vmatpush1.msra.mxu0 0.0
        %3444 = vmatprep.subr.mxu0 0.0
        %3445 = vmatpush1.msra.mxu0 0.0
        %3446 = vmatprep.subr.mxu0 0.0
        %3447 = vmatpush1.msra.mxu0 0.0
        %3448 = vmatprep.subr.mxu0 0.0
        %3449 = vmatpush1.msra.mxu0 0.0
        %3450 = vmatprep.mubr.f32.mxu0 0.0
        %3451 = vmatmul.mubr.f32.gmra.mrb[0].mxu0 %v3384
        %v3452 = vpop.f32.mrb[0].mxu0
        %v3453 = vadd.f32 0.0, %v3452
        %v3454 = vpop.f32.mrb[0].mxu0
        %3455 = vdwg.mxu0
        %v3457 = vsel %vm641, %v3374, 0
        %3459 = vmatprep.subr.mxu0 0.0
        %3460 = vmatpush1.msra.mxu0 %v3375
        %3461 = vmatprep.subr.mxu0 0.0
        %3462 = vmatpush1.msra.mxu0 %v3376
        %3463 = vmatprep.subr.mxu0 0.0
        %3464 = vmatpush1.msra.mxu0 %v3377
        %3465 = vmatprep.subr.mxu0 0.0
        %3466 = vmatpush1.msra.mxu0 %v3378
        %3467 = vmatprep.subr.mxu0 0.0
        %3468 = vmatpush1.msra.mxu0 0.0
        %3469 = vmatprep.subr.mxu0 0.0
        %3470 = vmatpush1.msra.mxu0 0.0
        %3471 = vmatprep.subr.mxu0 0.0
        %3472 = vmatpush1.msra.mxu0 0.0
        %3473 = vmatprep.subr.mxu0 0.0
        %3474 = vmatpush1.msra.mxu0 0.0
        %3475 = vmatprep.subr.mxu0 0.0
        %3476 = vmatpush1.msra.mxu0 0.0
        %3477 = vmatprep.subr.mxu0 0.0
        %3478 = vmatpush1.msra.mxu0 0.0
        %3479 = vmatprep.subr.mxu0 0.0
        %3480 = vmatpush1.msra.mxu0 0.0
        %3481 = vmatprep.subr.mxu0 0.0
        %3482 = vmatpush1.msra.mxu0 0.0
        %3483 = vmatprep.subr.mxu0 0.0
        %3484 = vmatpush1.msra.mxu0 0.0
        %3485 = vmatprep.subr.mxu0 0.0
        %3486 = vmatpush1.msra.mxu0 0.0
        %3487 = vmatprep.subr.mxu0 0.0
        %3488 = vmatpush1.msra.mxu0 0.0
        %3489 = vmatprep.subr.mxu0 0.0
        %3490 = vmatpush1.msra.mxu0 0.0
        %3491 = vmatprep.subr.mxu0 0.0
        %3492 = vmatpush1.msra.mxu0 0.0
        %3493 = vmatprep.subr.mxu0 0.0
        %3494 = vmatpush1.msra.mxu0 0.0
        %3495 = vmatprep.subr.mxu0 0.0
        %3496 = vmatpush1.msra.mxu0 0.0
        %3497 = vmatprep.subr.mxu0 0.0
        %3498 = vmatpush1.msra.mxu0 0.0
        %3499 = vmatprep.subr.mxu0 0.0
        %3500 = vmatpush1.msra.mxu0 0.0
        %3501 = vmatprep.subr.mxu0 0.0
        %3502 = vmatpush1.msra.mxu0 0.0
        %3503 = vmatprep.subr.mxu0 0.0
        %3504 = vmatpush1.msra.mxu0 0.0
        %3505 = vmatprep.subr.mxu0 0.0
        %3506 = vmatpush1.msra.mxu0 0.0
        %3507 = vmatprep.subr.mxu0 0.0
        %3508 = vmatpush1.msra.mxu0 0.0
        %3509 = vmatprep.subr.mxu0 0.0
        %3510 = vmatpush1.msra.mxu0 0.0
        %3511 = vmatprep.subr.mxu0 0.0
        %3512 = vmatpush1.msra.mxu0 0.0
        %3513 = vmatprep.subr.mxu0 0.0
        %3514 = vmatpush1.msra.mxu0 0.0
        %3515 = vmatprep.subr.mxu0 0.0
        %3516 = vmatpush1.msra.mxu0 0.0
        %3517 = vmatprep.subr.mxu0 0.0
        %3518 = vmatpush1.msra.mxu0 0.0
        %3519 = vmatprep.subr.mxu0 0.0
        %3520 = vmatpush1.msra.mxu0 0.0
        %3521 = vmatprep.subr.mxu0 0.0
        %3522 = vmatpush1.msra.mxu0 0.0
        %3523 = vmatprep.mubr.f32.mxu0 0.0
        %3524 = vmatmul.mubr.f32.gmra.mrb[0].mxu0 %v3457
        %v3525 = vpop.f32.mrb[0].mxu0
        %v3526 = vadd.f32 %v3453, %v3525
        %v3527 = vpop.f32.mrb[0].mxu0
        %3528 = vdwg.mxu0
        %v3529 = vld [vmem:[%s19] sm:$0x1]
        %v3530 = vadd.f32 %v3526, %v3529
        %vm3531 = vcmask 8192
        %3532 = vst.msk [vmem:[%s630] sm:$0x1] %vm3531, %v3530
        %s3533 = sand.u32 %s472, 1
        %s3534 = scalar_lea.sflag [#allocation3], %s3533
        %s3535 = sand.u32 %s472, 1
        %s3536 = scalar_lea.vmem [#allocation2], %s3535
        // Predicated region
        $region101: #{bert_for_class_forward.1} parent=99 // pred_check
          %p3537 = pneg %p482
        $region102: #{bert_for_class_forward.1} parent=99 // pred_check_branch
          %3539 = sbr.rel (%p3537) target = $region104
        $region103: #{bert_for_class_forward.1} parent=99 // pred_region
          %s3541 = ssub.s32 16, 16
          %3542 = vsyncadd %s3534, %s3541
          %s3543 = smul.addr %s34, 16
          %s3544 = scalar_lea.hbm %s20, %s3543
          %s3546 = sshll.u32 %s3536, 4
          %s3547 = int_to_ptr.vmem [resolvable:$true] %s3546
          %3549 = dma.vmem_to_hbm [thread:$0]  %s3547, 16, %s3544, %s3534
        $region104: #{bert_for_class_forward.1} parent=99 // pred_fallthru
          _
      $region100: #{bert_for_class_forward.1} parent=5 // pred_fallthru
        _
      %p3550 = scmp.le.s32.totalorder 2, %s29
      // Predicated region
      $region105: #{bert_for_class_forward.1} parent=5 // pred_check
        %p3551 = pneg %p3550
      $region106: #{bert_for_class_forward.1} parent=5 // pred_check_branch
        %3553 = sbr.rel (%p3551) target = $region108
      $region107: #{bert_for_class_forward.1} parent=5 // pred_region
        %s3554 = ssub.s32 %s29, 2
        // Predicated region
        $region109: #{bert_for_class_forward.1} parent=107 // pred_check
          %p3555 = pneg %p488
        $region110: #{bert_for_class_forward.1} parent=107 // pred_check_branch
          %3557 = sbr.rel (%p3555) target = $region112
        $region111: #{bert_for_class_forward.1} parent=107 // pred_region
          %s3558 = sand.u32 %s473, 1
          %s3559 = scalar_lea.sflag [#allocation3], %s3558
          %s3560 = sand.u32 %s473, 1
          %s3561 = scalar_lea.vmem [#allocation2], %s3560
          %3562 = dma.done %s3559, 16
        $region112: #{bert_for_class_forward.1} parent=107 // pred_fallthru
          _
      $region108: #{bert_for_class_forward.1} parent=5 // pred_fallthru
        _
    $region6: #{bert_for_class_forward.1} parent=1 // loop_footer
      %s33 = sadd.s32 1, %s29
    $region7: #{bert_for_class_forward.1} parent=1 // loop_footer_branch
      %28 = sbr.rel target = $region3
    $region8: #{bert_for_class_forward.1} parent=1 // loop_exit
      _
    %3563 = vsyncpa [#allocation3], 1
    %s3564 = scalar_lea.sflag [#allocation3], 1
    %3565 = vsyncpa %s3564, 1

</llo_original>
